<compile_context>
chip_gen: v7x
topology: tpu7x:2x2x1
jax: 0.10.0
libtpu: 0.0.40
codegen_flags: <defaults>
</compile_context>

<pallas_src>
import functools

import jax
import jax.numpy as jnp
from jax.experimental import pallas as pl
from jax.experimental.pallas import tpu as pltpu

EPS = 1e-5   # torch.nn.LayerNorm default


def _vmem_capacity_bytes():
    try:
        return int(pltpu.get_tpu_info().vmem_capacity_bytes)
    except Exception:
        return 64 * 1024 * 1024     # conservative default: v7x per-TensorCore VMEM


# ----------------------------------------------------------------------------
# Stage 1: LayerNorm + fused projections/gates + channel-major left/right emit
# ----------------------------------------------------------------------------
def _stage1_kernel(act_ref, mask_ref, ng_ref, nb_ref, wcat_ref, bcat_ref,
                   a_ref, b_ref, fg_ref, *, orientation):
    d0, d1, C = act_ref.shape          # per_row: (TR, L, C); per_column: (L, TR, C)
    CI = a_ref.shape[0]
    N = d0 * d1

    x = act_ref[...].astype(jnp.float32).reshape(N, C)
    m = mask_ref[...].astype(jnp.float32).reshape(N, 1)

    # ---- input LayerNorm over the channel dim (f32 on the VPU) ----
    mu = jnp.mean(x, axis=-1, keepdims=True)
    var = jnp.mean((x - mu) ** 2, axis=-1, keepdims=True)
    xn = (x - mu) * jax.lax.rsqrt(var + EPS)
    xn = xn * ng_ref[...] + nb_ref[...]

    # ---- one wide fused MXU matmul for all five xn-sharing projections
    #      (bf16 operands, f32 accumulation) ----
    proj = jnp.dot(xn.astype(jnp.bfloat16), wcat_ref[...],
                   preferred_element_type=jnp.float32) + bcat_ref[...]
    left = proj[:, 0 * CI:1 * CI]
    right = proj[:, 1 * CI:2 * CI]
    lgate = jax.nn.sigmoid(proj[:, 2 * CI:3 * CI])
    rgate = jax.nn.sigmoid(proj[:, 3 * CI:4 * CI])
    fgate = jax.nn.sigmoid(proj[:, 4 * CI:])

    # fuse mask and gate into a single elementwise pass per side
    left = left * (m * lgate)
    right = right * (m * rgate)

    # final-gate sigmoid, channels-last bf16, consumed by the stage-2 epilogue
    fg_ref[...] = fgate.astype(jnp.bfloat16).reshape(d0, d1, C)

    left3 = left.reshape(d0, d1, CI)
    right3 = right.reshape(d0, d1, CI)

    # ---- emit channel-major operands A[c, i, k] / B[c, j, k].
    # per_row:    i/j run over this block's d0 rows,    k over the d1 axis.
    # per_column: i/j run over this block's d1 columns, k over the d0 axis.
    # Rows are cast to bf16 BEFORE the transposes (halves XLU + relayout traffic).
    nrows = d0 if orientation == 'per_row' else d1
    a_rows, b_rows = [], []
    for rr in range(nrows):
        if orientation == 'per_row':
            lrow, rrow = left3[rr], right3[rr]                 # (L, CI)
        else:
            lrow, rrow = left3[:, rr, :], right3[:, rr, :]     # (L, CI)
        a_rows.append(lrow.astype(jnp.bfloat16).T)             # (CI, L)
        b_rows.append(rrow.astype(jnp.bfloat16).T)
    a_ref[...] = jnp.stack(a_rows, axis=1)                     # (CI, TR, L), tile-aligned store
    b_ref[...] = jnp.stack(b_rows, axis=1)


# ----------------------------------------------------------------------------
# Stage 2: MXU batched triangle contraction + final LN + proj_out + final gate
# ----------------------------------------------------------------------------
def _stage2_kernel(a_ref, b_ref, fg_ref, fng_ref, fnb_ref, wo_ref, bo_ref,
                   out_ref, acc_ref):
    k = pl.program_id(3)

    @pl.when(k == 0)
    def _():
        acc_ref[...] = jnp.zeros_like(acc_ref)

    # triangle contraction on the MXU: per-channel (TI,TK) @ (TJ,TK)^T, batched over CI,
    # bf16 operands with f32 accumulation in VMEM scratch.
    acc_ref[...] += jnp.einsum('cik,cjk->cij', a_ref[...], b_ref[...],
                               preferred_element_type=jnp.float32)

    @pl.when(k == pl.num_programs(3) - 1)
    def _():
        CI, TI, TJ = acc_ref.shape

        # final LayerNorm over channels = reduction over axis 0 (the non-tiled major dim),
        # hoisted out of the per-row loop: one block-wide VPU reduce + affine.
        x = acc_ref[...]                                       # (CI, TI, TJ) f32
        mu = jnp.mean(x, axis=0, keepdims=True)
        var = jnp.mean((x - mu) ** 2, axis=0, keepdims=True)
        acc_ref[...] = (x - mu) * jax.lax.rsqrt(var + EPS) * fng_ref[...] + fnb_ref[...]

        wo = wo_ref[...]      # (CI, C) bf16, loop-invariant (stays latched across rows)
        bo = bo_ref[...]      # (1, C)  f32

        def project_row(ti):
            trin = acc_ref[:, ti, :].astype(jnp.bfloat16)      # (CI, TJ), channel-major
            # output projection: contract the channel dim in place -> channels-last (TJ, C)
            y = jax.lax.dot_general(
                trin, wo, dimension_numbers=(((0,), (0,)), ((), ())),
                preferred_element_type=jnp.float32)
            y = (y + bo) * fg_ref[ti].astype(jnp.float32)      # final gate (bf16 -> f32)
            out_ref[ti] = y.astype(out_ref.dtype)

        if TI <= 16:
            for ti in range(TI):          # static unroll at small tile sizes (test path)
                project_row(ti)
        else:
            def body(ti, carry):
                project_row(ti)
                return carry
            jax.lax.fori_loop(0, TI, body, 0, unroll=8)


# ----------------------------------------------------------------------------
# Wrapper
# ----------------------------------------------------------------------------
def triangle_multiplication(act, pair_mask, params, orientation='per_row'):
    assert orientation in ('per_row', 'per_column')
    B, L, L2, C = act.shape
    assert L == L2
    CI = params['wl'].shape[1]

    vmem_cap = _vmem_capacity_bytes()
    big_vmem = vmem_cap >= 96 * 1024 * 1024
    # leave headroom below physical VMEM (critical on v7x's 64 MiB), cap at ~112 MiB
    vmem_limit = max(min(vmem_cap - 8 * 1024 * 1024, 112 * 1024 * 1024),
                     32 * 1024 * 1024)

    # ---- fold the five xn-sharing projections into one wide (C, 4*CI + C) bf16 matmul ----
    w_cat = jnp.concatenate([params['wl'], params['wr'], params['wlg'],
                             params['wrg'], params['wfg']], axis=1).astype(jnp.bfloat16)
    b_cat = jnp.concatenate([params['bl'], params['br'], params['blg'],
                             params['brg'], params['bfg']], axis=1).astype(jnp.float32)
    ng = params['ng'].astype(jnp.float32)
    nb = params['nb'].astype(jnp.float32)
    wo = params['wo'].astype(jnp.bfloat16)
    bo = params['bo'].astype(jnp.float32)
    fng = params['fng'].reshape(CI, 1, 1).astype(jnp.float32)
    fnb = params['fnb'].reshape(CI, 1, 1).astype(jnp.float32)

    # --------------------------- stage 1 ---------------------------
    TR = 16 if L % 16 == 0 else (8 if L % 8 == 0 else L)
    if orientation == 'per_row':
        act_spec = pl.BlockSpec((None, TR, L, C), lambda b, r: (b, r, 0, 0))
        mask_spec = pl.BlockSpec((None, TR, L, 1), lambda b, r: (b, r, 0, 0))
        fg_spec = pl.BlockSpec((None, TR, L, C), lambda b, r: (b, r, 0, 0))
    else:
        act_spec = pl.BlockSpec((None, L, TR, C), lambda b, r: (b, 0, r, 0))
        mask_spec = pl.BlockSpec((None, L, TR, 1), lambda b, r: (b, 0, r, 0))
        fg_spec = pl.BlockSpec((None, L, TR, C), lambda b, r: (b, 0, r, 0))
    ab_spec = pl.BlockSpec((None, CI, TR, L), lambda b, r: (b, 0, r, 0))

    a_cm, b_cm, fg = pl.pallas_call(
        functools.partial(_stage1_kernel, orientation=orientation),
        grid=(B, L // TR),
        out_shape=(
            jax.ShapeDtypeStruct((B, CI, L, L), jnp.bfloat16),   # A[c, i, k]
            jax.ShapeDtypeStruct((B, CI, L, L), jnp.bfloat16),   # B[c, j, k]
            jax.ShapeDtypeStruct((B, L, L, C), jnp.bfloat16),    # final-gate sigmoid (bf16)
        ),
        in_specs=[
            act_spec,
            mask_spec,
            pl.BlockSpec((1, C), lambda b, r: (0, 0)),
            pl.BlockSpec((1, C), lambda b, r: (0, 0)),
            pl.BlockSpec((C, 4 * CI + C), lambda b, r: (0, 0)),
            pl.BlockSpec((1, 4 * CI + C), lambda b, r: (0, 0)),
        ],
        out_specs=(ab_spec, ab_spec, fg_spec),
        compiler_params=pltpu.CompilerParams(
            dimension_semantics=("parallel", "parallel"),
            vmem_limit_bytes=vmem_limit),
    )(act, pair_mask, ng, nb, w_cat, b_cat)

    # --------------------------- stage 2 ---------------------------
    if L % 128 == 0:
        TI = TJ = 128
        # deeper K tile (matches 256-deep MXU, halves accumulator RMW) when VMEM allows
        TK = 256 if (L % 256 == 0 and big_vmem) else 128
    else:
        TI = TJ = TK = L

    out = pl.pallas_call(
        _stage2_kernel,
        grid=(B, L // TI, L // TJ, L // TK),
        out_shape=jax.ShapeDtypeStruct((B, L, L, C), jnp.float32),
        in_specs=[
            pl.BlockSpec((None, CI, TI, TK), lambda b, i, j, k: (b, 0, i, k)),
            pl.BlockSpec((None, CI, TJ, TK), lambda b, i, j, k: (b, 0, j, k)),
            pl.BlockSpec((None, TI, TJ, C), lambda b, i, j, k: (b, i, j, 0)),
            pl.BlockSpec((CI, 1, 1), lambda b, i, j, k: (0, 0, 0)),
            pl.BlockSpec((CI, 1, 1), lambda b, i, j, k: (0, 0, 0)),
            pl.BlockSpec((CI, C), lambda b, i, j, k: (0, 0)),
            pl.BlockSpec((1, C), lambda b, i, j, k: (0, 0)),
        ],
        out_specs=pl.BlockSpec((None, TI, TJ, C), lambda b, i, j, k: (b, i, j, 0)),
        scratch_shapes=[pltpu.VMEM((CI, TI, TJ), jnp.float32)],
        compiler_params=pltpu.CompilerParams(
            dimension_semantics=("parallel", "parallel", "parallel", "arbitrary"),
            vmem_limit_bytes=vmem_limit),
    )(a_cm, b_cm, fg, fng, fnb, wo, bo)
    return out


# ----------------------------------------------------------------------------
# Pure-JAX reference (mirrors the PyTorch forward)
# ----------------------------------------------------------------------------
def triangle_multiplication_ref(act, pair_mask, params, orientation='per_row'):
    def ln(x, g, b):
        mu = jnp.mean(x, -1, keepdims=True)
        var = jnp.mean((x - mu) ** 2, -1, keepdims=True)
        return (x - mu) * jax.lax.rsqrt(var + EPS) * g + b

    x = ln(act, params['ng'][0], params['nb'][0])
    input_act = x
    left = x @ params['wl'] + params['bl'][0]
    right = x @ params['wr'] + params['br'][0]
    left = pair_mask * left
    right = pair_mask * right
    left = left * jax.nn.sigmoid(x @ params['wlg'] + params['blg'][0])
    right = right * jax.nn.sigmoid(x @ params['wrg'] + params['brg'][0])
    if orientation == 'per_row':
        act = jnp.einsum('bikc,bjkc->bijc', left, right)
    else:
        act = jnp.einsum('bkic,bkjc->bijc', left, right)
    act = ln(act, params['fng'][0], params['fnb'][0])
    act = act @ params['wo'] + params['bo'][0]
    act = act * jax.nn.sigmoid(input_act @ params['wfg'] + params['bfg'][0])
    return act


# ----------------------------------------------------------------------------
# Main
# ----------------------------------------------------------------------------
if __name__ == "__main__":
    B, L, C, CI = 2, 8, 16, 32   # batch, seq, num_in_channel, num_intermediate_channel

    key = jax.random.PRNGKey(0)
    keys = jax.random.split(key, 20)

    def w(k, shape, fan_in):
        return jax.random.normal(k, shape, jnp.float32) / jnp.sqrt(float(fan_in))

    params = {
        'ng': 1.0 + 0.1 * jax.random.normal(keys[0], (1, C), jnp.float32),
        'nb': 0.1 * jax.random.normal(keys[1], (1, C), jnp.float32),
        'wl': w(keys[2], (C, CI), C),  'bl': 0.1 * jax.random.normal(keys[3], (1, CI), jnp.float32),
        'wr': w(keys[4], (C, CI), C),  'br': 0.1 * jax.random.normal(keys[5], (1, CI), jnp.float32),
        'wlg': w(keys[6], (C, CI), C), 'blg': jnp.ones((1, CI), jnp.float32),
        'wrg': w(keys[7], (C, CI), C), 'brg': jnp.ones((1, CI), jnp.float32),
        'fng': 1.0 + 0.1 * jax.random.normal(keys[8], (1, CI), jnp.float32),
        'fnb': 0.1 * jax.random.normal(keys[9], (1, CI), jnp.float32),
        'wo': w(keys[10], (CI, C), CI), 'bo': 0.1 * jax.random.normal(keys[11], (1, C), jnp.float32),
        'wfg': w(keys[12], (C, C), C),  'bfg': jnp.ones((1, C), jnp.float32),
    }

    act = jax.random.normal(keys[13], (B, L, L, C), jnp.float32)
    res_mask = (jnp.arange(L) < 6).astype(jnp.float32)                     # (L,) per-residue mask
    res_mask = jnp.broadcast_to(res_mask, (B, L))                          # (B, L)
    pair_mask = (res_mask[:, :, None] * res_mask[:, None, :])[..., None]   # (B, L, L, 1)

    for orientation in ('per_row', 'per_column'):
        out = triangle_multiplication(act, pair_mask, params, orientation=orientation)
        out = jax.block_until_ready(out)
        ref = triangle_multiplication_ref(act, pair_mask, params, orientation=orientation)
        assert out.shape == (B, L, L, C)
        # MXU operands / fg are bf16 (f32 accumulation) -> bf16-appropriate tolerance
        assert jnp.allclose(out, ref, atol=5e-2, rtol=5e-2), f"mismatch vs reference ({orientation})"

    print("KERNEL_OK")
</pallas_src>

<mosaic_0001>
module attributes {stable_mosaic.version = 11 : i64} {
  func.func @_stage1_kernel(%arg0: i32, %arg1: i32, %arg2: memref<1x8x8x16xf32, #tpu.memory_space<vmem>>, %arg3: memref<1x8x8x1xf32, #tpu.memory_space<vmem>>, %arg4: memref<1x16xf32, #tpu.memory_space<vmem>>, %arg5: memref<1x16xf32, #tpu.memory_space<vmem>>, %arg6: memref<16x144xbf16, #tpu.memory_space<vmem>>, %arg7: memref<1x144xf32, #tpu.memory_space<vmem>>, %arg8: memref<1x32x8x8xbf16, #tpu.memory_space<vmem>>, %arg9: memref<1x32x8x8xbf16, #tpu.memory_space<vmem>>, %arg10: memref<1x8x8x16xbf16, #tpu.memory_space<vmem>>) attributes {dimension_semantics = [#tpu.dimension_semantics<parallel>, #tpu.dimension_semantics<parallel>], iteration_bounds = array<i64: 2, 1>, scalar_prefetch = 0 : i64, scratch_operands = 0 : i64, tpu.core_type = #tpu.core_type<tc>, window_params = [{transform_indices = @transform_0, window_bounds = array<i64: 1, 8, 8, 16>}, {transform_indices = @transform_1, window_bounds = array<i64: 1, 8, 8, 1>}, {pipeline_mode = #tpu.pipeline_mode<synchronous>, transform_indices = @transform_2, window_bounds = array<i64: 1, 16>}, {pipeline_mode = #tpu.pipeline_mode<synchronous>, transform_indices = @transform_3, window_bounds = array<i64: 1, 16>}, {pipeline_mode = #tpu.pipeline_mode<synchronous>, transform_indices = @transform_4, window_bounds = array<i64: 16, 144>}, {pipeline_mode = #tpu.pipeline_mode<synchronous>, transform_indices = @transform_5, window_bounds = array<i64: 1, 144>}, {transform_indices = @transform_6, window_bounds = array<i64: 1, 32, 8, 8>}, {transform_indices = @transform_7, window_bounds = array<i64: 1, 32, 8, 8>}, {transform_indices = @transform_8, window_bounds = array<i64: 1, 8, 8, 16>}]} {
    %c0 = arith.constant 0 : index
    %c0_0 = arith.constant 0 : index
    %c0_1 = arith.constant 0 : index
    %c0_2 = arith.constant 0 : index
    %0 = vector.load %arg2[%c0, %c0_0, %c0_1, %c0_2] : memref<1x8x8x16xf32, #tpu.memory_space<vmem>>, vector<1x8x8x16xf32>
    %1 = vector.shape_cast %0 : vector<1x8x8x16xf32> to vector<8x8x16xf32>
    %2 = vector.shape_cast %1 : vector<8x8x16xf32> to vector<64x16xf32>
    %c0_3 = arith.constant 0 : index
    %c0_4 = arith.constant 0 : index
    %c0_5 = arith.constant 0 : index
    %c0_6 = arith.constant 0 : index
    %3 = vector.load %arg3[%c0_3, %c0_4, %c0_5, %c0_6] : memref<1x8x8x1xf32, #tpu.memory_space<vmem>>, vector<1x8x8x1xf32>
    %4 = vector.shape_cast %3 : vector<1x8x8x1xf32> to vector<8x8x1xf32>
    %5 = vector.shape_cast %4 : vector<8x8x1xf32> to vector<64x1xf32>
    %cst = arith.constant dense<0.000000e+00> : vector<64xf32>
    %6 = vector.multi_reduction <add>, %2, %cst [1] : vector<64x16xf32> to vector<64xf32>
    %7 = vector.shape_cast %6 : vector<64xf32> to vector<64x1xf32>
    %cst_7 = arith.constant 1.600000e+01 : f32
    %8 = vector.broadcast %cst_7 : f32 to vector<64x1xf32>
    %9 = arith.divf %7, %8 : vector<64x1xf32>
    %10 = vector.broadcast %9 : vector<64x1xf32> to vector<64x16xf32>
    %11 = arith.subf %2, %10 : vector<64x16xf32>
    %12 = arith.mulf %11, %11 : vector<64x16xf32>
    %cst_8 = arith.constant dense<0.000000e+00> : vector<64xf32>
    %13 = vector.multi_reduction <add>, %12, %cst_8 [1] : vector<64x16xf32> to vector<64xf32>
    %14 = vector.shape_cast %13 : vector<64xf32> to vector<64x1xf32>
    %cst_9 = arith.constant 1.600000e+01 : f32
    %15 = vector.broadcast %cst_9 : f32 to vector<64x1xf32>
    %16 = arith.divf %14, %15 : vector<64x1xf32>
    %17 = vector.broadcast %9 : vector<64x1xf32> to vector<64x16xf32>
    %18 = arith.subf %2, %17 : vector<64x16xf32>
    %cst_10 = arith.constant 9.99999974E-6 : f32
    %19 = vector.broadcast %cst_10 : f32 to vector<64x1xf32>
    %20 = arith.addf %16, %19 : vector<64x1xf32>
    %21 = math.rsqrt %20 : vector<64x1xf32>
    %22 = vector.broadcast %21 : vector<64x1xf32> to vector<64x16xf32>
    %23 = arith.mulf %18, %22 : vector<64x16xf32>
    %c0_11 = arith.constant 0 : index
    %c0_12 = arith.constant 0 : index
    %24 = vector.load %arg4[%c0_11, %c0_12] : memref<1x16xf32, #tpu.memory_space<vmem>>, vector<1x16xf32>
    %25 = vector.broadcast %24 : vector<1x16xf32> to vector<64x16xf32>
    %26 = arith.mulf %23, %25 : vector<64x16xf32>
    %c0_13 = arith.constant 0 : index
    %c0_14 = arith.constant 0 : index
    %27 = vector.load %arg5[%c0_13, %c0_14] : memref<1x16xf32, #tpu.memory_space<vmem>>, vector<1x16xf32>
    %28 = vector.broadcast %27 : vector<1x16xf32> to vector<64x16xf32>
    %29 = arith.addf %26, %28 : vector<64x16xf32>
    %30 = arith.truncf %29 : vector<64x16xf32> to vector<64x16xbf16>
    %c0_15 = arith.constant 0 : index
    %c0_16 = arith.constant 0 : index
    %31 = vector.load %arg6[%c0_15, %c0_16] : memref<16x144xbf16, #tpu.memory_space<vmem>>, vector<16x144xbf16>
    %cst_17 = arith.constant dense<0.000000e+00> : vector<64x144xf32>
    %32 = tpu.matmul %30, %31, %cst_17 {dimension_numbers = #tpu.dot_dimension_numbers<[1], [0], [0], [1], [0, 0, 1, 1], [], []>} : vector<64x16xbf16>, vector<16x144xbf16>, vector<64x144xf32> -> vector<64x144xf32>
    %c0_18 = arith.constant 0 : index
    %c0_19 = arith.constant 0 : index
    %33 = vector.load %arg7[%c0_18, %c0_19] : memref<1x144xf32, #tpu.memory_space<vmem>>, vector<1x144xf32>
    %34 = vector.broadcast %33 : vector<1x144xf32> to vector<64x144xf32>
    %35 = arith.addf %32, %34 : vector<64x144xf32>
    %36 = vector.extract_strided_slice %35 {offsets = [0, 0], sizes = [64, 32], strides = [1, 1]} : vector<64x144xf32> to vector<64x32xf32>
    %37 = vector.extract_strided_slice %35 {offsets = [0, 32], sizes = [64, 32], strides = [1, 1]} : vector<64x144xf32> to vector<64x32xf32>
    %38 = vector.extract_strided_slice %35 {offsets = [0, 64], sizes = [64, 32], strides = [1, 1]} : vector<64x144xf32> to vector<64x32xf32>
    %39 = arith.negf %38 : vector<64x32xf32>
    %40 = math.exp %39 : vector<64x32xf32>
    %cst_20 = arith.constant 1.000000e+00 : f32
    %41 = vector.broadcast %cst_20 : f32 to vector<64x32xf32>
    %42 = arith.addf %41, %40 : vector<64x32xf32>
    %43 = arith.divf %41, %42 : vector<64x32xf32>
    %44 = vector.extract_strided_slice %35 {offsets = [0, 96], sizes = [64, 32], strides = [1, 1]} : vector<64x144xf32> to vector<64x32xf32>
    %45 = arith.negf %44 : vector<64x32xf32>
    %46 = math.exp %45 : vector<64x32xf32>
    %cst_21 = arith.constant 1.000000e+00 : f32
    %47 = vector.broadcast %cst_21 : f32 to vector<64x32xf32>
    %48 = arith.addf %47, %46 : vector<64x32xf32>
    %49 = arith.divf %47, %48 : vector<64x32xf32>
    %50 = vector.extract_strided_slice %35 {offsets = [0, 128], sizes = [64, 16], strides = [1, 1]} : vector<64x144xf32> to vector<64x16xf32>
    %51 = arith.negf %50 : vector<64x16xf32>
    %52 = math.exp %51 : vector<64x16xf32>
    %cst_22 = arith.constant 1.000000e+00 : f32
    %53 = vector.broadcast %cst_22 : f32 to vector<64x16xf32>
    %54 = arith.addf %53, %52 : vector<64x16xf32>
    %55 = arith.divf %53, %54 : vector<64x16xf32>
    %56 = vector.broadcast %5 : vector<64x1xf32> to vector<64x32xf32>
    %57 = arith.mulf %56, %43 : vector<64x32xf32>
    %58 = arith.mulf %36, %57 : vector<64x32xf32>
    %59 = vector.broadcast %5 : vector<64x1xf32> to vector<64x32xf32>
    %60 = arith.mulf %59, %49 : vector<64x32xf32>
    %61 = arith.mulf %37, %60 : vector<64x32xf32>
    %62 = arith.truncf %55 : vector<64x16xf32> to vector<64x16xbf16>
    %63 = vector.shape_cast %62 : vector<64x16xbf16> to vector<8x8x16xbf16>
    %c0_23 = arith.constant 0 : index
    %c0_24 = arith.constant 0 : index
    %c0_25 = arith.constant 0 : index
    %c0_26 = arith.constant 0 : index
    %64 = vector.load %arg10[%c0_23, %c0_24, %c0_25, %c0_26] : memref<1x8x8x16xbf16, #tpu.memory_space<vmem>>, vector<1x8x8x16xbf16>
    %65 = vector.shape_cast %64 : vector<1x8x8x16xbf16> to vector<8x8x16xbf16>
    %66 = vector.shape_cast %63 : vector<8x8x16xbf16> to vector<1x8x8x16xbf16>
    tpu.vector_store %arg10[%c0_23, %c0_24, %c0_25, %c0_26], %66 {strides = array<i32>} : memref<1x8x8x16xbf16, #tpu.memory_space<vmem>>, vector<1x8x8x16xbf16>,
    %67 = vector.shape_cast %58 : vector<64x32xf32> to vector<8x8x32xf32>
    %68 = vector.shape_cast %61 : vector<64x32xf32> to vector<8x8x32xf32>
    %69 = vector.extract_strided_slice %67 {offsets = [0, 0, 0], sizes = [1, 8, 32], strides = [1, 1, 1]} : vector<8x8x32xf32> to vector<1x8x32xf32>
    %70 = vector.shape_cast %69 : vector<1x8x32xf32> to vector<8x32xf32>
    %71 = vector.extract_strided_slice %68 {offsets = [0, 0, 0], sizes = [1, 8, 32], strides = [1, 1, 1]} : vector<8x8x32xf32> to vector<1x8x32xf32>
    %72 = vector.shape_cast %71 : vector<1x8x32xf32> to vector<8x32xf32>
    %73 = arith.truncf %70 : vector<8x32xf32> to vector<8x32xbf16>
    %74 = tpu.transpose %73, [1, 0] : vector<8x32xbf16> -> vector<32x8xbf16>
    %75 = arith.truncf %72 : vector<8x32xf32> to vector<8x32xbf16>
    %76 = tpu.transpose %75, [1, 0] : vector<8x32xbf16> -> vector<32x8xbf16>
    %77 = vector.extract_strided_slice %67 {offsets = [1, 0, 0], sizes = [1, 8, 32], strides = [1, 1, 1]} : vector<8x8x32xf32> to vector<1x8x32xf32>
    %78 = vector.shape_cast %77 : vector<1x8x32xf32> to vector<8x32xf32>
    %79 = vector.extract_strided_slice %68 {offsets = [1, 0, 0], sizes = [1, 8, 32], strides = [1, 1, 1]} : vector<8x8x32xf32> to vector<1x8x32xf32>
    %80 = vector.shape_cast %79 : vector<1x8x32xf32> to vector<8x32xf32>
    %81 = arith.truncf %78 : vector<8x32xf32> to vector<8x32xbf16>
    %82 = tpu.transpose %81, [1, 0] : vector<8x32xbf16> -> vector<32x8xbf16>
    %83 = arith.truncf %80 : vector<8x32xf32> to vector<8x32xbf16>
    %84 = tpu.transpose %83, [1, 0] : vector<8x32xbf16> -> vector<32x8xbf16>
    %85 = vector.extract_strided_slice %67 {offsets = [2, 0, 0], sizes = [1, 8, 32], strides = [1, 1, 1]} : vector<8x8x32xf32> to vector<1x8x32xf32>
    %86 = vector.shape_cast %85 : vector<1x8x32xf32> to vector<8x32xf32>
    %87 = vector.extract_strided_slice %68 {offsets = [2, 0, 0], sizes = [1, 8, 32], strides = [1, 1, 1]} : vector<8x8x32xf32> to vector<1x8x32xf32>
    %88 = vector.shape_cast %87 : vector<1x8x32xf32> to vector<8x32xf32>
    %89 = arith.truncf %86 : vector<8x32xf32> to vector<8x32xbf16>
    %90 = tpu.transpose %89, [1, 0] : vector<8x32xbf16> -> vector<32x8xbf16>
    %91 = arith.truncf %88 : vector<8x32xf32> to vector<8x32xbf16>
    %92 = tpu.transpose %91, [1, 0] : vector<8x32xbf16> -> vector<32x8xbf16>
    %93 = vector.extract_strided_slice %67 {offsets = [3, 0, 0], sizes = [1, 8, 32], strides = [1, 1, 1]} : vector<8x8x32xf32> to vector<1x8x32xf32>
    %94 = vector.shape_cast %93 : vector<1x8x32xf32> to vector<8x32xf32>
    %95 = vector.extract_strided_slice %68 {offsets = [3, 0, 0], sizes = [1, 8, 32], strides = [1, 1, 1]} : vector<8x8x32xf32> to vector<1x8x32xf32>
    %96 = vector.shape_cast %95 : vector<1x8x32xf32> to vector<8x32xf32>
    %97 = arith.truncf %94 : vector<8x32xf32> to vector<8x32xbf16>
    %98 = tpu.transpose %97, [1, 0] : vector<8x32xbf16> -> vector<32x8xbf16>
    %99 = arith.truncf %96 : vector<8x32xf32> to vector<8x32xbf16>
    %100 = tpu.transpose %99, [1, 0] : vector<8x32xbf16> -> vector<32x8xbf16>
    %101 = vector.extract_strided_slice %67 {offsets = [4, 0, 0], sizes = [1, 8, 32], strides = [1, 1, 1]} : vector<8x8x32xf32> to vector<1x8x32xf32>
    %102 = vector.shape_cast %101 : vector<1x8x32xf32> to vector<8x32xf32>
    %103 = vector.extract_strided_slice %68 {offsets = [4, 0, 0], sizes = [1, 8, 32], strides = [1, 1, 1]} : vector<8x8x32xf32> to vector<1x8x32xf32>
    %104 = vector.shape_cast %103 : vector<1x8x32xf32> to vector<8x32xf32>
    %105 = arith.truncf %102 : vector<8x32xf32> to vector<8x32xbf16>
    %106 = tpu.transpose %105, [1, 0] : vector<8x32xbf16> -> vector<32x8xbf16>
    %107 = arith.truncf %104 : vector<8x32xf32> to vector<8x32xbf16>
    %108 = tpu.transpose %107, [1, 0] : vector<8x32xbf16> -> vector<32x8xbf16>
    %109 = vector.extract_strided_slice %67 {offsets = [5, 0, 0], sizes = [1, 8, 32], strides = [1, 1, 1]} : vector<8x8x32xf32> to vector<1x8x32xf32>
    %110 = vector.shape_cast %109 : vector<1x8x32xf32> to vector<8x32xf32>
    %111 = vector.extract_strided_slice %68 {offsets = [5, 0, 0], sizes = [1, 8, 32], strides = [1, 1, 1]} : vector<8x8x32xf32> to vector<1x8x32xf32>
    %112 = vector.shape_cast %111 : vector<1x8x32xf32> to vector<8x32xf32>
    %113 = arith.truncf %110 : vector<8x32xf32> to vector<8x32xbf16>
    %114 = tpu.transpose %113, [1, 0] : vector<8x32xbf16> -> vector<32x8xbf16>
    %115 = arith.truncf %112 : vector<8x32xf32> to vector<8x32xbf16>
    %116 = tpu.transpose %115, [1, 0] : vector<8x32xbf16> -> vector<32x8xbf16>
    %117 = vector.extract_strided_slice %67 {offsets = [6, 0, 0], sizes = [1, 8, 32], strides = [1, 1, 1]} : vector<8x8x32xf32> to vector<1x8x32xf32>
    %118 = vector.shape_cast %117 : vector<1x8x32xf32> to vector<8x32xf32>
    %119 = vector.extract_strided_slice %68 {offsets = [6, 0, 0], sizes = [1, 8, 32], strides = [1, 1, 1]} : vector<8x8x32xf32> to vector<1x8x32xf32>
    %120 = vector.shape_cast %119 : vector<1x8x32xf32> to vector<8x32xf32>
    %121 = arith.truncf %118 : vector<8x32xf32> to vector<8x32xbf16>
    %122 = tpu.transpose %121, [1, 0] : vector<8x32xbf16> -> vector<32x8xbf16>
    %123 = arith.truncf %120 : vector<8x32xf32> to vector<8x32xbf16>
    %124 = tpu.transpose %123, [1, 0] : vector<8x32xbf16> -> vector<32x8xbf16>
    %125 = vector.extract_strided_slice %67 {offsets = [7, 0, 0], sizes = [1, 8, 32], strides = [1, 1, 1]} : vector<8x8x32xf32> to vector<1x8x32xf32>
    %126 = vector.shape_cast %125 : vector<1x8x32xf32> to vector<8x32xf32>
    %127 = vector.extract_strided_slice %68 {offsets = [7, 0, 0], sizes = [1, 8, 32], strides = [1, 1, 1]} : vector<8x8x32xf32> to vector<1x8x32xf32>
    %128 = vector.shape_cast %127 : vector<1x8x32xf32> to vector<8x32xf32>
    %129 = arith.truncf %126 : vector<8x32xf32> to vector<8x32xbf16>
    %130 = tpu.transpose %129, [1, 0] : vector<8x32xbf16> -> vector<32x8xbf16>
    %131 = arith.truncf %128 : vector<8x32xf32> to vector<8x32xbf16>
    %132 = tpu.transpose %131, [1, 0] : vector<8x32xbf16> -> vector<32x8xbf16>
    %133 = vector.shape_cast %74 : vector<32x8xbf16> to vector<32x1x8xbf16>
    %134 = vector.shape_cast %82 : vector<32x8xbf16> to vector<32x1x8xbf16>
    %135 = vector.shape_cast %90 : vector<32x8xbf16> to vector<32x1x8xbf16>
    %136 = vector.shape_cast %98 : vector<32x8xbf16> to vector<32x1x8xbf16>
    %137 = vector.shape_cast %106 : vector<32x8xbf16> to vector<32x1x8xbf16>
    %138 = vector.shape_cast %114 : vector<32x8xbf16> to vector<32x1x8xbf16>
    %139 = vector.shape_cast %122 : vector<32x8xbf16> to vector<32x1x8xbf16>
    %140 = vector.shape_cast %130 : vector<32x8xbf16> to vector<32x1x8xbf16>
    %141 = tpu.concatenate %133, %134, %135, %136, %137, %138, %139, %140 in 1 : vector<32x1x8xbf16>, vector<32x1x8xbf16>, vector<32x1x8xbf16>, vector<32x1x8xbf16>, vector<32x1x8xbf16>, vector<32x1x8xbf16>, vector<32x1x8xbf16>, vector<32x1x8xbf16> -> vector<32x8x8xbf16>
    %c0_27 = arith.constant 0 : index
    %c0_28 = arith.constant 0 : index
    %c0_29 = arith.constant 0 : index
    %c0_30 = arith.constant 0 : index
    %142 = vector.load %arg8[%c0_27, %c0_28, %c0_29, %c0_30] : memref<1x32x8x8xbf16, #tpu.memory_space<vmem>>, vector<1x32x8x8xbf16>
    %143 = vector.shape_cast %142 : vector<1x32x8x8xbf16> to vector<32x8x8xbf16>
    %144 = vector.shape_cast %141 : vector<32x8x8xbf16> to vector<1x32x8x8xbf16>
    tpu.vector_store %arg8[%c0_27, %c0_28, %c0_29, %c0_30], %144 {strides = array<i32>} : memref<1x32x8x8xbf16, #tpu.memory_space<vmem>>, vector<1x32x8x8xbf16>,
    %145 = vector.shape_cast %76 : vector<32x8xbf16> to vector<32x1x8xbf16>
    %146 = vector.shape_cast %84 : vector<32x8xbf16> to vector<32x1x8xbf16>
    %147 = vector.shape_cast %92 : vector<32x8xbf16> to vector<32x1x8xbf16>
    %148 = vector.shape_cast %100 : vector<32x8xbf16> to vector<32x1x8xbf16>
    %149 = vector.shape_cast %108 : vector<32x8xbf16> to vector<32x1x8xbf16>
    %150 = vector.shape_cast %116 : vector<32x8xbf16> to vector<32x1x8xbf16>
    %151 = vector.shape_cast %124 : vector<32x8xbf16> to vector<32x1x8xbf16>
    %152 = vector.shape_cast %132 : vector<32x8xbf16> to vector<32x1x8xbf16>
    %153 = tpu.concatenate %145, %146, %147, %148, %149, %150, %151, %152 in 1 : vector<32x1x8xbf16>, vector<32x1x8xbf16>, vector<32x1x8xbf16>, vector<32x1x8xbf16>, vector<32x1x8xbf16>, vector<32x1x8xbf16>, vector<32x1x8xbf16>, vector<32x1x8xbf16> -> vector<32x8x8xbf16>
    %c0_31 = arith.constant 0 : index
    %c0_32 = arith.constant 0 : index
    %c0_33 = arith.constant 0 : index
    %c0_34 = arith.constant 0 : index
    %154 = vector.load %arg9[%c0_31, %c0_32, %c0_33, %c0_34] : memref<1x32x8x8xbf16, #tpu.memory_space<vmem>>, vector<1x32x8x8xbf16>
    %155 = vector.shape_cast %154 : vector<1x32x8x8xbf16> to vector<32x8x8xbf16>
    %156 = vector.shape_cast %153 : vector<32x8x8xbf16> to vector<1x32x8x8xbf16>
    tpu.vector_store %arg9[%c0_31, %c0_32, %c0_33, %c0_34], %156 {strides = array<i32>} : memref<1x32x8x8xbf16, #tpu.memory_space<vmem>>, vector<1x32x8x8xbf16>,
    return
  }
  func.func @transform_0(%arg0: i32, %arg1: i32) -> (i32, i32, i32, i32) {
    %c0_i32 = arith.constant 0 : i32
    %c0_i32_0 = arith.constant 0 : i32
    %c0_i32_1 = arith.constant 0 : i32
    return %arg0, %arg1, %c0_i32, %c0_i32_0 : i32, i32, i32, i32
  }
  func.func @transform_1(%arg0: i32, %arg1: i32) -> (i32, i32, i32, i32) {
    %c0_i32 = arith.constant 0 : i32
    %c0_i32_0 = arith.constant 0 : i32
    %c0_i32_1 = arith.constant 0 : i32
    return %arg0, %arg1, %c0_i32, %c0_i32_0 : i32, i32, i32, i32
  }
  func.func @transform_2(%arg0: i32, %arg1: i32) -> (i32, i32) {
    %c0_i32 = arith.constant 0 : i32
    %c0_i32_0 = arith.constant 0 : i32
    %c0_i32_1 = arith.constant 0 : i32
    return %c0_i32, %c0_i32_0 : i32, i32
  }
  func.func @transform_3(%arg0: i32, %arg1: i32) -> (i32, i32) {
    %c0_i32 = arith.constant 0 : i32
    %c0_i32_0 = arith.constant 0 : i32
    %c0_i32_1 = arith.constant 0 : i32
    return %c0_i32, %c0_i32_0 : i32, i32
  }
  func.func @transform_4(%arg0: i32, %arg1: i32) -> (i32, i32) {
    %c0_i32 = arith.constant 0 : i32
    %c0_i32_0 = arith.constant 0 : i32
    %c0_i32_1 = arith.constant 0 : i32
    return %c0_i32, %c0_i32_0 : i32, i32
  }
  func.func @transform_5(%arg0: i32, %arg1: i32) -> (i32, i32) {
    %c0_i32 = arith.constant 0 : i32
    %c0_i32_0 = arith.constant 0 : i32
    %c0_i32_1 = arith.constant 0 : i32
    return %c0_i32, %c0_i32_0 : i32, i32
  }
  func.func @transform_6(%arg0: i32, %arg1: i32) -> (i32, i32, i32, i32) {
    %c0_i32 = arith.constant 0 : i32
    %c0_i32_0 = arith.constant 0 : i32
    %c0_i32_1 = arith.constant 0 : i32
    return %arg0, %c0_i32, %arg1, %c0_i32_0 : i32, i32, i32, i32
  }
  func.func @transform_7(%arg0: i32, %arg1: i32) -> (i32, i32, i32, i32) {
    %c0_i32 = arith.constant 0 : i32
    %c0_i32_0 = arith.constant 0 : i32
    %c0_i32_1 = arith.constant 0 : i32
    return %arg0, %c0_i32, %arg1, %c0_i32_0 : i32, i32, i32, i32
  }
  func.func @transform_8(%arg0: i32, %arg1: i32) -> (i32, i32, i32, i32) {
    %c0_i32 = arith.constant 0 : i32
    %c0_i32_0 = arith.constant 0 : i32
    %c0_i32_1 = arith.constant 0 : i32
    return %arg0, %arg1, %c0_i32, %c0_i32_0 : i32, i32, i32, i32
  }
}

</mosaic_0001>

<llo_original>
// kernel: tpu_custom_call.1
$region0: #{tpu_custom_call.1}
  #allocation0 [shape = 'u32[]', space=smem, size = 0x4, offset = 0x4, fixed_abs, tag = 'smem constant byte address 0x4 - core index']
  #allocation1 [shape = 'u32[144,128]{1,0:T(1,128)}', space=vmem, size = 0x12000, scoped, tag = 'internal scratch']
  %s0 = inlined_call_operand.vmem [shape: f32[2,8,8,16], index: 0, kind: input, shape index: {}]
  %s1 = inlined_call_operand.vmem [shape: f32[2,8,8,1], index: 1, kind: input, shape index: {}]
  %s2 = inlined_call_operand.vmem [shape: f32[1,16], index: 2, kind: input, shape index: {}]
  %s3 = inlined_call_operand.vmem [shape: f32[1,16], index: 3, kind: input, shape index: {}]
  %s4 = inlined_call_operand.vmem [shape: bf16[16,144], index: 4, kind: input, shape index: {}]
  %s5 = inlined_call_operand.vmem [shape: f32[1,144], index: 5, kind: input, shape index: {}]
  %s6 = inlined_call_operand.vmem [shape: bf16[2,32,8,8], index: 6, kind: output, shape index: {0}]
  %s7 = inlined_call_operand.vmem [shape: bf16[2,32,8,8], index: 7, kind: output, shape index: {1}]
  %s8 = inlined_call_operand.hbm [shape: bf16[2,8,8,16], index: 8, kind: output, shape index: {2}]
  %9 = xla_tuple %s6, %s7, %s8
  %s10 = sld [smem:[#allocation0]]
  $region73: #{tpu_custom_call.1} parent=0
    _
  %s12 = ssub.s32 1, %s10
  %s13 = scalar_select 0, %s12, %s10
  $region1: #{tpu_custom_call.1} parent=0
    #allocation2 [shape = 'u8[32768]{0}', space=vmem, size = 0x8000, scoped, tag = 'output window, operand 2']
    #allocation3 [shape = 's32[2]{0}', space=sflag, size = 0x8, scoped, tag = 'scoped memory for tpu_custom_call.1']
    %14 = vsyncpa [#allocation3], 0
    %s15 = scalar_lea.sflag [#allocation3], 1
    %16 = vsyncpa %s15, 0
    loop: start=0, step=1, limit=4
    $region2: #{tpu_custom_call.1} parent=1 // loop_pre_header
      _
    $region3: #{tpu_custom_call.1} parent=1 // loop_header
      %s18 = sphi 0, %s22
      %p19 = scmp.ge.s32.totalorder %s18, 4
      %s25 = sphi 0, %s37
      %s26 = sphi 0, %s33
      %s27 = sphi 0, %s25
      %s28 = sphi 0, %s26
      %s29 = sphi 0, %s27
      %s30 = sphi 0, %s28
      %s42 = sphi 0, %s44
      %s45 = sphi 0, %s42
      %s46 = sphi 0, %s45
      %s62 = sphi 0, %s46
      %s70 = sphi 0, %s72
      %s73 = sphi 0, %s70
      %s74 = sphi 0, %s73
      %s90 = sphi 0, %s74
      %s94 = sphi 0, %s94
      %s96 = sphi 0, %s94
      %s97 = sphi 0, %s96
      %s111 = sphi 0, %s97
      %s115 = sphi 0, %s115
      %s117 = sphi 0, %s115
      %s118 = sphi 0, %s117
      %s132 = sphi 0, %s118
      %s136 = sphi 0, %s136
      %s138 = sphi 0, %s136
      %s139 = sphi 0, %s138
      %s153 = sphi 0, %s139
      %s157 = sphi 0, %s157
      %s159 = sphi 0, %s157
      %s160 = sphi 0, %s159
      %s174 = sphi 0, %s160
      %s182 = sphi 0, %s184
      %s185 = sphi 0, %s182
      %s186 = sphi 0, %s185
      %s202 = sphi 0, %s186
      %s210 = sphi 0, %s212
      %s213 = sphi 0, %s210
      %s214 = sphi 0, %s213
      %s230 = sphi 0, %s214
      %s238 = sphi 0, %s240
      %s241 = sphi 0, %s238
      %s242 = sphi 0, %s241
      %s258 = sphi 0, %s242
    $region4: #{tpu_custom_call.1} parent=1 // loop_header_branch
      %21 = sbr.rel (%p19) target = $region8
    $region5: #{tpu_custom_call.1} parent=1 // loop_body
      %s23 = ssub.s32 %s18, 1
      %s24 = ssub.s32 %s18, 2
      %s31 = sadd.s32 1, %s26
      %p32 = scmp.ge.s32.totalorder %s31, 1
      %s33 = scalar_select %p32, 0, %s31
      %s34 = sadd.s32 1, %s25
      %s35 = scalar_select %p32, %s34, %s25
      %p36 = scmp.ge.s32.totalorder %s35, 2
      %s37 = scalar_select %p36, 0, %s35
      %s38 = ssub.s32 %s25, %s37
      %s39 = ssub.s32 %s26, %s33
      %s40 = sor.u32 %s38, %s39
      %p41 = scmp.eq.s32.totalorder %s40, 0
      %s43 = sadd.s32 %s42, 1
      %s44 = scalar_select %p41, %s42, %s43
      %p47 = pneg %p41
      %p48 = scmp.eq.s32.totalorder %s18, 1
      %p49 = por %p47, %p48
      %p50 = scmp.ne.s32.totalorder %s42, %s45
      %p51 = scmp.eq.s32.totalorder %s18, 0
      %p52 = por %p50, %p51
      %p53 = scmp.ne.s32.totalorder %s42, %s45
      %p54 = scmp.eq.s32.totalorder %s23, 1
      %p55 = por %p53, %p54
      %p56 = scmp.ne.s32.totalorder %s45, %s46
      %p57 = scmp.eq.s32.totalorder %s23, 0
      %p58 = por %p56, %p57
      %p59 = scmp.ne.s32.totalorder %s45, %s46
      %p60 = scmp.eq.s32.totalorder %s24, 1
      %p61 = por %p59, %p60
      %p63 = scmp.ne.s32.totalorder %s46, %s62
      %p64 = scmp.eq.s32.totalorder %s24, 0
      %p65 = por %p63, %p64
      %s66 = ssub.s32 %s25, %s37
      %s67 = ssub.s32 %s26, %s33
      %s68 = sor.u32 %s66, %s67
      %p69 = scmp.eq.s32.totalorder %s68, 0
      %s71 = sadd.s32 %s70, 1
      %s72 = scalar_select %p69, %s70, %s71
      %p75 = pneg %p69
      %p76 = scmp.eq.s32.totalorder %s18, 1
      %p77 = por %p75, %p76
      %p78 = scmp.ne.s32.totalorder %s70, %s73
      %p79 = scmp.eq.s32.totalorder %s18, 0
      %p80 = por %p78, %p79
      %p81 = scmp.ne.s32.totalorder %s70, %s73
      %p82 = scmp.eq.s32.totalorder %s23, 1
      %p83 = por %p81, %p82
      %p84 = scmp.ne.s32.totalorder %s73, %s74
      %p85 = scmp.eq.s32.totalorder %s23, 0
      %p86 = por %p84, %p85
      %p87 = scmp.ne.s32.totalorder %s73, %s74
      %p88 = scmp.eq.s32.totalorder %s24, 1
      %p89 = por %p87, %p88
      %p91 = scmp.ne.s32.totalorder %s74, %s90
      %p92 = scmp.eq.s32.totalorder %s24, 0
      %p93 = por %p91, %p92
      %s95 = sadd.s32 %s94, 1
      %p98 = scmp.eq.s32.totalorder %s18, 1
      %p99 = scmp.ne.s32.totalorder %s94, %s96
      %p100 = scmp.eq.s32.totalorder %s18, 0
      %p101 = por %p99, %p100
      %p102 = scmp.ne.s32.totalorder %s94, %s96
      %p103 = scmp.eq.s32.totalorder %s23, 1
      %p104 = por %p102, %p103
      %p105 = scmp.ne.s32.totalorder %s96, %s97
      %p106 = scmp.eq.s32.totalorder %s23, 0
      %p107 = por %p105, %p106
      %p108 = scmp.ne.s32.totalorder %s96, %s97
      %p109 = scmp.eq.s32.totalorder %s24, 1
      %p110 = por %p108, %p109
      %p112 = scmp.ne.s32.totalorder %s97, %s111
      %p113 = scmp.eq.s32.totalorder %s24, 0
      %p114 = por %p112, %p113
      %s116 = sadd.s32 %s115, 1
      %p119 = scmp.eq.s32.totalorder %s18, 1
      %p120 = scmp.ne.s32.totalorder %s115, %s117
      %p121 = scmp.eq.s32.totalorder %s18, 0
      %p122 = por %p120, %p121
      %p123 = scmp.ne.s32.totalorder %s115, %s117
      %p124 = scmp.eq.s32.totalorder %s23, 1
      %p125 = por %p123, %p124
      %p126 = scmp.ne.s32.totalorder %s117, %s118
      %p127 = scmp.eq.s32.totalorder %s23, 0
      %p128 = por %p126, %p127
      %p129 = scmp.ne.s32.totalorder %s117, %s118
      %p130 = scmp.eq.s32.totalorder %s24, 1
      %p131 = por %p129, %p130
      %p133 = scmp.ne.s32.totalorder %s118, %s132
      %p134 = scmp.eq.s32.totalorder %s24, 0
      %p135 = por %p133, %p134
      %s137 = sadd.s32 %s136, 1
      %p140 = scmp.eq.s32.totalorder %s18, 1
      %p141 = scmp.ne.s32.totalorder %s136, %s138
      %p142 = scmp.eq.s32.totalorder %s18, 0
      %p143 = por %p141, %p142
      %p144 = scmp.ne.s32.totalorder %s136, %s138
      %p145 = scmp.eq.s32.totalorder %s23, 1
      %p146 = por %p144, %p145
      %p147 = scmp.ne.s32.totalorder %s138, %s139
      %p148 = scmp.eq.s32.totalorder %s23, 0
      %p149 = por %p147, %p148
      %p150 = scmp.ne.s32.totalorder %s138, %s139
      %p151 = scmp.eq.s32.totalorder %s24, 1
      %p152 = por %p150, %p151
      %p154 = scmp.ne.s32.totalorder %s139, %s153
      %p155 = scmp.eq.s32.totalorder %s24, 0
      %p156 = por %p154, %p155
      %s158 = sadd.s32 %s157, 1
      %p161 = scmp.eq.s32.totalorder %s18, 1
      %p162 = scmp.ne.s32.totalorder %s157, %s159
      %p163 = scmp.eq.s32.totalorder %s18, 0
      %p164 = por %p162, %p163
      %p165 = scmp.ne.s32.totalorder %s157, %s159
      %p166 = scmp.eq.s32.totalorder %s23, 1
      %p167 = por %p165, %p166
      %p168 = scmp.ne.s32.totalorder %s159, %s160
      %p169 = scmp.eq.s32.totalorder %s23, 0
      %p170 = por %p168, %p169
      %p171 = scmp.ne.s32.totalorder %s159, %s160
      %p172 = scmp.eq.s32.totalorder %s24, 1
      %p173 = por %p171, %p172
      %p175 = scmp.ne.s32.totalorder %s160, %s174
      %p176 = scmp.eq.s32.totalorder %s24, 0
      %p177 = por %p175, %p176
      %s178 = ssub.s32 %s25, %s37
      %s179 = ssub.s32 %s26, %s33
      %s180 = sor.u32 %s178, %s179
      %p181 = scmp.eq.s32.totalorder %s180, 0
      %s183 = sadd.s32 %s182, 1
      %s184 = scalar_select %p181, %s182, %s183
      %p187 = pneg %p181
      %p188 = scmp.eq.s32.totalorder %s18, 1
      %p189 = por %p187, %p188
      %p190 = scmp.ne.s32.totalorder %s182, %s185
      %p191 = scmp.eq.s32.totalorder %s18, 0
      %p192 = por %p190, %p191
      %p193 = scmp.ne.s32.totalorder %s182, %s185
      %p194 = scmp.eq.s32.totalorder %s23, 1
      %p195 = por %p193, %p194
      %p196 = scmp.ne.s32.totalorder %s185, %s186
      %p197 = scmp.eq.s32.totalorder %s23, 0
      %p198 = por %p196, %p197
      %p199 = scmp.ne.s32.totalorder %s185, %s186
      %p200 = scmp.eq.s32.totalorder %s24, 1
      %p201 = por %p199, %p200
      %p203 = scmp.ne.s32.totalorder %s186, %s202
      %p204 = scmp.eq.s32.totalorder %s24, 0
      %p205 = por %p203, %p204
      %s206 = ssub.s32 %s25, %s37
      %s207 = ssub.s32 %s26, %s33
      %s208 = sor.u32 %s206, %s207
      %p209 = scmp.eq.s32.totalorder %s208, 0
      %s211 = sadd.s32 %s210, 1
      %s212 = scalar_select %p209, %s210, %s211
      %p215 = pneg %p209
      %p216 = scmp.eq.s32.totalorder %s18, 1
      %p217 = por %p215, %p216
      %p218 = scmp.ne.s32.totalorder %s210, %s213
      %p219 = scmp.eq.s32.totalorder %s18, 0
      %p220 = por %p218, %p219
      %p221 = scmp.ne.s32.totalorder %s210, %s213
      %p222 = scmp.eq.s32.totalorder %s23, 1
      %p223 = por %p221, %p222
      %p224 = scmp.ne.s32.totalorder %s213, %s214
      %p225 = scmp.eq.s32.totalorder %s23, 0
      %p226 = por %p224, %p225
      %p227 = scmp.ne.s32.totalorder %s213, %s214
      %p228 = scmp.eq.s32.totalorder %s24, 1
      %p229 = por %p227, %p228
      %p231 = scmp.ne.s32.totalorder %s214, %s230
      %p232 = scmp.eq.s32.totalorder %s24, 0
      %p233 = por %p231, %p232
      %s234 = ssub.s32 %s25, %s37
      %s235 = ssub.s32 %s26, %s33
      %s236 = sor.u32 %s234, %s235
      %p237 = scmp.eq.s32.totalorder %s236, 0
      %s239 = sadd.s32 %s238, 1
      %s240 = scalar_select %p237, %s238, %s239
      %p243 = pneg %p237
      %p244 = scmp.eq.s32.totalorder %s18, 1
      %p245 = por %p243, %p244
      %p246 = scmp.ne.s32.totalorder %s238, %s241
      %p247 = scmp.eq.s32.totalorder %s18, 0
      %p248 = por %p246, %p247
      %p249 = scmp.ne.s32.totalorder %s238, %s241
      %p250 = scmp.eq.s32.totalorder %s23, 1
      %p251 = por %p249, %p250
      %p252 = scmp.ne.s32.totalorder %s241, %s242
      %p253 = scmp.eq.s32.totalorder %s23, 0
      %p254 = por %p252, %p253
      %p255 = scmp.ne.s32.totalorder %s241, %s242
      %p256 = scmp.eq.s32.totalorder %s24, 1
      %p257 = por %p255, %p256
      %p259 = scmp.ne.s32.totalorder %s242, %s258
      %p260 = scmp.eq.s32.totalorder %s24, 0
      %p261 = por %p259, %p260
      %p262 = scmp.le.s32.totalorder 1, %s18
      %p263 = scmp.lt.s32.totalorder %s18, 3
      %p264 = pnand %p262, %p263
      %p265 = pneg %p264
      // Predicated region
      $region9: #{tpu_custom_call.1} parent=5 // pred_check
        _
      $region10: #{tpu_custom_call.1} parent=5 // pred_check_branch
        %267 = sbr.rel (%p264) target = $region12
      $region11: #{tpu_custom_call.1} parent=5 // pred_region
        %s268 = ssub.s32 %s18, 1
        // Predicated region
        $region13: #{tpu_custom_call.1} parent=11 // pred_check
          %p269 = pneg %p107
        $region14: #{tpu_custom_call.1} parent=11 // pred_check_branch
          %271 = sbr.rel (%p269) target = $region16
        $region15: #{tpu_custom_call.1} parent=11 // pred_region
          _
        $region16: #{tpu_custom_call.1} parent=11 // pred_fallthru
          _
        // Predicated region
        $region17: #{tpu_custom_call.1} parent=11 // pred_check
          %p272 = pneg %p128
        $region18: #{tpu_custom_call.1} parent=11 // pred_check_branch
          %274 = sbr.rel (%p272) target = $region20
        $region19: #{tpu_custom_call.1} parent=11 // pred_region
          _
        $region20: #{tpu_custom_call.1} parent=11 // pred_fallthru
          _
        // Predicated region
        $region21: #{tpu_custom_call.1} parent=11 // pred_check
          %p275 = pneg %p149
        $region22: #{tpu_custom_call.1} parent=11 // pred_check_branch
          %277 = sbr.rel (%p275) target = $region24
        $region23: #{tpu_custom_call.1} parent=11 // pred_region
          _
        $region24: #{tpu_custom_call.1} parent=11 // pred_fallthru
          _
        // Predicated region
        $region25: #{tpu_custom_call.1} parent=11 // pred_check
          %p278 = pneg %p170
        $region26: #{tpu_custom_call.1} parent=11 // pred_check_branch
          %280 = sbr.rel (%p278) target = $region28
        $region27: #{tpu_custom_call.1} parent=11 // pred_region
          _
        $region28: #{tpu_custom_call.1} parent=11 // pred_fallthru
          _
      $region12: #{tpu_custom_call.1} parent=5 // pred_fallthru
        _
      %p281 = scmp.lt.s32.totalorder %s18, 2
      // Predicated region
      $region29: #{tpu_custom_call.1} parent=5 // pred_check
        %p282 = pneg %p281
      $region30: #{tpu_custom_call.1} parent=5 // pred_check_branch
        %284 = sbr.rel (%p282) target = $region32
      $region31: #{tpu_custom_call.1} parent=5 // pred_region
        // Predicated region
        $region33: #{tpu_custom_call.1} parent=31 // pred_check
          %p285 = pneg %p52
        $region34: #{tpu_custom_call.1} parent=31 // pred_check_branch
          %287 = sbr.rel (%p285) target = $region36
        $region35: #{tpu_custom_call.1} parent=31 // pred_region
          %s288 = smul.u32 8, %s26
          %p289 = scmp.lt.s32.totalorder %s25, 1
          %s290 = scalar_select %p289, %s25, 1
          %p291 = scmp.lt.s32.totalorder %s288, 7
          %s292 = scalar_select %p291, %s288, 7
          %s293 = smul.addr %s290, 8
          %s294 = sadd.s32 %s292, %s293
          %s295 = smul.addr %s294, 8
          %s296 = scalar_lea.vmem %s0, %s295
          %s297 = smul.u32 8, %s26
        $region36: #{tpu_custom_call.1} parent=31 // pred_fallthru
          _
        // Predicated region
        $region37: #{tpu_custom_call.1} parent=31 // pred_check
          %p298 = pneg %p80
        $region38: #{tpu_custom_call.1} parent=31 // pred_check_branch
          %300 = sbr.rel (%p298) target = $region40
        $region39: #{tpu_custom_call.1} parent=31 // pred_region
          %s301 = smul.u32 8, %s26
          %p302 = scmp.lt.s32.totalorder %s25, 1
          %s303 = scalar_select %p302, %s25, 1
          %p304 = scmp.lt.s32.totalorder %s301, 7
          %s305 = scalar_select %p304, %s301, 7
          %s306 = smul.addr %s303, 8
          %s307 = sadd.s32 %s305, %s306
          %s308 = smul.addr %s307, 8
          %s309 = scalar_lea.vmem %s1, %s308
          %s310 = smul.u32 8, %s26
        $region40: #{tpu_custom_call.1} parent=31 // pred_fallthru
          _
      $region32: #{tpu_custom_call.1} parent=5 // pred_fallthru
        _
      %p311 = scmp.le.s32.totalorder 1, %s18
      %p312 = scmp.lt.s32.totalorder %s18, 3
      %p313 = pnand %p311, %p312
      %p314 = pneg %p313
      // Predicated region
      $region41: #{tpu_custom_call.1} parent=5 // pred_check
        _
      $region42: #{tpu_custom_call.1} parent=5 // pred_check_branch
        %316 = sbr.rel (%p313) target = $region44
      $region43: #{tpu_custom_call.1} parent=5 // pred_region
        %s317 = ssub.s32 %s18, 1
        %s318 = smul.u32 8, %s28
        %p319 = scmp.lt.s32.totalorder %s27, 1
        %s320 = scalar_select %p319, %s27, 1
        %p321 = scmp.lt.s32.totalorder %s318, 7
        %s322 = scalar_select %p321, %s318, 7
        %s323 = smul.addr %s320, 8
        %s324 = sadd.s32 %s322, %s323
        %s325 = smul.addr %s324, 8
        %s326 = scalar_lea.vmem %s0, %s325
        %p327 = pneg %p58
        %p328 = pneg %p55
        %s329 = smul.u32 8, %s28
        %p330 = scmp.lt.s32.totalorder %s27, 1
        %s331 = scalar_select %p330, %s27, 1
        %p332 = scmp.lt.s32.totalorder %s329, 7
        %s333 = scalar_select %p332, %s329, 7
        %s334 = smul.addr %s331, 8
        %s335 = sadd.s32 %s333, %s334
        %s336 = smul.addr %s335, 8
        %s337 = scalar_lea.vmem %s1, %s336
        %p338 = pneg %p86
        %p339 = pneg %p83
        %p340 = pneg %p107
        %p341 = pneg %p104
        %p342 = pneg %p128
        %p343 = pneg %p125
        %p344 = pneg %p149
        %p345 = pneg %p146
        %p346 = pneg %p170
        %p347 = pneg %p167
        %p348 = pneg %p198
        %p349 = pneg %p195
        %p350 = scmp.lt.s32.totalorder %s27, 1
        %s351 = scalar_select %p350, %s27, 1
        %p352 = scmp.lt.s32.totalorder %s28, 0
        %s353 = scalar_select %p352, %s28, 0
        %s354 = smul.addr %s351, 32
        %s355 = sadd.s32 %s353, %s354
        %s356 = smul.addr %s355, 4
        %s357 = scalar_lea.vmem %s6, %s356
        %p358 = pneg %p226
        %p359 = pneg %p223
        %p360 = scmp.lt.s32.totalorder %s27, 1
        %s361 = scalar_select %p360, %s27, 1
        %p362 = scmp.lt.s32.totalorder %s28, 0
        %s363 = scalar_select %p362, %s28, 0
        %s364 = smul.addr %s361, 32
        %s365 = sadd.s32 %s363, %s364
        %s366 = smul.addr %s365, 4
        %s367 = scalar_lea.vmem %s7, %s366
        %p368 = pneg %p254
        %p369 = pneg %p251
        %s370 = sand.u32 %s241, 1
        %s371 = scalar_lea.sflag [#allocation3], %s370
        %s372 = sand.u32 %s241, 1
        %s373 = smul.addr %s372, 32
        %s374 = scalar_lea.vmem [#allocation2], %s373
        %s375 = smul.u32 8, %s28
        %p376 = scmp.lt.s32.totalorder %s27, 1
        %s377 = scalar_select %p376, %s27, 1
        %p378 = scmp.lt.s32.totalorder %s375, 7
        %s379 = scalar_select %p378, %s375, 7
        %s380 = smul.addr %s377, 8
        %s381 = sadd.s32 %s379, %s380
        %s382 = smul.addr %s381, 8
        %s383 = scalar_lea.vmem %s0, %s382
        %s384 = smul.u32 8, %s28
        %s385 = smul.u32 8, %s28
        %p386 = scmp.lt.s32.totalorder %s27, 1
        %s387 = scalar_select %p386, %s27, 1
        %p388 = scmp.lt.s32.totalorder %s385, 7
        %s389 = scalar_select %p388, %s385, 7
        %s390 = smul.addr %s387, 8
        %s391 = sadd.s32 %s389, %s390
        %s392 = smul.addr %s391, 8
        %s393 = scalar_lea.vmem %s1, %s392
        %s394 = smul.u32 8, %s28
        %p395 = scmp.lt.s32.totalorder %s27, 1
        %s396 = scalar_select %p395, %s27, 1
        %p397 = scmp.lt.s32.totalorder %s28, 0
        %s398 = scalar_select %p397, %s28, 0
        %s399 = smul.addr %s396, 32
        %s400 = sadd.s32 %s398, %s399
        %s401 = smul.addr %s400, 4
        %s402 = scalar_lea.vmem %s6, %s401
        %p403 = scmp.lt.s32.totalorder %s27, 1
        %s404 = scalar_select %p403, %s27, 1
        %p405 = scmp.lt.s32.totalorder %s28, 0
        %s406 = scalar_select %p405, %s28, 0
        %s407 = smul.addr %s404, 32
        %s408 = sadd.s32 %s406, %s407
        %s409 = smul.addr %s408, 4
        %s410 = scalar_lea.vmem %s7, %s409
        %s411 = smul.u32 8, %s28
        %v413 = vld [vmem:[%s383] sm:$0xff]
        %v414 = vld [vmem:[%s383 + $0x8] sm:$0xff]
        %v415 = vld [vmem:[%s383 + $0x10] sm:$0xff]
        %v416 = vld [vmem:[%s383 + $0x18] sm:$0xff]
        %v417 = vld [vmem:[%s383 + $0x20] sm:$0xff]
        %v418 = vld [vmem:[%s383 + $0x28] sm:$0xff]
        %v419 = vld [vmem:[%s383 + $0x30] sm:$0xff]
        %v420 = vld [vmem:[%s383 + $0x38] sm:$0xff]
        %v421 = vld [vmem:[%s393] sm:$0xff]
        %v422 = vld [vmem:[%s393 + $0x8] sm:$0xff]
        %v423 = vld [vmem:[%s393 + $0x10] sm:$0xff]
        %v424 = vld [vmem:[%s393 + $0x18] sm:$0xff]
        %v425 = vld [vmem:[%s393 + $0x20] sm:$0xff]
        %v426 = vld [vmem:[%s393 + $0x28] sm:$0xff]
        %v427 = vld [vmem:[%s393 + $0x30] sm:$0xff]
        %v428 = vld [vmem:[%s393 + $0x38] sm:$0xff]
        %vm429 = vcmask 130048
        %v430 = vsel %vm429, %v413, 0.0
        %431 = vadd.xlane.f32.xlu0 %v430
        %v432 = vpop.xlane.xlu0 %431
        %v433 = vsel %vm429, %v414, 0.0
        %434 = vadd.xlane.f32.xlu0 %v433
        %v435 = vpop.xlane.xlu0 %434
        %v436 = vsel %vm429, %v415, 0.0
        %437 = vadd.xlane.f32.xlu0 %v436
        %v438 = vpop.xlane.xlu0 %437
        %v439 = vsel %vm429, %v416, 0.0
        %440 = vadd.xlane.f32.xlu0 %v439
        %v441 = vpop.xlane.xlu0 %440
        %v442 = vsel %vm429, %v417, 0.0
        %443 = vadd.xlane.f32.xlu0 %v442
        %v444 = vpop.xlane.xlu0 %443
        %v445 = vsel %vm429, %v418, 0.0
        %446 = vadd.xlane.f32.xlu0 %v445
        %v447 = vpop.xlane.xlu0 %446
        %v448 = vsel %vm429, %v419, 0.0
        %449 = vadd.xlane.f32.xlu0 %v448
        %v450 = vpop.xlane.xlu0 %449
        %v451 = vsel %vm429, %v420, 0.0
        %452 = vadd.xlane.f32.xlu0 %v451
        %v453 = vpop.xlane.xlu0 %452
        %v454 = vrcp.pop 16.0
        %v455 = vmul.f32 %v432, %v454
        %v456 = vmul.f32 %v435, %v454
        %v457 = vmul.f32 %v438, %v454
        %v458 = vmul.f32 %v441, %v454
        %v459 = vmul.f32 %v444, %v454
        %v460 = vmul.f32 %v447, %v454
        %v461 = vmul.f32 %v450, %v454
        %v462 = vmul.f32 %v453, %v454
        %v463 = vsub.f32 %v413, %v455
        %v464 = vsub.f32 %v414, %v456
        %v465 = vsub.f32 %v415, %v457
        %v466 = vsub.f32 %v416, %v458
        %v467 = vsub.f32 %v417, %v459
        %v468 = vsub.f32 %v418, %v460
        %v469 = vsub.f32 %v419, %v461
        %v470 = vsub.f32 %v420, %v462
        %v471 = vmul.f32 %v463, %v463
        %v472 = vmul.f32 %v464, %v464
        %v473 = vmul.f32 %v465, %v465
        %v474 = vmul.f32 %v466, %v466
        %v475 = vmul.f32 %v467, %v467
        %v476 = vmul.f32 %v468, %v468
        %v477 = vmul.f32 %v469, %v469
        %v478 = vmul.f32 %v470, %v470
        %v479 = vsel %vm429, %v471, 0.0
        %480 = vadd.xlane.f32.xlu0 %v479
        %v481 = vpop.xlane.xlu0 %480
        %v482 = vsel %vm429, %v472, 0.0
        %483 = vadd.xlane.f32.xlu0 %v482
        %v484 = vpop.xlane.xlu0 %483
        %v485 = vsel %vm429, %v473, 0.0
        %486 = vadd.xlane.f32.xlu0 %v485
        %v487 = vpop.xlane.xlu0 %486
        %v488 = vsel %vm429, %v474, 0.0
        %489 = vadd.xlane.f32.xlu0 %v488
        %v490 = vpop.xlane.xlu0 %489
        %v491 = vsel %vm429, %v475, 0.0
        %492 = vadd.xlane.f32.xlu0 %v491
        %v493 = vpop.xlane.xlu0 %492
        %v494 = vsel %vm429, %v476, 0.0
        %495 = vadd.xlane.f32.xlu0 %v494
        %v496 = vpop.xlane.xlu0 %495
        %v497 = vsel %vm429, %v477, 0.0
        %498 = vadd.xlane.f32.xlu0 %v497
        %v499 = vpop.xlane.xlu0 %498
        %v500 = vsel %vm429, %v478, 0.0
        %501 = vadd.xlane.f32.xlu0 %v500
        %v502 = vpop.xlane.xlu0 %501
        %v503 = vmul.f32 %v481, %v454
        %v504 = vmul.f32 %v484, %v454
        %v505 = vmul.f32 %v487, %v454
        %v506 = vmul.f32 %v490, %v454
        %v507 = vmul.f32 %v493, %v454
        %v508 = vmul.f32 %v496, %v454
        %v509 = vmul.f32 %v499, %v454
        %v510 = vmul.f32 %v502, %v454
        %v511 = vadd.f32 %v503, 1e-05
        %v512 = vadd.f32 %v504, 1e-05
        %v513 = vadd.f32 %v505, 1e-05
        %v514 = vadd.f32 %v506, 1e-05
        %v515 = vadd.f32 %v507, 1e-05
        %v516 = vadd.f32 %v508, 1e-05
        %v517 = vadd.f32 %v509, 1e-05
        %v518 = vadd.f32 %v510, 1e-05
        %v519 = vrsqrt.pop %v511
        %v520 = vrsqrt.pop %v512
        %v521 = vrsqrt.pop %v513
        %v522 = vrsqrt.pop %v514
        %v523 = vrsqrt.pop %v515
        %v524 = vrsqrt.pop %v516
        %v525 = vrsqrt.pop %v517
        %v526 = vrsqrt.pop %v518
        %v527 = vmul.f32 %v463, %v519
        %v528 = vmul.f32 %v464, %v520
        %v529 = vmul.f32 %v465, %v521
        %v530 = vmul.f32 %v466, %v522
        %v531 = vmul.f32 %v467, %v523
        %v532 = vmul.f32 %v468, %v524
        %v533 = vmul.f32 %v469, %v525
        %v534 = vmul.f32 %v470, %v526
        %v535 = vld [vmem:[%s2] sm:$0x1]
        %v537 = vlaneseq
        %v538 = vshrl.u32 %v537, 7
        %v539 = vsub.s32 0, %v538
        %v540 = vrot.slane %v535, %v539
        %v542 = vmul.f32 %v527, %v540
        %v543 = vmul.f32 %v528, %v540
        %v544 = vmul.f32 %v529, %v540
        %v545 = vmul.f32 %v530, %v540
        %v546 = vmul.f32 %v531, %v540
        %v547 = vmul.f32 %v532, %v540
        %v548 = vmul.f32 %v533, %v540
        %v549 = vmul.f32 %v534, %v540
        %v550 = vld [vmem:[%s3] sm:$0x1]
        %v552 = vlaneseq
        %v553 = vshrl.u32 %v552, 7
        %v554 = vsub.s32 0, %v553
        %v555 = vrot.slane %v550, %v554
        %v557 = vadd.f32 %v542, %v555
        %v558 = vadd.f32 %v543, %v555
        %v559 = vadd.f32 %v544, %v555
        %v560 = vadd.f32 %v545, %v555
        %v561 = vadd.f32 %v546, %v555
        %v562 = vadd.f32 %v547, %v555
        %v563 = vadd.f32 %v548, %v555
        %v564 = vadd.f32 %v549, %v555
        %v565 = vpack.c.bf16 %v558, %v557
        %v566 = vpack.c.bf16 %v560, %v559
        %v567 = vpack.c.bf16 %v562, %v561
        %v568 = vpack.c.bf16 %v564, %v563
        %v569 = vld [vmem:[%s4] sm:$0xff]
        %v570 = vld [vmem:[%s4 + $0x8] sm:$0xff]
        %v571 = vld [vmem:[%s5] sm:$0x3]
        %v573 = vlaneseq
        %v574 = vshrl.u32 %v573, 7
        %v575 = vsub.s32 0, %v574
        %v576 = vrot.slane %v571, %v575
        %v577 = vlaneseq
        %v578 = vshrl.u32 %v577, 7
        %v579 = vsub.s32 1, %v578
        %v580 = vrot.slane %v571, %v579
        %v585 = vunpack.c.l.b16 %v569
        %v586 = vunpack.c.h.b16 %v569
        %v587 = vunpack.c.l.b16 %v570
        %v588 = vunpack.c.h.b16 %v570
        %v589 = vpack.c.b16 %v587, %v585
        %v590 = vpack.c.b16 %v588, %v586
        %v594 = vsel %vm429, %v565, 0
        %v597 = vsel %vm429, %v566, 0
        %v600 = vsel %vm429, %v567, 0
        %v603 = vsel %vm429, %v568, 0
        %605 = vmatprep.subr.bf16.mxu0 %v590
        %606 = vmatpush1.bf16.msra.mxu0 %v589
        %607 = vmatprep.subr.bf16.mxu0 0
        %608 = vmatpush1.bf16.msra.mxu0 0
        %609 = vmatprep.subr.bf16.mxu0 0
        %610 = vmatpush1.bf16.msra.mxu0 0
        %611 = vmatprep.subr.bf16.mxu0 0
        %612 = vmatpush1.bf16.msra.mxu0 0
        %613 = vmatprep.subr.bf16.mxu0 0
        %614 = vmatpush1.bf16.msra.mxu0 0
        %615 = vmatprep.subr.bf16.mxu0 0
        %616 = vmatpush1.bf16.msra.mxu0 0
        %617 = vmatprep.subr.bf16.mxu0 0
        %618 = vmatpush1.bf16.msra.mxu0 0
        %619 = vmatprep.subr.bf16.mxu0 0
        %620 = vmatpush1.bf16.msra.mxu0 0
        %621 = vmatprep.subr.bf16.mxu0 0
        %622 = vmatpush1.bf16.msra.mxu0 0
        %623 = vmatprep.subr.bf16.mxu0 0
        %624 = vmatpush1.bf16.msra.mxu0 0
        %625 = vmatprep.subr.bf16.mxu0 0
        %626 = vmatpush1.bf16.msra.mxu0 0
        %627 = vmatprep.subr.bf16.mxu0 0
        %628 = vmatpush1.bf16.msra.mxu0 0
        %629 = vmatprep.subr.bf16.mxu0 0
        %630 = vmatpush1.bf16.msra.mxu0 0
        %631 = vmatprep.subr.bf16.mxu0 0
        %632 = vmatpush1.bf16.msra.mxu0 0
        %633 = vmatprep.subr.bf16.mxu0 0
        %634 = vmatpush1.bf16.msra.mxu0 0
        %635 = vmatprep.subr.bf16.mxu0 0
        %636 = vmatpush1.bf16.msra.mxu0 0
        %637 = vmatprep.mubr.bf16.mxu0 0
        %638 = vmatmul.mubr.bf16.gmra.mrb[0].mxu0 %v594
        %v639 = vpop.f32.mrb[0].mxu0
        %v640 = vadd.f32 %v576, %v639
        %v641 = vpop.f32.mrb[0].mxu0
        %v642 = vadd.f32 %v580, %v641
        %v643 = vpop.f32.mrb[0].mxu0
        %v644 = vadd.f32 %v576, %v643
        %v645 = vpop.f32.mrb[0].mxu0
        %v646 = vadd.f32 %v580, %v645
        %647 = vmatprep.mubr.bf16.mxu0 0
        %648 = vmatmul.mubr.bf16.gmra.mrb[0].mxu0 %v597
        %v649 = vpop.f32.mrb[0].mxu0
        %v650 = vadd.f32 %v576, %v649
        %v651 = vpop.f32.mrb[0].mxu0
        %v652 = vadd.f32 %v580, %v651
        %v653 = vpop.f32.mrb[0].mxu0
        %v654 = vadd.f32 %v576, %v653
        %v655 = vpop.f32.mrb[0].mxu0
        %v656 = vadd.f32 %v580, %v655
        %657 = vmatprep.mubr.bf16.mxu0 0
        %658 = vmatmul.mubr.bf16.gmra.mrb[0].mxu0 %v600
        %v659 = vpop.f32.mrb[0].mxu0
        %v660 = vadd.f32 %v576, %v659
        %v661 = vpop.f32.mrb[0].mxu0
        %v662 = vadd.f32 %v580, %v661
        %v663 = vpop.f32.mrb[0].mxu0
        %v664 = vadd.f32 %v576, %v663
        %v665 = vpop.f32.mrb[0].mxu0
        %v666 = vadd.f32 %v580, %v665
        %667 = vmatprep.mubr.bf16.mxu0 0
        %668 = vmatmul.mubr.bf16.gmra.mrb[0].mxu0 %v603
        %v669 = vpop.f32.mrb[0].mxu0
        %v670 = vadd.f32 %v576, %v669
        %v671 = vpop.f32.mrb[0].mxu0
        %v672 = vadd.f32 %v580, %v671
        %v673 = vpop.f32.mrb[0].mxu0
        %v674 = vadd.f32 %v576, %v673
        %v675 = vpop.f32.mrb[0].mxu0
        %v676 = vadd.f32 %v580, %v675
        %677 = vdwg.mxu0
        %v678 = vxor.u32 %v640, 2147483648
        %v679 = vxor.u32 %v644, 2147483648
        %v680 = vxor.u32 %v650, 2147483648
        %v681 = vxor.u32 %v654, 2147483648
        %v682 = vxor.u32 %v660, 2147483648
        %v683 = vxor.u32 %v664, 2147483648
        %v684 = vxor.u32 %v670, 2147483648
        %v685 = vxor.u32 %v674, 2147483648
        %v686 = vmul.f32 %v678, 1.442695
        %v687 = vpow.pop %v686
        %v688 = vmul.f32 %v679, 1.442695
        %v689 = vpow.pop %v688
        %v690 = vmul.f32 %v680, 1.442695
        %v691 = vpow.pop %v690
        %v692 = vmul.f32 %v681, 1.442695
        %v693 = vpow.pop %v692
        %v694 = vmul.f32 %v682, 1.442695
        %v695 = vpow.pop %v694
        %v696 = vmul.f32 %v683, 1.442695
        %v697 = vpow.pop %v696
        %v698 = vmul.f32 %v684, 1.442695
        %v699 = vpow.pop %v698
        %v700 = vmul.f32 %v685, 1.442695
        %v701 = vpow.pop %v700
        %v702 = vadd.f32 %v687, 1.0
        %v703 = vadd.f32 %v689, 1.0
        %v704 = vadd.f32 %v691, 1.0
        %v705 = vadd.f32 %v693, 1.0
        %v706 = vadd.f32 %v695, 1.0
        %v707 = vadd.f32 %v697, 1.0
        %v708 = vadd.f32 %v699, 1.0
        %v709 = vadd.f32 %v701, 1.0
        %v710 = vrcp.pop %v702
        %v711 = vmul.f32 1.0, %v710
        %v712 = vrcp.pop %v703
        %v713 = vmul.f32 1.0, %v712
        %v714 = vrcp.pop %v704
        %v715 = vmul.f32 1.0, %v714
        %v716 = vrcp.pop %v705
        %v717 = vmul.f32 1.0, %v716
        %v718 = vrcp.pop %v706
        %v719 = vmul.f32 1.0, %v718
        %v720 = vrcp.pop %v707
        %v721 = vmul.f32 1.0, %v720
        %v722 = vrcp.pop %v708
        %v723 = vmul.f32 1.0, %v722
        %v724 = vrcp.pop %v709
        %v725 = vmul.f32 1.0, %v724
        %v726 = vxor.u32 %v642, 2147483648
        %v727 = vxor.u32 %v646, 2147483648
        %v728 = vxor.u32 %v652, 2147483648
        %v729 = vxor.u32 %v656, 2147483648
        %v730 = vxor.u32 %v662, 2147483648
        %v731 = vxor.u32 %v666, 2147483648
        %v732 = vxor.u32 %v672, 2147483648
        %v733 = vxor.u32 %v676, 2147483648
        %v734 = vmul.f32 %v726, 1.442695
        %v735 = vpow.pop %v734
        %v736 = vmul.f32 %v727, 1.442695
        %v737 = vpow.pop %v736
        %v738 = vmul.f32 %v728, 1.442695
        %v739 = vpow.pop %v738
        %v740 = vmul.f32 %v729, 1.442695
        %v741 = vpow.pop %v740
        %v742 = vmul.f32 %v730, 1.442695
        %v743 = vpow.pop %v742
        %v744 = vmul.f32 %v731, 1.442695
        %v745 = vpow.pop %v744
        %v746 = vmul.f32 %v732, 1.442695
        %v747 = vpow.pop %v746
        %v748 = vmul.f32 %v733, 1.442695
        %v749 = vpow.pop %v748
        %v750 = vadd.f32 %v735, 1.0
        %v751 = vadd.f32 %v737, 1.0
        %v752 = vadd.f32 %v739, 1.0
        %v753 = vadd.f32 %v741, 1.0
        %v754 = vadd.f32 %v743, 1.0
        %v755 = vadd.f32 %v745, 1.0
        %v756 = vadd.f32 %v747, 1.0
        %v757 = vadd.f32 %v749, 1.0
        %v758 = vrcp.pop %v750
        %v759 = vmul.f32 1.0, %v758
        %v760 = vrcp.pop %v751
        %v761 = vmul.f32 1.0, %v760
        %v762 = vrcp.pop %v752
        %v763 = vmul.f32 1.0, %v762
        %v764 = vrcp.pop %v753
        %v765 = vmul.f32 1.0, %v764
        %v766 = vrcp.pop %v754
        %v767 = vmul.f32 1.0, %v766
        %v768 = vrcp.pop %v755
        %v769 = vmul.f32 1.0, %v768
        %v770 = vrcp.pop %v756
        %v771 = vmul.f32 1.0, %v770
        %v772 = vrcp.pop %v757
        %v773 = vmul.f32 1.0, %v772
        %775 = vset.pattern.permute.xlu0 0
        %776 = vperm.xlu0 %775, %v421
        %v777 = vpop.permute.xlu0 %776
        %780 = vset.pattern.permute.xlu0 0
        %781 = vperm.xlu0 %780, %v422
        %v782 = vpop.permute.xlu0 %781
        %785 = vset.pattern.permute.xlu0 0
        %786 = vperm.xlu0 %785, %v423
        %v787 = vpop.permute.xlu0 %786
        %790 = vset.pattern.permute.xlu0 0
        %791 = vperm.xlu0 %790, %v424
        %v792 = vpop.permute.xlu0 %791
        %795 = vset.pattern.permute.xlu0 0
        %796 = vperm.xlu0 %795, %v425
        %v797 = vpop.permute.xlu0 %796
        %800 = vset.pattern.permute.xlu0 0
        %801 = vperm.xlu0 %800, %v426
        %v802 = vpop.permute.xlu0 %801
        %805 = vset.pattern.permute.xlu0 0
        %806 = vperm.xlu0 %805, %v427
        %v807 = vpop.permute.xlu0 %806
        %810 = vset.pattern.permute.xlu0 0
        %811 = vperm.xlu0 %810, %v428
        %v812 = vpop.permute.xlu0 %811
        %v814 = vmul.f32 %v777, %v711
        %v815 = vmul.f32 %v782, %v713
        %v816 = vmul.f32 %v787, %v715
        %v817 = vmul.f32 %v792, %v717
        %v818 = vmul.f32 %v797, %v719
        %v819 = vmul.f32 %v802, %v721
        %v820 = vmul.f32 %v807, %v723
        %v821 = vmul.f32 %v812, %v725
        %830 = vrot.lane.b32.xlu0 %v814, 64
        %v831 = vpop.permute.xlu0 %830
        %832 = vrot.lane.b32.xlu0 %v815, 64
        %v833 = vpop.permute.xlu0 %832
        %834 = vrot.lane.b32.xlu0 %v816, 64
        %v835 = vpop.permute.xlu0 %834
        %836 = vrot.lane.b32.xlu0 %v817, 64
        %v837 = vpop.permute.xlu0 %836
        %838 = vrot.lane.b32.xlu0 %v818, 64
        %v839 = vpop.permute.xlu0 %838
        %840 = vrot.lane.b32.xlu0 %v819, 64
        %v841 = vpop.permute.xlu0 %840
        %842 = vrot.lane.b32.xlu0 %v820, 64
        %v843 = vpop.permute.xlu0 %842
        %844 = vrot.lane.b32.xlu0 %v821, 64
        %v845 = vpop.permute.xlu0 %844
        %v854 = vmul.f32 %v640, %v831
        %v855 = vmul.f32 %v644, %v833
        %v856 = vmul.f32 %v650, %v835
        %v857 = vmul.f32 %v654, %v837
        %v858 = vmul.f32 %v660, %v839
        %v859 = vmul.f32 %v664, %v841
        %v860 = vmul.f32 %v670, %v843
        %v861 = vmul.f32 %v674, %v845
        %v862 = vpack.c.bf16 %v761, %v759
        %v863 = vpack.c.bf16 %v765, %v763
        %v864 = vpack.c.bf16 %v769, %v767
        %v865 = vpack.c.bf16 %v773, %v771
        %v870 = vunpack.c.l.b16 %v862
        %v871 = vunpack.c.h.b16 %v862
        %v872 = vunpack.c.l.b16 %v863
        %v873 = vunpack.c.h.b16 %v863
        %v874 = vunpack.c.l.b16 %v864
        %v875 = vunpack.c.h.b16 %v864
        %v876 = vunpack.c.l.b16 %v865
        %v877 = vunpack.c.h.b16 %v865
        %v878 = vpack.c.b16 %v870, %v870
        %v879 = vpack.c.b16 %v871, %v871
        %v880 = vpack.c.b16 %v872, %v872
        %v881 = vpack.c.b16 %v873, %v873
        %v882 = vpack.c.b16 %v874, %v874
        %v883 = vpack.c.b16 %v875, %v875
        %v884 = vpack.c.b16 %v876, %v876
        %v885 = vpack.c.b16 %v877, %v877
        %vm894 = vcmask 125952
        %895 = vst.msk [vmem:[%s374] sm:$0xf] %vm894, %v878
        %896 = vst.msk [vmem:[%s374 + $0x4] sm:$0xf] %vm894, %v879
        %897 = vst.msk [vmem:[%s374 + $0x8] sm:$0xf] %vm894, %v880
        %898 = vst.msk [vmem:[%s374 + $0xc] sm:$0xf] %vm894, %v881
        %899 = vst.msk [vmem:[%s374 + $0x10] sm:$0xf] %vm894, %v882
        %900 = vst.msk [vmem:[%s374 + $0x14] sm:$0xf] %vm894, %v883
        %901 = vst.msk [vmem:[%s374 + $0x18] sm:$0xf] %vm894, %v884
        %902 = vst.msk [vmem:[%s374 + $0x1c] sm:$0xf] %vm894, %v885
        %v903 = vpack.c.bf16 %v854, %v854
        %904 = vxpose.xlu0.c.b16.start [1/8] %v903, 128
        %905 = vxpose.xlu0.c.b16.cont [2/8] 0, 128
        %906 = vxpose.xlu0.c.b16.cont [3/8] 0, 128
        %907 = vxpose.xlu0.c.b16.cont [4/8] 0, 128
        %908 = vxpose.xlu0.c.b16.cont [5/8] 0, 128
        %909 = vxpose.xlu0.c.b16.cont [6/8] 0, 128
        %910 = vxpose.xlu0.c.b16.cont [7/8] 0, 128
        %911 = vxpose.xlu0.c.b16.end [8/8] 0, 128
        %v912 = vpop.trf.xlu0
        %v913 = vpop.trf.xlu0
        %v914 = vpop.trf.xlu0
        %v915 = vpop.trf.xlu0
        %v916 = vpop.trf.xlu0
        %v917 = vpop.trf.xlu0
        %v918 = vpop.trf.xlu0
        %v919 = vpop.trf.xlu0
        %921 = vrot.lane.b32.xlu0 %v903, 96
        %v922 = vpop.permute.xlu0 %921
        %924 = vxpose.xlu0.c.b16.start [1/8] %v922, 128
        %925 = vxpose.xlu0.c.b16.cont [2/8] 0, 128
        %926 = vxpose.xlu0.c.b16.cont [3/8] 0, 128
        %927 = vxpose.xlu0.c.b16.cont [4/8] 0, 128
        %928 = vxpose.xlu0.c.b16.cont [5/8] 0, 128
        %929 = vxpose.xlu0.c.b16.cont [6/8] 0, 128
        %930 = vxpose.xlu0.c.b16.cont [7/8] 0, 128
        %931 = vxpose.xlu0.c.b16.end [8/8] 0, 128
        %v932 = vpop.trf.xlu0
        %v933 = vpop.trf.xlu0
        %v934 = vpop.trf.xlu0
        %v935 = vpop.trf.xlu0
        %v936 = vpop.trf.xlu0
        %v937 = vpop.trf.xlu0
        %v938 = vpop.trf.xlu0
        %v939 = vpop.trf.xlu0
        %v940 = vpack.c.bf16 %v855, %v855
        %941 = vxpose.xlu0.c.b16.start [1/8] %v940, 128
        %942 = vxpose.xlu0.c.b16.cont [2/8] 0, 128
        %943 = vxpose.xlu0.c.b16.cont [3/8] 0, 128
        %944 = vxpose.xlu0.c.b16.cont [4/8] 0, 128
        %945 = vxpose.xlu0.c.b16.cont [5/8] 0, 128
        %946 = vxpose.xlu0.c.b16.cont [6/8] 0, 128
        %947 = vxpose.xlu0.c.b16.cont [7/8] 0, 128
        %948 = vxpose.xlu0.c.b16.end [8/8] 0, 128
        %v949 = vpop.trf.xlu0
        %v950 = vpop.trf.xlu0
        %v951 = vpop.trf.xlu0
        %v952 = vpop.trf.xlu0
        %v953 = vpop.trf.xlu0
        %v954 = vpop.trf.xlu0
        %v955 = vpop.trf.xlu0
        %v956 = vpop.trf.xlu0
        %958 = vrot.lane.b32.xlu0 %v940, 96
        %v959 = vpop.permute.xlu0 %958
        %961 = vxpose.xlu0.c.b16.start [1/8] %v959, 128
        %962 = vxpose.xlu0.c.b16.cont [2/8] 0, 128
        %963 = vxpose.xlu0.c.b16.cont [3/8] 0, 128
        %964 = vxpose.xlu0.c.b16.cont [4/8] 0, 128
        %965 = vxpose.xlu0.c.b16.cont [5/8] 0, 128
        %966 = vxpose.xlu0.c.b16.cont [6/8] 0, 128
        %967 = vxpose.xlu0.c.b16.cont [7/8] 0, 128
        %968 = vxpose.xlu0.c.b16.end [8/8] 0, 128
        %v969 = vpop.trf.xlu0
        %v970 = vpop.trf.xlu0
        %v971 = vpop.trf.xlu0
        %v972 = vpop.trf.xlu0
        %v973 = vpop.trf.xlu0
        %v974 = vpop.trf.xlu0
        %v975 = vpop.trf.xlu0
        %v976 = vpop.trf.xlu0
        %v977 = vpack.c.bf16 %v856, %v856
        %978 = vxpose.xlu0.c.b16.start [1/8] %v977, 128
        %979 = vxpose.xlu0.c.b16.cont [2/8] 0, 128
        %980 = vxpose.xlu0.c.b16.cont [3/8] 0, 128
        %981 = vxpose.xlu0.c.b16.cont [4/8] 0, 128
        %982 = vxpose.xlu0.c.b16.cont [5/8] 0, 128
        %983 = vxpose.xlu0.c.b16.cont [6/8] 0, 128
        %984 = vxpose.xlu0.c.b16.cont [7/8] 0, 128
        %985 = vxpose.xlu0.c.b16.end [8/8] 0, 128
        %v986 = vpop.trf.xlu0
        %v987 = vpop.trf.xlu0
        %v988 = vpop.trf.xlu0
        %v989 = vpop.trf.xlu0
        %v990 = vpop.trf.xlu0
        %v991 = vpop.trf.xlu0
        %v992 = vpop.trf.xlu0
        %v993 = vpop.trf.xlu0
        %995 = vrot.lane.b32.xlu0 %v977, 96
        %v996 = vpop.permute.xlu0 %995
        %998 = vxpose.xlu0.c.b16.start [1/8] %v996, 128
        %999 = vxpose.xlu0.c.b16.cont [2/8] 0, 128
        %1000 = vxpose.xlu0.c.b16.cont [3/8] 0, 128
        %1001 = vxpose.xlu0.c.b16.cont [4/8] 0, 128
        %1002 = vxpose.xlu0.c.b16.cont [5/8] 0, 128
        %1003 = vxpose.xlu0.c.b16.cont [6/8] 0, 128
        %1004 = vxpose.xlu0.c.b16.cont [7/8] 0, 128
        %1005 = vxpose.xlu0.c.b16.end [8/8] 0, 128
        %v1006 = vpop.trf.xlu0
        %v1007 = vpop.trf.xlu0
        %v1008 = vpop.trf.xlu0
        %v1009 = vpop.trf.xlu0
        %v1010 = vpop.trf.xlu0
        %v1011 = vpop.trf.xlu0
        %v1012 = vpop.trf.xlu0
        %v1013 = vpop.trf.xlu0
        %v1014 = vpack.c.bf16 %v857, %v857
        %1015 = vxpose.xlu0.c.b16.start [1/8] %v1014, 128
        %1016 = vxpose.xlu0.c.b16.cont [2/8] 0, 128
        %1017 = vxpose.xlu0.c.b16.cont [3/8] 0, 128
        %1018 = vxpose.xlu0.c.b16.cont [4/8] 0, 128
        %1019 = vxpose.xlu0.c.b16.cont [5/8] 0, 128
        %1020 = vxpose.xlu0.c.b16.cont [6/8] 0, 128
        %1021 = vxpose.xlu0.c.b16.cont [7/8] 0, 128
        %1022 = vxpose.xlu0.c.b16.end [8/8] 0, 128
        %v1023 = vpop.trf.xlu0
        %v1024 = vpop.trf.xlu0
        %v1025 = vpop.trf.xlu0
        %v1026 = vpop.trf.xlu0
        %v1027 = vpop.trf.xlu0
        %v1028 = vpop.trf.xlu0
        %v1029 = vpop.trf.xlu0
        %v1030 = vpop.trf.xlu0
        %1032 = vrot.lane.b32.xlu0 %v1014, 96
        %v1033 = vpop.permute.xlu0 %1032
        %1035 = vxpose.xlu0.c.b16.start [1/8] %v1033, 128
        %1036 = vxpose.xlu0.c.b16.cont [2/8] 0, 128
        %1037 = vxpose.xlu0.c.b16.cont [3/8] 0, 128
        %1038 = vxpose.xlu0.c.b16.cont [4/8] 0, 128
        %1039 = vxpose.xlu0.c.b16.cont [5/8] 0, 128
        %1040 = vxpose.xlu0.c.b16.cont [6/8] 0, 128
        %1041 = vxpose.xlu0.c.b16.cont [7/8] 0, 128
        %1042 = vxpose.xlu0.c.b16.end [8/8] 0, 128
        %v1043 = vpop.trf.xlu0
        %v1044 = vpop.trf.xlu0
        %v1045 = vpop.trf.xlu0
        %v1046 = vpop.trf.xlu0
        %v1047 = vpop.trf.xlu0
        %v1048 = vpop.trf.xlu0
        %v1049 = vpop.trf.xlu0
        %v1050 = vpop.trf.xlu0
        %v1051 = vpack.c.bf16 %v858, %v858
        %1052 = vxpose.xlu0.c.b16.start [1/8] %v1051, 128
        %1053 = vxpose.xlu0.c.b16.cont [2/8] 0, 128
        %1054 = vxpose.xlu0.c.b16.cont [3/8] 0, 128
        %1055 = vxpose.xlu0.c.b16.cont [4/8] 0, 128
        %1056 = vxpose.xlu0.c.b16.cont [5/8] 0, 128
        %1057 = vxpose.xlu0.c.b16.cont [6/8] 0, 128
        %1058 = vxpose.xlu0.c.b16.cont [7/8] 0, 128
        %1059 = vxpose.xlu0.c.b16.end [8/8] 0, 128
        %v1060 = vpop.trf.xlu0
        %v1061 = vpop.trf.xlu0
        %v1062 = vpop.trf.xlu0
        %v1063 = vpop.trf.xlu0
        %v1064 = vpop.trf.xlu0
        %v1065 = vpop.trf.xlu0
        %v1066 = vpop.trf.xlu0
        %v1067 = vpop.trf.xlu0
        %1069 = vrot.lane.b32.xlu0 %v1051, 96
        %v1070 = vpop.permute.xlu0 %1069
        %1072 = vxpose.xlu0.c.b16.start [1/8] %v1070, 128
        %1073 = vxpose.xlu0.c.b16.cont [2/8] 0, 128
        %1074 = vxpose.xlu0.c.b16.cont [3/8] 0, 128
        %1075 = vxpose.xlu0.c.b16.cont [4/8] 0, 128
        %1076 = vxpose.xlu0.c.b16.cont [5/8] 0, 128
        %1077 = vxpose.xlu0.c.b16.cont [6/8] 0, 128
        %1078 = vxpose.xlu0.c.b16.cont [7/8] 0, 128
        %1079 = vxpose.xlu0.c.b16.end [8/8] 0, 128
        %v1080 = vpop.trf.xlu0
        %v1081 = vpop.trf.xlu0
        %v1082 = vpop.trf.xlu0
        %v1083 = vpop.trf.xlu0
        %v1084 = vpop.trf.xlu0
        %v1085 = vpop.trf.xlu0
        %v1086 = vpop.trf.xlu0
        %v1087 = vpop.trf.xlu0
        %v1088 = vpack.c.bf16 %v859, %v859
        %1089 = vxpose.xlu0.c.b16.start [1/8] %v1088, 128
        %1090 = vxpose.xlu0.c.b16.cont [2/8] 0, 128
        %1091 = vxpose.xlu0.c.b16.cont [3/8] 0, 128
        %1092 = vxpose.xlu0.c.b16.cont [4/8] 0, 128
        %1093 = vxpose.xlu0.c.b16.cont [5/8] 0, 128
        %1094 = vxpose.xlu0.c.b16.cont [6/8] 0, 128
        %1095 = vxpose.xlu0.c.b16.cont [7/8] 0, 128
        %1096 = vxpose.xlu0.c.b16.end [8/8] 0, 128
        %v1097 = vpop.trf.xlu0
        %v1098 = vpop.trf.xlu0
        %v1099 = vpop.trf.xlu0
        %v1100 = vpop.trf.xlu0
        %v1101 = vpop.trf.xlu0
        %v1102 = vpop.trf.xlu0
        %v1103 = vpop.trf.xlu0
        %v1104 = vpop.trf.xlu0
        %1106 = vrot.lane.b32.xlu0 %v1088, 96
        %v1107 = vpop.permute.xlu0 %1106
        %1109 = vxpose.xlu0.c.b16.start [1/8] %v1107, 128
        %1110 = vxpose.xlu0.c.b16.cont [2/8] 0, 128
        %1111 = vxpose.xlu0.c.b16.cont [3/8] 0, 128
        %1112 = vxpose.xlu0.c.b16.cont [4/8] 0, 128
        %1113 = vxpose.xlu0.c.b16.cont [5/8] 0, 128
        %1114 = vxpose.xlu0.c.b16.cont [6/8] 0, 128
        %1115 = vxpose.xlu0.c.b16.cont [7/8] 0, 128
        %1116 = vxpose.xlu0.c.b16.end [8/8] 0, 128
        %v1117 = vpop.trf.xlu0
        %v1118 = vpop.trf.xlu0
        %v1119 = vpop.trf.xlu0
        %v1120 = vpop.trf.xlu0
        %v1121 = vpop.trf.xlu0
        %v1122 = vpop.trf.xlu0
        %v1123 = vpop.trf.xlu0
        %v1124 = vpop.trf.xlu0
        %v1125 = vpack.c.bf16 %v860, %v860
        %1126 = vxpose.xlu0.c.b16.start [1/8] %v1125, 128
        %1127 = vxpose.xlu0.c.b16.cont [2/8] 0, 128
        %1128 = vxpose.xlu0.c.b16.cont [3/8] 0, 128
        %1129 = vxpose.xlu0.c.b16.cont [4/8] 0, 128
        %1130 = vxpose.xlu0.c.b16.cont [5/8] 0, 128
        %1131 = vxpose.xlu0.c.b16.cont [6/8] 0, 128
        %1132 = vxpose.xlu0.c.b16.cont [7/8] 0, 128
        %1133 = vxpose.xlu0.c.b16.end [8/8] 0, 128
        %v1134 = vpop.trf.xlu0
        %v1135 = vpop.trf.xlu0
        %v1136 = vpop.trf.xlu0
        %v1137 = vpop.trf.xlu0
        %v1138 = vpop.trf.xlu0
        %v1139 = vpop.trf.xlu0
        %v1140 = vpop.trf.xlu0
        %v1141 = vpop.trf.xlu0
        %1143 = vrot.lane.b32.xlu0 %v1125, 96
        %v1144 = vpop.permute.xlu0 %1143
        %1146 = vxpose.xlu0.c.b16.start [1/8] %v1144, 128
        %1147 = vxpose.xlu0.c.b16.cont [2/8] 0, 128
        %1148 = vxpose.xlu0.c.b16.cont [3/8] 0, 128
        %1149 = vxpose.xlu0.c.b16.cont [4/8] 0, 128
        %1150 = vxpose.xlu0.c.b16.cont [5/8] 0, 128
        %1151 = vxpose.xlu0.c.b16.cont [6/8] 0, 128
        %1152 = vxpose.xlu0.c.b16.cont [7/8] 0, 128
        %1153 = vxpose.xlu0.c.b16.end [8/8] 0, 128
        %v1154 = vpop.trf.xlu0
        %v1155 = vpop.trf.xlu0
        %v1156 = vpop.trf.xlu0
        %v1157 = vpop.trf.xlu0
        %v1158 = vpop.trf.xlu0
        %v1159 = vpop.trf.xlu0
        %v1160 = vpop.trf.xlu0
        %v1161 = vpop.trf.xlu0
        %v1162 = vpack.c.bf16 %v861, %v861
        %1163 = vxpose.xlu0.c.b16.start [1/8] %v1162, 128
        %1164 = vxpose.xlu0.c.b16.cont [2/8] 0, 128
        %1165 = vxpose.xlu0.c.b16.cont [3/8] 0, 128
        %1166 = vxpose.xlu0.c.b16.cont [4/8] 0, 128
        %1167 = vxpose.xlu0.c.b16.cont [5/8] 0, 128
        %1168 = vxpose.xlu0.c.b16.cont [6/8] 0, 128
        %1169 = vxpose.xlu0.c.b16.cont [7/8] 0, 128
        %1170 = vxpose.xlu0.c.b16.end [8/8] 0, 128
        %v1171 = vpop.trf.xlu0
        %v1172 = vpop.trf.xlu0
        %v1173 = vpop.trf.xlu0
        %v1174 = vpop.trf.xlu0
        %v1175 = vpop.trf.xlu0
        %v1176 = vpop.trf.xlu0
        %v1177 = vpop.trf.xlu0
        %v1178 = vpop.trf.xlu0
        %1180 = vrot.lane.b32.xlu0 %v1162, 96
        %v1181 = vpop.permute.xlu0 %1180
        %1183 = vxpose.xlu0.c.b16.start [1/8] %v1181, 128
        %1184 = vxpose.xlu0.c.b16.cont [2/8] 0, 128
        %1185 = vxpose.xlu0.c.b16.cont [3/8] 0, 128
        %1186 = vxpose.xlu0.c.b16.cont [4/8] 0, 128
        %1187 = vxpose.xlu0.c.b16.cont [5/8] 0, 128
        %1188 = vxpose.xlu0.c.b16.cont [6/8] 0, 128
        %1189 = vxpose.xlu0.c.b16.cont [7/8] 0, 128
        %1190 = vxpose.xlu0.c.b16.end [8/8] 0, 128
        %v1191 = vpop.trf.xlu0
        %v1192 = vpop.trf.xlu0
        %v1193 = vpop.trf.xlu0
        %v1194 = vpop.trf.xlu0
        %v1195 = vpop.trf.xlu0
        %v1196 = vpop.trf.xlu0
        %v1197 = vpop.trf.xlu0
        %v1198 = vpop.trf.xlu0
        %v1201 = vcombine.high %v912, %v912
        %v1203 = vunpack.c.l.s4 1966171168
        %v1204 = vunpack.c.0.s8 %v1203
        %v1205 = vlaneseq
        %v1206 = vshrl.u32 %v1205, 7
        %v1207 = vsub.s32 %v1204, %v1206
        %v1208 = vrot.slane %v912, %v1207
        %v1210 = vunpack.c.l.s4 1966171168
        %v1211 = vunpack.c.0.s8 %v1210
        %v1212 = vlaneseq
        %v1213 = vshrl.u32 %v1212, 7
        %v1214 = vsub.s32 %v1211, %v1213
        %v1215 = vrot.slane %v1201, %v1214
        %v1216 = vcombine.high %v1208, %v1208
        %v1217 = vcombine.high %v1215, %v1215
        %v1219 = vunpack.c.l.s4 1966171168
        %v1220 = vunpack.c.0.s8 %v1219
        %v1221 = vlaneseq
        %v1222 = vshrl.u32 %v1221, 7
        %v1223 = vsub.s32 %v1220, %v1222
        %v1224 = vrot.slane %v1208, %v1223
        %v1226 = vunpack.c.l.s4 1966171168
        %v1227 = vunpack.c.0.s8 %v1226
        %v1228 = vlaneseq
        %v1229 = vshrl.u32 %v1228, 7
        %v1230 = vsub.s32 %v1227, %v1229
        %v1231 = vrot.slane %v1215, %v1230
        %v1233 = vunpack.c.l.s4 1966171168
        %v1234 = vunpack.c.0.s8 %v1233
        %v1235 = vlaneseq
        %v1236 = vshrl.u32 %v1235, 7
        %v1237 = vsub.s32 %v1234, %v1236
        %v1238 = vrot.slane %v1216, %v1237
        %v1240 = vunpack.c.l.s4 1966171168
        %v1241 = vunpack.c.0.s8 %v1240
        %v1242 = vlaneseq
        %v1243 = vshrl.u32 %v1242, 7
        %v1244 = vsub.s32 %v1241, %v1243
        %v1245 = vrot.slane %v1217, %v1244
        %v1246 = vcombine.high %v1224, %v1224
        %v1247 = vcombine.high %v1231, %v1231
        %v1248 = vcombine.high %v1238, %v1238
        %v1249 = vcombine.high %v1245, %v1245
        %v1250 = vcombine.high %v913, %v913
        %v1252 = vunpack.c.l.s4 1966171168
        %v1253 = vunpack.c.0.s8 %v1252
        %v1254 = vlaneseq
        %v1255 = vshrl.u32 %v1254, 7
        %v1256 = vsub.s32 %v1253, %v1255
        %v1257 = vrot.slane %v913, %v1256
        %v1259 = vunpack.c.l.s4 1966171168
        %v1260 = vunpack.c.0.s8 %v1259
        %v1261 = vlaneseq
        %v1262 = vshrl.u32 %v1261, 7
        %v1263 = vsub.s32 %v1260, %v1262
        %v1264 = vrot.slane %v1250, %v1263
        %v1265 = vcombine.high %v1257, %v1257
        %v1266 = vcombine.high %v1264, %v1264
        %v1268 = vunpack.c.l.s4 1966171168
        %v1269 = vunpack.c.0.s8 %v1268
        %v1270 = vlaneseq
        %v1271 = vshrl.u32 %v1270, 7
        %v1272 = vsub.s32 %v1269, %v1271
        %v1273 = vrot.slane %v1257, %v1272
        %v1275 = vunpack.c.l.s4 1966171168
        %v1276 = vunpack.c.0.s8 %v1275
        %v1277 = vlaneseq
        %v1278 = vshrl.u32 %v1277, 7
        %v1279 = vsub.s32 %v1276, %v1278
        %v1280 = vrot.slane %v1264, %v1279
        %v1282 = vunpack.c.l.s4 1966171168
        %v1283 = vunpack.c.0.s8 %v1282
        %v1284 = vlaneseq
        %v1285 = vshrl.u32 %v1284, 7
        %v1286 = vsub.s32 %v1283, %v1285
        %v1287 = vrot.slane %v1265, %v1286
        %v1289 = vunpack.c.l.s4 1966171168
        %v1290 = vunpack.c.0.s8 %v1289
        %v1291 = vlaneseq
        %v1292 = vshrl.u32 %v1291, 7
        %v1293 = vsub.s32 %v1290, %v1292
        %v1294 = vrot.slane %v1266, %v1293
        %v1295 = vcombine.high %v1273, %v1273
        %v1296 = vcombine.high %v1280, %v1280
        %v1297 = vcombine.high %v1287, %v1287
        %v1298 = vcombine.high %v1294, %v1294
        %v1299 = vunpack.i.l.s16 %v1224
        %v1300 = vunpack.i.h.s16 %v1224
        %v1301 = vunpack.i.l.s16 %v1238
        %v1302 = vunpack.i.h.s16 %v1238
        %v1303 = vunpack.i.l.s16 %v1246
        %v1304 = vunpack.i.h.s16 %v1246
        %v1305 = vunpack.i.l.s16 %v1248
        %v1306 = vunpack.i.h.s16 %v1248
        %v1307 = vunpack.i.l.s16 %v1231
        %v1308 = vunpack.i.h.s16 %v1231
        %v1309 = vunpack.i.l.s16 %v1245
        %v1310 = vunpack.i.h.s16 %v1245
        %v1311 = vunpack.i.l.s16 %v1247
        %v1312 = vunpack.i.h.s16 %v1247
        %v1313 = vunpack.i.l.s16 %v1249
        %v1314 = vunpack.i.h.s16 %v1249
        %v1315 = vunpack.i.l.s16 %v1273
        %v1316 = vunpack.i.h.s16 %v1273
        %v1317 = vunpack.i.l.s16 %v1287
        %v1318 = vunpack.i.h.s16 %v1287
        %v1319 = vunpack.i.l.s16 %v1295
        %v1320 = vunpack.i.h.s16 %v1295
        %v1321 = vunpack.i.l.s16 %v1297
        %v1322 = vunpack.i.h.s16 %v1297
        %v1323 = vunpack.i.l.s16 %v1280
        %v1324 = vunpack.i.h.s16 %v1280
        %v1325 = vunpack.i.l.s16 %v1294
        %v1326 = vunpack.i.h.s16 %v1294
        %v1327 = vunpack.i.l.s16 %v1296
        %v1328 = vunpack.i.h.s16 %v1296
        %v1329 = vunpack.i.l.s16 %v1298
        %v1330 = vunpack.i.h.s16 %v1298
        %v1333 = vcombine.high %v949, %v949
        %v1335 = vunpack.c.l.s4 1966171168
        %v1336 = vunpack.c.0.s8 %v1335
        %v1337 = vlaneseq
        %v1338 = vshrl.u32 %v1337, 7
        %v1339 = vsub.s32 %v1336, %v1338
        %v1340 = vrot.slane %v949, %v1339
        %v1342 = vunpack.c.l.s4 1966171168
        %v1343 = vunpack.c.0.s8 %v1342
        %v1344 = vlaneseq
        %v1345 = vshrl.u32 %v1344, 7
        %v1346 = vsub.s32 %v1343, %v1345
        %v1347 = vrot.slane %v1333, %v1346
        %v1348 = vcombine.high %v1340, %v1340
        %v1349 = vcombine.high %v1347, %v1347
        %v1351 = vunpack.c.l.s4 1966171168
        %v1352 = vunpack.c.0.s8 %v1351
        %v1353 = vlaneseq
        %v1354 = vshrl.u32 %v1353, 7
        %v1355 = vsub.s32 %v1352, %v1354
        %v1356 = vrot.slane %v1340, %v1355
        %v1358 = vunpack.c.l.s4 1966171168
        %v1359 = vunpack.c.0.s8 %v1358
        %v1360 = vlaneseq
        %v1361 = vshrl.u32 %v1360, 7
        %v1362 = vsub.s32 %v1359, %v1361
        %v1363 = vrot.slane %v1347, %v1362
        %v1365 = vunpack.c.l.s4 1966171168
        %v1366 = vunpack.c.0.s8 %v1365
        %v1367 = vlaneseq
        %v1368 = vshrl.u32 %v1367, 7
        %v1369 = vsub.s32 %v1366, %v1368
        %v1370 = vrot.slane %v1348, %v1369
        %v1372 = vunpack.c.l.s4 1966171168
        %v1373 = vunpack.c.0.s8 %v1372
        %v1374 = vlaneseq
        %v1375 = vshrl.u32 %v1374, 7
        %v1376 = vsub.s32 %v1373, %v1375
        %v1377 = vrot.slane %v1349, %v1376
        %v1378 = vcombine.high %v1356, %v1356
        %v1379 = vcombine.high %v1363, %v1363
        %v1380 = vcombine.high %v1370, %v1370
        %v1381 = vcombine.high %v1377, %v1377
        %v1382 = vcombine.high %v950, %v950
        %v1384 = vunpack.c.l.s4 1966171168
        %v1385 = vunpack.c.0.s8 %v1384
        %v1386 = vlaneseq
        %v1387 = vshrl.u32 %v1386, 7
        %v1388 = vsub.s32 %v1385, %v1387
        %v1389 = vrot.slane %v950, %v1388
        %v1391 = vunpack.c.l.s4 1966171168
        %v1392 = vunpack.c.0.s8 %v1391
        %v1393 = vlaneseq
        %v1394 = vshrl.u32 %v1393, 7
        %v1395 = vsub.s32 %v1392, %v1394
        %v1396 = vrot.slane %v1382, %v1395
        %v1397 = vcombine.high %v1389, %v1389
        %v1398 = vcombine.high %v1396, %v1396
        %v1400 = vunpack.c.l.s4 1966171168
        %v1401 = vunpack.c.0.s8 %v1400
        %v1402 = vlaneseq
        %v1403 = vshrl.u32 %v1402, 7
        %v1404 = vsub.s32 %v1401, %v1403
        %v1405 = vrot.slane %v1389, %v1404
        %v1407 = vunpack.c.l.s4 1966171168
        %v1408 = vunpack.c.0.s8 %v1407
        %v1409 = vlaneseq
        %v1410 = vshrl.u32 %v1409, 7
        %v1411 = vsub.s32 %v1408, %v1410
        %v1412 = vrot.slane %v1396, %v1411
        %v1414 = vunpack.c.l.s4 1966171168
        %v1415 = vunpack.c.0.s8 %v1414
        %v1416 = vlaneseq
        %v1417 = vshrl.u32 %v1416, 7
        %v1418 = vsub.s32 %v1415, %v1417
        %v1419 = vrot.slane %v1397, %v1418
        %v1421 = vunpack.c.l.s4 1966171168
        %v1422 = vunpack.c.0.s8 %v1421
        %v1423 = vlaneseq
        %v1424 = vshrl.u32 %v1423, 7
        %v1425 = vsub.s32 %v1422, %v1424
        %v1426 = vrot.slane %v1398, %v1425
        %v1427 = vcombine.high %v1405, %v1405
        %v1428 = vcombine.high %v1412, %v1412
        %v1429 = vcombine.high %v1419, %v1419
        %v1430 = vcombine.high %v1426, %v1426
        %v1431 = vunpack.i.l.s16 %v1356
        %v1432 = vunpack.i.h.s16 %v1356
        %v1433 = vunpack.i.l.s16 %v1370
        %v1434 = vunpack.i.h.s16 %v1370
        %v1435 = vunpack.i.l.s16 %v1378
        %v1436 = vunpack.i.h.s16 %v1378
        %v1437 = vunpack.i.l.s16 %v1380
        %v1438 = vunpack.i.h.s16 %v1380
        %v1439 = vunpack.i.l.s16 %v1363
        %v1440 = vunpack.i.h.s16 %v1363
        %v1441 = vunpack.i.l.s16 %v1377
        %v1442 = vunpack.i.h.s16 %v1377
        %v1443 = vunpack.i.l.s16 %v1379
        %v1444 = vunpack.i.h.s16 %v1379
        %v1445 = vunpack.i.l.s16 %v1381
        %v1446 = vunpack.i.h.s16 %v1381
        %v1447 = vunpack.i.l.s16 %v1405
        %v1448 = vunpack.i.h.s16 %v1405
        %v1449 = vunpack.i.l.s16 %v1419
        %v1450 = vunpack.i.h.s16 %v1419
        %v1451 = vunpack.i.l.s16 %v1427
        %v1452 = vunpack.i.h.s16 %v1427
        %v1453 = vunpack.i.l.s16 %v1429
        %v1454 = vunpack.i.h.s16 %v1429
        %v1455 = vunpack.i.l.s16 %v1412
        %v1456 = vunpack.i.h.s16 %v1412
        %v1457 = vunpack.i.l.s16 %v1426
        %v1458 = vunpack.i.h.s16 %v1426
        %v1459 = vunpack.i.l.s16 %v1428
        %v1460 = vunpack.i.h.s16 %v1428
        %v1461 = vunpack.i.l.s16 %v1430
        %v1462 = vunpack.i.h.s16 %v1430
        %v1465 = vcombine.high %v986, %v986
        %v1467 = vunpack.c.l.s4 1966171168
        %v1468 = vunpack.c.0.s8 %v1467
        %v1469 = vlaneseq
        %v1470 = vshrl.u32 %v1469, 7
        %v1471 = vsub.s32 %v1468, %v1470
        %v1472 = vrot.slane %v986, %v1471
        %v1474 = vunpack.c.l.s4 1966171168
        %v1475 = vunpack.c.0.s8 %v1474
        %v1476 = vlaneseq
        %v1477 = vshrl.u32 %v1476, 7
        %v1478 = vsub.s32 %v1475, %v1477
        %v1479 = vrot.slane %v1465, %v1478
        %v1480 = vcombine.high %v1472, %v1472
        %v1481 = vcombine.high %v1479, %v1479
        %v1483 = vunpack.c.l.s4 1966171168
        %v1484 = vunpack.c.0.s8 %v1483
        %v1485 = vlaneseq
        %v1486 = vshrl.u32 %v1485, 7
        %v1487 = vsub.s32 %v1484, %v1486
        %v1488 = vrot.slane %v1472, %v1487
        %v1490 = vunpack.c.l.s4 1966171168
        %v1491 = vunpack.c.0.s8 %v1490
        %v1492 = vlaneseq
        %v1493 = vshrl.u32 %v1492, 7
        %v1494 = vsub.s32 %v1491, %v1493
        %v1495 = vrot.slane %v1479, %v1494
        %v1497 = vunpack.c.l.s4 1966171168
        %v1498 = vunpack.c.0.s8 %v1497
        %v1499 = vlaneseq
        %v1500 = vshrl.u32 %v1499, 7
        %v1501 = vsub.s32 %v1498, %v1500
        %v1502 = vrot.slane %v1480, %v1501
        %v1504 = vunpack.c.l.s4 1966171168
        %v1505 = vunpack.c.0.s8 %v1504
        %v1506 = vlaneseq
        %v1507 = vshrl.u32 %v1506, 7
        %v1508 = vsub.s32 %v1505, %v1507
        %v1509 = vrot.slane %v1481, %v1508
        %v1510 = vcombine.high %v1488, %v1488
        %v1511 = vcombine.high %v1495, %v1495
        %v1512 = vcombine.high %v1502, %v1502
        %v1513 = vcombine.high %v1509, %v1509
        %v1514 = vcombine.high %v987, %v987
        %v1516 = vunpack.c.l.s4 1966171168
        %v1517 = vunpack.c.0.s8 %v1516
        %v1518 = vlaneseq
        %v1519 = vshrl.u32 %v1518, 7
        %v1520 = vsub.s32 %v1517, %v1519
        %v1521 = vrot.slane %v987, %v1520
        %v1523 = vunpack.c.l.s4 1966171168
        %v1524 = vunpack.c.0.s8 %v1523
        %v1525 = vlaneseq
        %v1526 = vshrl.u32 %v1525, 7
        %v1527 = vsub.s32 %v1524, %v1526
        %v1528 = vrot.slane %v1514, %v1527
        %v1529 = vcombine.high %v1521, %v1521
        %v1530 = vcombine.high %v1528, %v1528
        %v1532 = vunpack.c.l.s4 1966171168
        %v1533 = vunpack.c.0.s8 %v1532
        %v1534 = vlaneseq
        %v1535 = vshrl.u32 %v1534, 7
        %v1536 = vsub.s32 %v1533, %v1535
        %v1537 = vrot.slane %v1521, %v1536
        %v1539 = vunpack.c.l.s4 1966171168
        %v1540 = vunpack.c.0.s8 %v1539
        %v1541 = vlaneseq
        %v1542 = vshrl.u32 %v1541, 7
        %v1543 = vsub.s32 %v1540, %v1542
        %v1544 = vrot.slane %v1528, %v1543
        %v1546 = vunpack.c.l.s4 1966171168
        %v1547 = vunpack.c.0.s8 %v1546
        %v1548 = vlaneseq
        %v1549 = vshrl.u32 %v1548, 7
        %v1550 = vsub.s32 %v1547, %v1549
        %v1551 = vrot.slane %v1529, %v1550
        %v1553 = vunpack.c.l.s4 1966171168
        %v1554 = vunpack.c.0.s8 %v1553
        %v1555 = vlaneseq
        %v1556 = vshrl.u32 %v1555, 7
        %v1557 = vsub.s32 %v1554, %v1556
        %v1558 = vrot.slane %v1530, %v1557
        %v1559 = vcombine.high %v1537, %v1537
        %v1560 = vcombine.high %v1544, %v1544
        %v1561 = vcombine.high %v1551, %v1551
        %v1562 = vcombine.high %v1558, %v1558
        %v1563 = vunpack.i.l.s16 %v1488
        %v1564 = vunpack.i.h.s16 %v1488
        %v1565 = vunpack.i.l.s16 %v1502
        %v1566 = vunpack.i.h.s16 %v1502
        %v1567 = vunpack.i.l.s16 %v1510
        %v1568 = vunpack.i.h.s16 %v1510
        %v1569 = vunpack.i.l.s16 %v1512
        %v1570 = vunpack.i.h.s16 %v1512
        %v1571 = vunpack.i.l.s16 %v1495
        %v1572 = vunpack.i.h.s16 %v1495
        %v1573 = vunpack.i.l.s16 %v1509
        %v1574 = vunpack.i.h.s16 %v1509
        %v1575 = vunpack.i.l.s16 %v1511
        %v1576 = vunpack.i.h.s16 %v1511
        %v1577 = vunpack.i.l.s16 %v1513
        %v1578 = vunpack.i.h.s16 %v1513
        %v1579 = vunpack.i.l.s16 %v1537
        %v1580 = vunpack.i.h.s16 %v1537
        %v1581 = vunpack.i.l.s16 %v1551
        %v1582 = vunpack.i.h.s16 %v1551
        %v1583 = vunpack.i.l.s16 %v1559
        %v1584 = vunpack.i.h.s16 %v1559
        %v1585 = vunpack.i.l.s16 %v1561
        %v1586 = vunpack.i.h.s16 %v1561
        %v1587 = vunpack.i.l.s16 %v1544
        %v1588 = vunpack.i.h.s16 %v1544
        %v1589 = vunpack.i.l.s16 %v1558
        %v1590 = vunpack.i.h.s16 %v1558
        %v1591 = vunpack.i.l.s16 %v1560
        %v1592 = vunpack.i.h.s16 %v1560
        %v1593 = vunpack.i.l.s16 %v1562
        %v1594 = vunpack.i.h.s16 %v1562
        %v1597 = vcombine.high %v1023, %v1023
        %v1599 = vunpack.c.l.s4 1966171168
        %v1600 = vunpack.c.0.s8 %v1599
        %v1601 = vlaneseq
        %v1602 = vshrl.u32 %v1601, 7
        %v1603 = vsub.s32 %v1600, %v1602
        %v1604 = vrot.slane %v1023, %v1603
        %v1606 = vunpack.c.l.s4 1966171168
        %v1607 = vunpack.c.0.s8 %v1606
        %v1608 = vlaneseq
        %v1609 = vshrl.u32 %v1608, 7
        %v1610 = vsub.s32 %v1607, %v1609
        %v1611 = vrot.slane %v1597, %v1610
        %v1612 = vcombine.high %v1604, %v1604
        %v1613 = vcombine.high %v1611, %v1611
        %v1615 = vunpack.c.l.s4 1966171168
        %v1616 = vunpack.c.0.s8 %v1615
        %v1617 = vlaneseq
        %v1618 = vshrl.u32 %v1617, 7
        %v1619 = vsub.s32 %v1616, %v1618
        %v1620 = vrot.slane %v1604, %v1619
        %v1622 = vunpack.c.l.s4 1966171168
        %v1623 = vunpack.c.0.s8 %v1622
        %v1624 = vlaneseq
        %v1625 = vshrl.u32 %v1624, 7
        %v1626 = vsub.s32 %v1623, %v1625
        %v1627 = vrot.slane %v1611, %v1626
        %v1629 = vunpack.c.l.s4 1966171168
        %v1630 = vunpack.c.0.s8 %v1629
        %v1631 = vlaneseq
        %v1632 = vshrl.u32 %v1631, 7
        %v1633 = vsub.s32 %v1630, %v1632
        %v1634 = vrot.slane %v1612, %v1633
        %v1636 = vunpack.c.l.s4 1966171168
        %v1637 = vunpack.c.0.s8 %v1636
        %v1638 = vlaneseq
        %v1639 = vshrl.u32 %v1638, 7
        %v1640 = vsub.s32 %v1637, %v1639
        %v1641 = vrot.slane %v1613, %v1640
        %v1642 = vcombine.high %v1620, %v1620
        %v1643 = vcombine.high %v1627, %v1627
        %v1644 = vcombine.high %v1634, %v1634
        %v1645 = vcombine.high %v1641, %v1641
        %v1646 = vcombine.high %v1024, %v1024
        %v1648 = vunpack.c.l.s4 1966171168
        %v1649 = vunpack.c.0.s8 %v1648
        %v1650 = vlaneseq
        %v1651 = vshrl.u32 %v1650, 7
        %v1652 = vsub.s32 %v1649, %v1651
        %v1653 = vrot.slane %v1024, %v1652
        %v1655 = vunpack.c.l.s4 1966171168
        %v1656 = vunpack.c.0.s8 %v1655
        %v1657 = vlaneseq
        %v1658 = vshrl.u32 %v1657, 7
        %v1659 = vsub.s32 %v1656, %v1658
        %v1660 = vrot.slane %v1646, %v1659
        %v1661 = vcombine.high %v1653, %v1653
        %v1662 = vcombine.high %v1660, %v1660
        %v1664 = vunpack.c.l.s4 1966171168
        %v1665 = vunpack.c.0.s8 %v1664
        %v1666 = vlaneseq
        %v1667 = vshrl.u32 %v1666, 7
        %v1668 = vsub.s32 %v1665, %v1667
        %v1669 = vrot.slane %v1653, %v1668
        %v1671 = vunpack.c.l.s4 1966171168
        %v1672 = vunpack.c.0.s8 %v1671
        %v1673 = vlaneseq
        %v1674 = vshrl.u32 %v1673, 7
        %v1675 = vsub.s32 %v1672, %v1674
        %v1676 = vrot.slane %v1660, %v1675
        %v1678 = vunpack.c.l.s4 1966171168
        %v1679 = vunpack.c.0.s8 %v1678
        %v1680 = vlaneseq
        %v1681 = vshrl.u32 %v1680, 7
        %v1682 = vsub.s32 %v1679, %v1681
        %v1683 = vrot.slane %v1661, %v1682
        %v1685 = vunpack.c.l.s4 1966171168
        %v1686 = vunpack.c.0.s8 %v1685
        %v1687 = vlaneseq
        %v1688 = vshrl.u32 %v1687, 7
        %v1689 = vsub.s32 %v1686, %v1688
        %v1690 = vrot.slane %v1662, %v1689
        %v1691 = vcombine.high %v1669, %v1669
        %v1692 = vcombine.high %v1676, %v1676
        %v1693 = vcombine.high %v1683, %v1683
        %v1694 = vcombine.high %v1690, %v1690
        %v1695 = vunpack.i.l.s16 %v1620
        %v1696 = vunpack.i.h.s16 %v1620
        %v1697 = vunpack.i.l.s16 %v1634
        %v1698 = vunpack.i.h.s16 %v1634
        %v1699 = vunpack.i.l.s16 %v1642
        %v1700 = vunpack.i.h.s16 %v1642
        %v1701 = vunpack.i.l.s16 %v1644
        %v1702 = vunpack.i.h.s16 %v1644
        %v1703 = vunpack.i.l.s16 %v1627
        %v1704 = vunpack.i.h.s16 %v1627
        %v1705 = vunpack.i.l.s16 %v1641
        %v1706 = vunpack.i.h.s16 %v1641
        %v1707 = vunpack.i.l.s16 %v1643
        %v1708 = vunpack.i.h.s16 %v1643
        %v1709 = vunpack.i.l.s16 %v1645
        %v1710 = vunpack.i.h.s16 %v1645
        %v1711 = vunpack.i.l.s16 %v1669
        %v1712 = vunpack.i.h.s16 %v1669
        %v1713 = vunpack.i.l.s16 %v1683
        %v1714 = vunpack.i.h.s16 %v1683
        %v1715 = vunpack.i.l.s16 %v1691
        %v1716 = vunpack.i.h.s16 %v1691
        %v1717 = vunpack.i.l.s16 %v1693
        %v1718 = vunpack.i.h.s16 %v1693
        %v1719 = vunpack.i.l.s16 %v1676
        %v1720 = vunpack.i.h.s16 %v1676
        %v1721 = vunpack.i.l.s16 %v1690
        %v1722 = vunpack.i.h.s16 %v1690
        %v1723 = vunpack.i.l.s16 %v1692
        %v1724 = vunpack.i.h.s16 %v1692
        %v1725 = vunpack.i.l.s16 %v1694
        %v1726 = vunpack.i.h.s16 %v1694
        %v1729 = vcombine.high %v1060, %v1060
        %v1731 = vunpack.c.l.s4 1966171168
        %v1732 = vunpack.c.0.s8 %v1731
        %v1733 = vlaneseq
        %v1734 = vshrl.u32 %v1733, 7
        %v1735 = vsub.s32 %v1732, %v1734
        %v1736 = vrot.slane %v1060, %v1735
        %v1738 = vunpack.c.l.s4 1966171168
        %v1739 = vunpack.c.0.s8 %v1738
        %v1740 = vlaneseq
        %v1741 = vshrl.u32 %v1740, 7
        %v1742 = vsub.s32 %v1739, %v1741
        %v1743 = vrot.slane %v1729, %v1742
        %v1744 = vcombine.high %v1736, %v1736
        %v1745 = vcombine.high %v1743, %v1743
        %v1747 = vunpack.c.l.s4 1966171168
        %v1748 = vunpack.c.0.s8 %v1747
        %v1749 = vlaneseq
        %v1750 = vshrl.u32 %v1749, 7
        %v1751 = vsub.s32 %v1748, %v1750
        %v1752 = vrot.slane %v1736, %v1751
        %v1754 = vunpack.c.l.s4 1966171168
        %v1755 = vunpack.c.0.s8 %v1754
        %v1756 = vlaneseq
        %v1757 = vshrl.u32 %v1756, 7
        %v1758 = vsub.s32 %v1755, %v1757
        %v1759 = vrot.slane %v1743, %v1758
        %v1761 = vunpack.c.l.s4 1966171168
        %v1762 = vunpack.c.0.s8 %v1761
        %v1763 = vlaneseq
        %v1764 = vshrl.u32 %v1763, 7
        %v1765 = vsub.s32 %v1762, %v1764
        %v1766 = vrot.slane %v1744, %v1765
        %v1768 = vunpack.c.l.s4 1966171168
        %v1769 = vunpack.c.0.s8 %v1768
        %v1770 = vlaneseq
        %v1771 = vshrl.u32 %v1770, 7
        %v1772 = vsub.s32 %v1769, %v1771
        %v1773 = vrot.slane %v1745, %v1772
        %v1774 = vcombine.high %v1752, %v1752
        %v1775 = vcombine.high %v1759, %v1759
        %v1776 = vcombine.high %v1766, %v1766
        %v1777 = vcombine.high %v1773, %v1773
        %v1778 = vcombine.high %v1061, %v1061
        %v1780 = vunpack.c.l.s4 1966171168
        %v1781 = vunpack.c.0.s8 %v1780
        %v1782 = vlaneseq
        %v1783 = vshrl.u32 %v1782, 7
        %v1784 = vsub.s32 %v1781, %v1783
        %v1785 = vrot.slane %v1061, %v1784
        %v1787 = vunpack.c.l.s4 1966171168
        %v1788 = vunpack.c.0.s8 %v1787
        %v1789 = vlaneseq
        %v1790 = vshrl.u32 %v1789, 7
        %v1791 = vsub.s32 %v1788, %v1790
        %v1792 = vrot.slane %v1778, %v1791
        %v1793 = vcombine.high %v1785, %v1785
        %v1794 = vcombine.high %v1792, %v1792
        %v1796 = vunpack.c.l.s4 1966171168
        %v1797 = vunpack.c.0.s8 %v1796
        %v1798 = vlaneseq
        %v1799 = vshrl.u32 %v1798, 7
        %v1800 = vsub.s32 %v1797, %v1799
        %v1801 = vrot.slane %v1785, %v1800
        %v1803 = vunpack.c.l.s4 1966171168
        %v1804 = vunpack.c.0.s8 %v1803
        %v1805 = vlaneseq
        %v1806 = vshrl.u32 %v1805, 7
        %v1807 = vsub.s32 %v1804, %v1806
        %v1808 = vrot.slane %v1792, %v1807
        %v1810 = vunpack.c.l.s4 1966171168
        %v1811 = vunpack.c.0.s8 %v1810
        %v1812 = vlaneseq
        %v1813 = vshrl.u32 %v1812, 7
        %v1814 = vsub.s32 %v1811, %v1813
        %v1815 = vrot.slane %v1793, %v1814
        %v1817 = vunpack.c.l.s4 1966171168
        %v1818 = vunpack.c.0.s8 %v1817
        %v1819 = vlaneseq
        %v1820 = vshrl.u32 %v1819, 7
        %v1821 = vsub.s32 %v1818, %v1820
        %v1822 = vrot.slane %v1794, %v1821
        %v1823 = vcombine.high %v1801, %v1801
        %v1824 = vcombine.high %v1808, %v1808
        %v1825 = vcombine.high %v1815, %v1815
        %v1826 = vcombine.high %v1822, %v1822
        %v1827 = vunpack.i.l.s16 %v1752
        %v1828 = vunpack.i.h.s16 %v1752
        %v1829 = vunpack.i.l.s16 %v1766
        %v1830 = vunpack.i.h.s16 %v1766
        %v1831 = vunpack.i.l.s16 %v1774
        %v1832 = vunpack.i.h.s16 %v1774
        %v1833 = vunpack.i.l.s16 %v1776
        %v1834 = vunpack.i.h.s16 %v1776
        %v1835 = vunpack.i.l.s16 %v1759
        %v1836 = vunpack.i.h.s16 %v1759
        %v1837 = vunpack.i.l.s16 %v1773
        %v1838 = vunpack.i.h.s16 %v1773
        %v1839 = vunpack.i.l.s16 %v1775
        %v1840 = vunpack.i.h.s16 %v1775
        %v1841 = vunpack.i.l.s16 %v1777
        %v1842 = vunpack.i.h.s16 %v1777
        %v1843 = vunpack.i.l.s16 %v1801
        %v1844 = vunpack.i.h.s16 %v1801
        %v1845 = vunpack.i.l.s16 %v1815
        %v1846 = vunpack.i.h.s16 %v1815
        %v1847 = vunpack.i.l.s16 %v1823
        %v1848 = vunpack.i.h.s16 %v1823
        %v1849 = vunpack.i.l.s16 %v1825
        %v1850 = vunpack.i.h.s16 %v1825
        %v1851 = vunpack.i.l.s16 %v1808
        %v1852 = vunpack.i.h.s16 %v1808
        %v1853 = vunpack.i.l.s16 %v1822
        %v1854 = vunpack.i.h.s16 %v1822
        %v1855 = vunpack.i.l.s16 %v1824
        %v1856 = vunpack.i.h.s16 %v1824
        %v1857 = vunpack.i.l.s16 %v1826
        %v1858 = vunpack.i.h.s16 %v1826
        %v1861 = vcombine.high %v1097, %v1097
        %v1863 = vunpack.c.l.s4 1966171168
        %v1864 = vunpack.c.0.s8 %v1863
        %v1865 = vlaneseq
        %v1866 = vshrl.u32 %v1865, 7
        %v1867 = vsub.s32 %v1864, %v1866
        %v1868 = vrot.slane %v1097, %v1867
        %v1870 = vunpack.c.l.s4 1966171168
        %v1871 = vunpack.c.0.s8 %v1870
        %v1872 = vlaneseq
        %v1873 = vshrl.u32 %v1872, 7
        %v1874 = vsub.s32 %v1871, %v1873
        %v1875 = vrot.slane %v1861, %v1874
        %v1876 = vcombine.high %v1868, %v1868
        %v1877 = vcombine.high %v1875, %v1875
        %v1879 = vunpack.c.l.s4 1966171168
        %v1880 = vunpack.c.0.s8 %v1879
        %v1881 = vlaneseq
        %v1882 = vshrl.u32 %v1881, 7
        %v1883 = vsub.s32 %v1880, %v1882
        %v1884 = vrot.slane %v1868, %v1883
        %v1886 = vunpack.c.l.s4 1966171168
        %v1887 = vunpack.c.0.s8 %v1886
        %v1888 = vlaneseq
        %v1889 = vshrl.u32 %v1888, 7
        %v1890 = vsub.s32 %v1887, %v1889
        %v1891 = vrot.slane %v1875, %v1890
        %v1893 = vunpack.c.l.s4 1966171168
        %v1894 = vunpack.c.0.s8 %v1893
        %v1895 = vlaneseq
        %v1896 = vshrl.u32 %v1895, 7
        %v1897 = vsub.s32 %v1894, %v1896
        %v1898 = vrot.slane %v1876, %v1897
        %v1900 = vunpack.c.l.s4 1966171168
        %v1901 = vunpack.c.0.s8 %v1900
        %v1902 = vlaneseq
        %v1903 = vshrl.u32 %v1902, 7
        %v1904 = vsub.s32 %v1901, %v1903
        %v1905 = vrot.slane %v1877, %v1904
        %v1906 = vcombine.high %v1884, %v1884
        %v1907 = vcombine.high %v1891, %v1891
        %v1908 = vcombine.high %v1898, %v1898
        %v1909 = vcombine.high %v1905, %v1905
        %v1910 = vcombine.high %v1098, %v1098
        %v1912 = vunpack.c.l.s4 1966171168
        %v1913 = vunpack.c.0.s8 %v1912
        %v1914 = vlaneseq
        %v1915 = vshrl.u32 %v1914, 7
        %v1916 = vsub.s32 %v1913, %v1915
        %v1917 = vrot.slane %v1098, %v1916
        %v1919 = vunpack.c.l.s4 1966171168
        %v1920 = vunpack.c.0.s8 %v1919
        %v1921 = vlaneseq
        %v1922 = vshrl.u32 %v1921, 7
        %v1923 = vsub.s32 %v1920, %v1922
        %v1924 = vrot.slane %v1910, %v1923
        %v1925 = vcombine.high %v1917, %v1917
        %v1926 = vcombine.high %v1924, %v1924
        %v1928 = vunpack.c.l.s4 1966171168
        %v1929 = vunpack.c.0.s8 %v1928
        %v1930 = vlaneseq
        %v1931 = vshrl.u32 %v1930, 7
        %v1932 = vsub.s32 %v1929, %v1931
        %v1933 = vrot.slane %v1917, %v1932
        %v1935 = vunpack.c.l.s4 1966171168
        %v1936 = vunpack.c.0.s8 %v1935
        %v1937 = vlaneseq
        %v1938 = vshrl.u32 %v1937, 7
        %v1939 = vsub.s32 %v1936, %v1938
        %v1940 = vrot.slane %v1924, %v1939
        %v1942 = vunpack.c.l.s4 1966171168
        %v1943 = vunpack.c.0.s8 %v1942
        %v1944 = vlaneseq
        %v1945 = vshrl.u32 %v1944, 7
        %v1946 = vsub.s32 %v1943, %v1945
        %v1947 = vrot.slane %v1925, %v1946
        %v1949 = vunpack.c.l.s4 1966171168
        %v1950 = vunpack.c.0.s8 %v1949
        %v1951 = vlaneseq
        %v1952 = vshrl.u32 %v1951, 7
        %v1953 = vsub.s32 %v1950, %v1952
        %v1954 = vrot.slane %v1926, %v1953
        %v1955 = vcombine.high %v1933, %v1933
        %v1956 = vcombine.high %v1940, %v1940
        %v1957 = vcombine.high %v1947, %v1947
        %v1958 = vcombine.high %v1954, %v1954
        %v1959 = vunpack.i.l.s16 %v1884
        %v1960 = vunpack.i.h.s16 %v1884
        %v1961 = vunpack.i.l.s16 %v1898
        %v1962 = vunpack.i.h.s16 %v1898
        %v1963 = vunpack.i.l.s16 %v1906
        %v1964 = vunpack.i.h.s16 %v1906
        %v1965 = vunpack.i.l.s16 %v1908
        %v1966 = vunpack.i.h.s16 %v1908
        %v1967 = vunpack.i.l.s16 %v1891
        %v1968 = vunpack.i.h.s16 %v1891
        %v1969 = vunpack.i.l.s16 %v1905
        %v1970 = vunpack.i.h.s16 %v1905
        %v1971 = vunpack.i.l.s16 %v1907
        %v1972 = vunpack.i.h.s16 %v1907
        %v1973 = vunpack.i.l.s16 %v1909
        %v1974 = vunpack.i.h.s16 %v1909
        %v1975 = vunpack.i.l.s16 %v1933
        %v1976 = vunpack.i.h.s16 %v1933
        %v1977 = vunpack.i.l.s16 %v1947
        %v1978 = vunpack.i.h.s16 %v1947
        %v1979 = vunpack.i.l.s16 %v1955
        %v1980 = vunpack.i.h.s16 %v1955
        %v1981 = vunpack.i.l.s16 %v1957
        %v1982 = vunpack.i.h.s16 %v1957
        %v1983 = vunpack.i.l.s16 %v1940
        %v1984 = vunpack.i.h.s16 %v1940
        %v1985 = vunpack.i.l.s16 %v1954
        %v1986 = vunpack.i.h.s16 %v1954
        %v1987 = vunpack.i.l.s16 %v1956
        %v1988 = vunpack.i.h.s16 %v1956
        %v1989 = vunpack.i.l.s16 %v1958
        %v1990 = vunpack.i.h.s16 %v1958
        %v1993 = vcombine.high %v1134, %v1134
        %v1995 = vunpack.c.l.s4 1966171168
        %v1996 = vunpack.c.0.s8 %v1995
        %v1997 = vlaneseq
        %v1998 = vshrl.u32 %v1997, 7
        %v1999 = vsub.s32 %v1996, %v1998
        %v2000 = vrot.slane %v1134, %v1999
        %v2002 = vunpack.c.l.s4 1966171168
        %v2003 = vunpack.c.0.s8 %v2002
        %v2004 = vlaneseq
        %v2005 = vshrl.u32 %v2004, 7
        %v2006 = vsub.s32 %v2003, %v2005
        %v2007 = vrot.slane %v1993, %v2006
        %v2008 = vcombine.high %v2000, %v2000
        %v2009 = vcombine.high %v2007, %v2007
        %v2011 = vunpack.c.l.s4 1966171168
        %v2012 = vunpack.c.0.s8 %v2011
        %v2013 = vlaneseq
        %v2014 = vshrl.u32 %v2013, 7
        %v2015 = vsub.s32 %v2012, %v2014
        %v2016 = vrot.slane %v2000, %v2015
        %v2018 = vunpack.c.l.s4 1966171168
        %v2019 = vunpack.c.0.s8 %v2018
        %v2020 = vlaneseq
        %v2021 = vshrl.u32 %v2020, 7
        %v2022 = vsub.s32 %v2019, %v2021
        %v2023 = vrot.slane %v2007, %v2022
        %v2025 = vunpack.c.l.s4 1966171168
        %v2026 = vunpack.c.0.s8 %v2025
        %v2027 = vlaneseq
        %v2028 = vshrl.u32 %v2027, 7
        %v2029 = vsub.s32 %v2026, %v2028
        %v2030 = vrot.slane %v2008, %v2029
        %v2032 = vunpack.c.l.s4 1966171168
        %v2033 = vunpack.c.0.s8 %v2032
        %v2034 = vlaneseq
        %v2035 = vshrl.u32 %v2034, 7
        %v2036 = vsub.s32 %v2033, %v2035
        %v2037 = vrot.slane %v2009, %v2036
        %v2038 = vcombine.high %v2016, %v2016
        %v2039 = vcombine.high %v2023, %v2023
        %v2040 = vcombine.high %v2030, %v2030
        %v2041 = vcombine.high %v2037, %v2037
        %v2042 = vcombine.high %v1135, %v1135
        %v2044 = vunpack.c.l.s4 1966171168
        %v2045 = vunpack.c.0.s8 %v2044
        %v2046 = vlaneseq
        %v2047 = vshrl.u32 %v2046, 7
        %v2048 = vsub.s32 %v2045, %v2047
        %v2049 = vrot.slane %v1135, %v2048
        %v2051 = vunpack.c.l.s4 1966171168
        %v2052 = vunpack.c.0.s8 %v2051
        %v2053 = vlaneseq
        %v2054 = vshrl.u32 %v2053, 7
        %v2055 = vsub.s32 %v2052, %v2054
        %v2056 = vrot.slane %v2042, %v2055
        %v2057 = vcombine.high %v2049, %v2049
        %v2058 = vcombine.high %v2056, %v2056
        %v2060 = vunpack.c.l.s4 1966171168
        %v2061 = vunpack.c.0.s8 %v2060
        %v2062 = vlaneseq
        %v2063 = vshrl.u32 %v2062, 7
        %v2064 = vsub.s32 %v2061, %v2063
        %v2065 = vrot.slane %v2049, %v2064
        %v2067 = vunpack.c.l.s4 1966171168
        %v2068 = vunpack.c.0.s8 %v2067
        %v2069 = vlaneseq
        %v2070 = vshrl.u32 %v2069, 7
        %v2071 = vsub.s32 %v2068, %v2070
        %v2072 = vrot.slane %v2056, %v2071
        %v2074 = vunpack.c.l.s4 1966171168
        %v2075 = vunpack.c.0.s8 %v2074
        %v2076 = vlaneseq
        %v2077 = vshrl.u32 %v2076, 7
        %v2078 = vsub.s32 %v2075, %v2077
        %v2079 = vrot.slane %v2057, %v2078
        %v2081 = vunpack.c.l.s4 1966171168
        %v2082 = vunpack.c.0.s8 %v2081
        %v2083 = vlaneseq
        %v2084 = vshrl.u32 %v2083, 7
        %v2085 = vsub.s32 %v2082, %v2084
        %v2086 = vrot.slane %v2058, %v2085
        %v2087 = vcombine.high %v2065, %v2065
        %v2088 = vcombine.high %v2072, %v2072
        %v2089 = vcombine.high %v2079, %v2079
        %v2090 = vcombine.high %v2086, %v2086
        %v2091 = vunpack.i.l.s16 %v2016
        %v2092 = vunpack.i.h.s16 %v2016
        %v2093 = vunpack.i.l.s16 %v2030
        %v2094 = vunpack.i.h.s16 %v2030
        %v2095 = vunpack.i.l.s16 %v2038
        %v2096 = vunpack.i.h.s16 %v2038
        %v2097 = vunpack.i.l.s16 %v2040
        %v2098 = vunpack.i.h.s16 %v2040
        %v2099 = vunpack.i.l.s16 %v2023
        %v2100 = vunpack.i.h.s16 %v2023
        %v2101 = vunpack.i.l.s16 %v2037
        %v2102 = vunpack.i.h.s16 %v2037
        %v2103 = vunpack.i.l.s16 %v2039
        %v2104 = vunpack.i.h.s16 %v2039
        %v2105 = vunpack.i.l.s16 %v2041
        %v2106 = vunpack.i.h.s16 %v2041
        %v2107 = vunpack.i.l.s16 %v2065
        %v2108 = vunpack.i.h.s16 %v2065
        %v2109 = vunpack.i.l.s16 %v2079
        %v2110 = vunpack.i.h.s16 %v2079
        %v2111 = vunpack.i.l.s16 %v2087
        %v2112 = vunpack.i.h.s16 %v2087
        %v2113 = vunpack.i.l.s16 %v2089
        %v2114 = vunpack.i.h.s16 %v2089
        %v2115 = vunpack.i.l.s16 %v2072
        %v2116 = vunpack.i.h.s16 %v2072
        %v2117 = vunpack.i.l.s16 %v2086
        %v2118 = vunpack.i.h.s16 %v2086
        %v2119 = vunpack.i.l.s16 %v2088
        %v2120 = vunpack.i.h.s16 %v2088
        %v2121 = vunpack.i.l.s16 %v2090
        %v2122 = vunpack.i.h.s16 %v2090
        %v2125 = vcombine.high %v1171, %v1171
        %v2127 = vunpack.c.l.s4 1966171168
        %v2128 = vunpack.c.0.s8 %v2127
        %v2129 = vlaneseq
        %v2130 = vshrl.u32 %v2129, 7
        %v2131 = vsub.s32 %v2128, %v2130
        %v2132 = vrot.slane %v1171, %v2131
        %v2134 = vunpack.c.l.s4 1966171168
        %v2135 = vunpack.c.0.s8 %v2134
        %v2136 = vlaneseq
        %v2137 = vshrl.u32 %v2136, 7
        %v2138 = vsub.s32 %v2135, %v2137
        %v2139 = vrot.slane %v2125, %v2138
        %v2140 = vcombine.high %v2132, %v2132
        %v2141 = vcombine.high %v2139, %v2139
        %v2143 = vunpack.c.l.s4 1966171168
        %v2144 = vunpack.c.0.s8 %v2143
        %v2145 = vlaneseq
        %v2146 = vshrl.u32 %v2145, 7
        %v2147 = vsub.s32 %v2144, %v2146
        %v2148 = vrot.slane %v2132, %v2147
        %v2150 = vunpack.c.l.s4 1966171168
        %v2151 = vunpack.c.0.s8 %v2150
        %v2152 = vlaneseq
        %v2153 = vshrl.u32 %v2152, 7
        %v2154 = vsub.s32 %v2151, %v2153
        %v2155 = vrot.slane %v2139, %v2154
        %v2157 = vunpack.c.l.s4 1966171168
        %v2158 = vunpack.c.0.s8 %v2157
        %v2159 = vlaneseq
        %v2160 = vshrl.u32 %v2159, 7
        %v2161 = vsub.s32 %v2158, %v2160
        %v2162 = vrot.slane %v2140, %v2161
        %v2164 = vunpack.c.l.s4 1966171168
        %v2165 = vunpack.c.0.s8 %v2164
        %v2166 = vlaneseq
        %v2167 = vshrl.u32 %v2166, 7
        %v2168 = vsub.s32 %v2165, %v2167
        %v2169 = vrot.slane %v2141, %v2168
        %v2170 = vcombine.high %v2148, %v2148
        %v2171 = vcombine.high %v2155, %v2155
        %v2172 = vcombine.high %v2162, %v2162
        %v2173 = vcombine.high %v2169, %v2169
        %v2174 = vcombine.high %v1172, %v1172
        %v2176 = vunpack.c.l.s4 1966171168
        %v2177 = vunpack.c.0.s8 %v2176
        %v2178 = vlaneseq
        %v2179 = vshrl.u32 %v2178, 7
        %v2180 = vsub.s32 %v2177, %v2179
        %v2181 = vrot.slane %v1172, %v2180
        %v2183 = vunpack.c.l.s4 1966171168
        %v2184 = vunpack.c.0.s8 %v2183
        %v2185 = vlaneseq
        %v2186 = vshrl.u32 %v2185, 7
        %v2187 = vsub.s32 %v2184, %v2186
        %v2188 = vrot.slane %v2174, %v2187
        %v2189 = vcombine.high %v2181, %v2181
        %v2190 = vcombine.high %v2188, %v2188
        %v2192 = vunpack.c.l.s4 1966171168
        %v2193 = vunpack.c.0.s8 %v2192
        %v2194 = vlaneseq
        %v2195 = vshrl.u32 %v2194, 7
        %v2196 = vsub.s32 %v2193, %v2195
        %v2197 = vrot.slane %v2181, %v2196
        %v2199 = vunpack.c.l.s4 1966171168
        %v2200 = vunpack.c.0.s8 %v2199
        %v2201 = vlaneseq
        %v2202 = vshrl.u32 %v2201, 7
        %v2203 = vsub.s32 %v2200, %v2202
        %v2204 = vrot.slane %v2188, %v2203
        %v2206 = vunpack.c.l.s4 1966171168
        %v2207 = vunpack.c.0.s8 %v2206
        %v2208 = vlaneseq
        %v2209 = vshrl.u32 %v2208, 7
        %v2210 = vsub.s32 %v2207, %v2209
        %v2211 = vrot.slane %v2189, %v2210
        %v2213 = vunpack.c.l.s4 1966171168
        %v2214 = vunpack.c.0.s8 %v2213
        %v2215 = vlaneseq
        %v2216 = vshrl.u32 %v2215, 7
        %v2217 = vsub.s32 %v2214, %v2216
        %v2218 = vrot.slane %v2190, %v2217
        %v2219 = vcombine.high %v2197, %v2197
        %v2220 = vcombine.high %v2204, %v2204
        %v2221 = vcombine.high %v2211, %v2211
        %v2222 = vcombine.high %v2218, %v2218
        %v2223 = vunpack.i.l.s16 %v2148
        %v2224 = vunpack.i.h.s16 %v2148
        %v2225 = vunpack.i.l.s16 %v2162
        %v2226 = vunpack.i.h.s16 %v2162
        %v2227 = vunpack.i.l.s16 %v2170
        %v2228 = vunpack.i.h.s16 %v2170
        %v2229 = vunpack.i.l.s16 %v2172
        %v2230 = vunpack.i.h.s16 %v2172
        %v2231 = vunpack.i.l.s16 %v2155
        %v2232 = vunpack.i.h.s16 %v2155
        %v2233 = vunpack.i.l.s16 %v2169
        %v2234 = vunpack.i.h.s16 %v2169
        %v2235 = vunpack.i.l.s16 %v2171
        %v2236 = vunpack.i.h.s16 %v2171
        %v2237 = vunpack.i.l.s16 %v2173
        %v2238 = vunpack.i.h.s16 %v2173
        %v2239 = vunpack.i.l.s16 %v2197
        %v2240 = vunpack.i.h.s16 %v2197
        %v2241 = vunpack.i.l.s16 %v2211
        %v2242 = vunpack.i.h.s16 %v2211
        %v2243 = vunpack.i.l.s16 %v2219
        %v2244 = vunpack.i.h.s16 %v2219
        %v2245 = vunpack.i.l.s16 %v2221
        %v2246 = vunpack.i.h.s16 %v2221
        %v2247 = vunpack.i.l.s16 %v2204
        %v2248 = vunpack.i.h.s16 %v2204
        %v2249 = vunpack.i.l.s16 %v2218
        %v2250 = vunpack.i.h.s16 %v2218
        %v2251 = vunpack.i.l.s16 %v2220
        %v2252 = vunpack.i.h.s16 %v2220
        %v2253 = vunpack.i.l.s16 %v2222
        %v2254 = vunpack.i.h.s16 %v2222
        %v2255 = vpack.i.b16 %v1299, %v1299
        %v2256 = vpack.i.b16 %v1300, %v1300
        %v2257 = vpack.i.b16 %v1301, %v1301
        %v2258 = vpack.i.b16 %v1302, %v1302
        %v2259 = vpack.i.b16 %v1303, %v1303
        %v2260 = vpack.i.b16 %v1304, %v1304
        %v2261 = vpack.i.b16 %v1305, %v1305
        %v2262 = vpack.i.b16 %v1306, %v1306
        %v2263 = vpack.i.b16 %v1307, %v1307
        %v2264 = vpack.i.b16 %v1308, %v1308
        %v2265 = vpack.i.b16 %v1309, %v1309
        %v2266 = vpack.i.b16 %v1310, %v1310
        %v2267 = vpack.i.b16 %v1311, %v1311
        %v2268 = vpack.i.b16 %v1312, %v1312
        %v2269 = vpack.i.b16 %v1313, %v1313
        %v2270 = vpack.i.b16 %v1314, %v1314
        %v2271 = vpack.i.b16 %v1315, %v1315
        %v2272 = vpack.i.b16 %v1316, %v1316
        %v2273 = vpack.i.b16 %v1317, %v1317
        %v2274 = vpack.i.b16 %v1318, %v1318
        %v2275 = vpack.i.b16 %v1319, %v1319
        %v2276 = vpack.i.b16 %v1320, %v1320
        %v2277 = vpack.i.b16 %v1321, %v1321
        %v2278 = vpack.i.b16 %v1322, %v1322
        %v2279 = vpack.i.b16 %v1323, %v1323
        %v2280 = vpack.i.b16 %v1324, %v1324
        %v2281 = vpack.i.b16 %v1325, %v1325
        %v2282 = vpack.i.b16 %v1326, %v1326
        %v2283 = vpack.i.b16 %v1327, %v1327
        %v2284 = vpack.i.b16 %v1328, %v1328
        %v2285 = vpack.i.b16 %v1329, %v1329
        %v2286 = vpack.i.b16 %v1330, %v1330
        %v2287 = vlaneseq
        %v2288 = vshrl.u32 %v2287, 7
        %v2289 = vsub.s32 0, %v2288
        %v2290 = vrot.slane %v2255, %v2289
        %v2291 = vlaneseq
        %v2292 = vshrl.u32 %v2291, 7
        %v2293 = vsub.s32 0, %v2292
        %v2294 = vrot.slane %v2256, %v2293
        %v2295 = vlaneseq
        %v2296 = vshrl.u32 %v2295, 7
        %v2297 = vsub.s32 0, %v2296
        %v2298 = vrot.slane %v2257, %v2297
        %v2299 = vlaneseq
        %v2300 = vshrl.u32 %v2299, 7
        %v2301 = vsub.s32 0, %v2300
        %v2302 = vrot.slane %v2258, %v2301
        %v2303 = vlaneseq
        %v2304 = vshrl.u32 %v2303, 7
        %v2305 = vsub.s32 0, %v2304
        %v2306 = vrot.slane %v2259, %v2305
        %v2307 = vlaneseq
        %v2308 = vshrl.u32 %v2307, 7
        %v2309 = vsub.s32 0, %v2308
        %v2310 = vrot.slane %v2260, %v2309
        %v2311 = vlaneseq
        %v2312 = vshrl.u32 %v2311, 7
        %v2313 = vsub.s32 0, %v2312
        %v2314 = vrot.slane %v2261, %v2313
        %v2315 = vlaneseq
        %v2316 = vshrl.u32 %v2315, 7
        %v2317 = vsub.s32 0, %v2316
        %v2318 = vrot.slane %v2262, %v2317
        %v2319 = vlaneseq
        %v2320 = vshrl.u32 %v2319, 7
        %v2321 = vsub.s32 0, %v2320
        %v2322 = vrot.slane %v2263, %v2321
        %v2323 = vlaneseq
        %v2324 = vshrl.u32 %v2323, 7
        %v2325 = vsub.s32 0, %v2324
        %v2326 = vrot.slane %v2264, %v2325
        %v2327 = vlaneseq
        %v2328 = vshrl.u32 %v2327, 7
        %v2329 = vsub.s32 0, %v2328
        %v2330 = vrot.slane %v2265, %v2329
        %v2331 = vlaneseq
        %v2332 = vshrl.u32 %v2331, 7
        %v2333 = vsub.s32 0, %v2332
        %v2334 = vrot.slane %v2266, %v2333
        %v2335 = vlaneseq
        %v2336 = vshrl.u32 %v2335, 7
        %v2337 = vsub.s32 0, %v2336
        %v2338 = vrot.slane %v2267, %v2337
        %v2339 = vlaneseq
        %v2340 = vshrl.u32 %v2339, 7
        %v2341 = vsub.s32 0, %v2340
        %v2342 = vrot.slane %v2268, %v2341
        %v2343 = vlaneseq
        %v2344 = vshrl.u32 %v2343, 7
        %v2345 = vsub.s32 0, %v2344
        %v2346 = vrot.slane %v2269, %v2345
        %v2347 = vlaneseq
        %v2348 = vshrl.u32 %v2347, 7
        %v2349 = vsub.s32 0, %v2348
        %v2350 = vrot.slane %v2270, %v2349
        %v2351 = vlaneseq
        %v2352 = vshrl.u32 %v2351, 7
        %v2353 = vsub.s32 0, %v2352
        %v2354 = vrot.slane %v2271, %v2353
        %v2355 = vlaneseq
        %v2356 = vshrl.u32 %v2355, 7
        %v2357 = vsub.s32 0, %v2356
        %v2358 = vrot.slane %v2272, %v2357
        %v2359 = vlaneseq
        %v2360 = vshrl.u32 %v2359, 7
        %v2361 = vsub.s32 0, %v2360
        %v2362 = vrot.slane %v2273, %v2361
        %v2363 = vlaneseq
        %v2364 = vshrl.u32 %v2363, 7
        %v2365 = vsub.s32 0, %v2364
        %v2366 = vrot.slane %v2274, %v2365
        %v2367 = vlaneseq
        %v2368 = vshrl.u32 %v2367, 7
        %v2369 = vsub.s32 0, %v2368
        %v2370 = vrot.slane %v2275, %v2369
        %v2371 = vlaneseq
        %v2372 = vshrl.u32 %v2371, 7
        %v2373 = vsub.s32 0, %v2372
        %v2374 = vrot.slane %v2276, %v2373
        %v2375 = vlaneseq
        %v2376 = vshrl.u32 %v2375, 7
        %v2377 = vsub.s32 0, %v2376
        %v2378 = vrot.slane %v2277, %v2377
        %v2379 = vlaneseq
        %v2380 = vshrl.u32 %v2379, 7
        %v2381 = vsub.s32 0, %v2380
        %v2382 = vrot.slane %v2278, %v2381
        %v2383 = vlaneseq
        %v2384 = vshrl.u32 %v2383, 7
        %v2385 = vsub.s32 0, %v2384
        %v2386 = vrot.slane %v2279, %v2385
        %v2387 = vlaneseq
        %v2388 = vshrl.u32 %v2387, 7
        %v2389 = vsub.s32 0, %v2388
        %v2390 = vrot.slane %v2280, %v2389
        %v2391 = vlaneseq
        %v2392 = vshrl.u32 %v2391, 7
        %v2393 = vsub.s32 0, %v2392
        %v2394 = vrot.slane %v2281, %v2393
        %v2395 = vlaneseq
        %v2396 = vshrl.u32 %v2395, 7
        %v2397 = vsub.s32 0, %v2396
        %v2398 = vrot.slane %v2282, %v2397
        %v2399 = vlaneseq
        %v2400 = vshrl.u32 %v2399, 7
        %v2401 = vsub.s32 0, %v2400
        %v2402 = vrot.slane %v2283, %v2401
        %v2403 = vlaneseq
        %v2404 = vshrl.u32 %v2403, 7
        %v2405 = vsub.s32 0, %v2404
        %v2406 = vrot.slane %v2284, %v2405
        %v2407 = vlaneseq
        %v2408 = vshrl.u32 %v2407, 7
        %v2409 = vsub.s32 0, %v2408
        %v2410 = vrot.slane %v2285, %v2409
        %v2411 = vlaneseq
        %v2412 = vshrl.u32 %v2411, 7
        %v2413 = vsub.s32 0, %v2412
        %v2414 = vrot.slane %v2286, %v2413
        %v2447 = vpack.i.b16 %v1431, %v1431
        %v2448 = vpack.i.b16 %v1432, %v1432
        %v2449 = vpack.i.b16 %v1433, %v1433
        %v2450 = vpack.i.b16 %v1434, %v1434
        %v2451 = vpack.i.b16 %v1435, %v1435
        %v2452 = vpack.i.b16 %v1436, %v1436
        %v2453 = vpack.i.b16 %v1437, %v1437
        %v2454 = vpack.i.b16 %v1438, %v1438
        %v2455 = vpack.i.b16 %v1439, %v1439
        %v2456 = vpack.i.b16 %v1440, %v1440
        %v2457 = vpack.i.b16 %v1441, %v1441
        %v2458 = vpack.i.b16 %v1442, %v1442
        %v2459 = vpack.i.b16 %v1443, %v1443
        %v2460 = vpack.i.b16 %v1444, %v1444
        %v2461 = vpack.i.b16 %v1445, %v1445
        %v2462 = vpack.i.b16 %v1446, %v1446
        %v2463 = vpack.i.b16 %v1447, %v1447
        %v2464 = vpack.i.b16 %v1448, %v1448
        %v2465 = vpack.i.b16 %v1449, %v1449
        %v2466 = vpack.i.b16 %v1450, %v1450
        %v2467 = vpack.i.b16 %v1451, %v1451
        %v2468 = vpack.i.b16 %v1452, %v1452
        %v2469 = vpack.i.b16 %v1453, %v1453
        %v2470 = vpack.i.b16 %v1454, %v1454
        %v2471 = vpack.i.b16 %v1455, %v1455
        %v2472 = vpack.i.b16 %v1456, %v1456
        %v2473 = vpack.i.b16 %v1457, %v1457
        %v2474 = vpack.i.b16 %v1458, %v1458
        %v2475 = vpack.i.b16 %v1459, %v1459
        %v2476 = vpack.i.b16 %v1460, %v1460
        %v2477 = vpack.i.b16 %v1461, %v1461
        %v2478 = vpack.i.b16 %v1462, %v1462
        %v2479 = vlaneseq
        %v2480 = vshrl.u32 %v2479, 7
        %v2481 = vsub.s32 0, %v2480
        %v2482 = vrot.slane %v2447, %v2481
        %v2483 = vlaneseq
        %v2484 = vshrl.u32 %v2483, 7
        %v2485 = vsub.s32 0, %v2484
        %v2486 = vrot.slane %v2448, %v2485
        %v2487 = vlaneseq
        %v2488 = vshrl.u32 %v2487, 7
        %v2489 = vsub.s32 0, %v2488
        %v2490 = vrot.slane %v2449, %v2489
        %v2491 = vlaneseq
        %v2492 = vshrl.u32 %v2491, 7
        %v2493 = vsub.s32 0, %v2492
        %v2494 = vrot.slane %v2450, %v2493
        %v2495 = vlaneseq
        %v2496 = vshrl.u32 %v2495, 7
        %v2497 = vsub.s32 0, %v2496
        %v2498 = vrot.slane %v2451, %v2497
        %v2499 = vlaneseq
        %v2500 = vshrl.u32 %v2499, 7
        %v2501 = vsub.s32 0, %v2500
        %v2502 = vrot.slane %v2452, %v2501
        %v2503 = vlaneseq
        %v2504 = vshrl.u32 %v2503, 7
        %v2505 = vsub.s32 0, %v2504
        %v2506 = vrot.slane %v2453, %v2505
        %v2507 = vlaneseq
        %v2508 = vshrl.u32 %v2507, 7
        %v2509 = vsub.s32 0, %v2508
        %v2510 = vrot.slane %v2454, %v2509
        %v2511 = vlaneseq
        %v2512 = vshrl.u32 %v2511, 7
        %v2513 = vsub.s32 0, %v2512
        %v2514 = vrot.slane %v2455, %v2513
        %v2515 = vlaneseq
        %v2516 = vshrl.u32 %v2515, 7
        %v2517 = vsub.s32 0, %v2516
        %v2518 = vrot.slane %v2456, %v2517
        %v2519 = vlaneseq
        %v2520 = vshrl.u32 %v2519, 7
        %v2521 = vsub.s32 0, %v2520
        %v2522 = vrot.slane %v2457, %v2521
        %v2523 = vlaneseq
        %v2524 = vshrl.u32 %v2523, 7
        %v2525 = vsub.s32 0, %v2524
        %v2526 = vrot.slane %v2458, %v2525
        %v2527 = vlaneseq
        %v2528 = vshrl.u32 %v2527, 7
        %v2529 = vsub.s32 0, %v2528
        %v2530 = vrot.slane %v2459, %v2529
        %v2531 = vlaneseq
        %v2532 = vshrl.u32 %v2531, 7
        %v2533 = vsub.s32 0, %v2532
        %v2534 = vrot.slane %v2460, %v2533
        %v2535 = vlaneseq
        %v2536 = vshrl.u32 %v2535, 7
        %v2537 = vsub.s32 0, %v2536
        %v2538 = vrot.slane %v2461, %v2537
        %v2539 = vlaneseq
        %v2540 = vshrl.u32 %v2539, 7
        %v2541 = vsub.s32 0, %v2540
        %v2542 = vrot.slane %v2462, %v2541
        %v2543 = vlaneseq
        %v2544 = vshrl.u32 %v2543, 7
        %v2545 = vsub.s32 0, %v2544
        %v2546 = vrot.slane %v2463, %v2545
        %v2547 = vlaneseq
        %v2548 = vshrl.u32 %v2547, 7
        %v2549 = vsub.s32 0, %v2548
        %v2550 = vrot.slane %v2464, %v2549
        %v2551 = vlaneseq
        %v2552 = vshrl.u32 %v2551, 7
        %v2553 = vsub.s32 0, %v2552
        %v2554 = vrot.slane %v2465, %v2553
        %v2555 = vlaneseq
        %v2556 = vshrl.u32 %v2555, 7
        %v2557 = vsub.s32 0, %v2556
        %v2558 = vrot.slane %v2466, %v2557
        %v2559 = vlaneseq
        %v2560 = vshrl.u32 %v2559, 7
        %v2561 = vsub.s32 0, %v2560
        %v2562 = vrot.slane %v2467, %v2561
        %v2563 = vlaneseq
        %v2564 = vshrl.u32 %v2563, 7
        %v2565 = vsub.s32 0, %v2564
        %v2566 = vrot.slane %v2468, %v2565
        %v2567 = vlaneseq
        %v2568 = vshrl.u32 %v2567, 7
        %v2569 = vsub.s32 0, %v2568
        %v2570 = vrot.slane %v2469, %v2569
        %v2571 = vlaneseq
        %v2572 = vshrl.u32 %v2571, 7
        %v2573 = vsub.s32 0, %v2572
        %v2574 = vrot.slane %v2470, %v2573
        %v2575 = vlaneseq
        %v2576 = vshrl.u32 %v2575, 7
        %v2577 = vsub.s32 0, %v2576
        %v2578 = vrot.slane %v2471, %v2577
        %v2579 = vlaneseq
        %v2580 = vshrl.u32 %v2579, 7
        %v2581 = vsub.s32 0, %v2580
        %v2582 = vrot.slane %v2472, %v2581
        %v2583 = vlaneseq
        %v2584 = vshrl.u32 %v2583, 7
        %v2585 = vsub.s32 0, %v2584
        %v2586 = vrot.slane %v2473, %v2585
        %v2587 = vlaneseq
        %v2588 = vshrl.u32 %v2587, 7
        %v2589 = vsub.s32 0, %v2588
        %v2590 = vrot.slane %v2474, %v2589
        %v2591 = vlaneseq
        %v2592 = vshrl.u32 %v2591, 7
        %v2593 = vsub.s32 0, %v2592
        %v2594 = vrot.slane %v2475, %v2593
        %v2595 = vlaneseq
        %v2596 = vshrl.u32 %v2595, 7
        %v2597 = vsub.s32 0, %v2596
        %v2598 = vrot.slane %v2476, %v2597
        %v2599 = vlaneseq
        %v2600 = vshrl.u32 %v2599, 7
        %v2601 = vsub.s32 0, %v2600
        %v2602 = vrot.slane %v2477, %v2601
        %v2603 = vlaneseq
        %v2604 = vshrl.u32 %v2603, 7
        %v2605 = vsub.s32 0, %v2604
        %v2606 = vrot.slane %v2478, %v2605
        %v2639 = vpack.i.b16 %v1563, %v1563
        %v2640 = vpack.i.b16 %v1564, %v1564
        %v2641 = vpack.i.b16 %v1565, %v1565
        %v2642 = vpack.i.b16 %v1566, %v1566
        %v2643 = vpack.i.b16 %v1567, %v1567
        %v2644 = vpack.i.b16 %v1568, %v1568
        %v2645 = vpack.i.b16 %v1569, %v1569
        %v2646 = vpack.i.b16 %v1570, %v1570
        %v2647 = vpack.i.b16 %v1571, %v1571
        %v2648 = vpack.i.b16 %v1572, %v1572
        %v2649 = vpack.i.b16 %v1573, %v1573
        %v2650 = vpack.i.b16 %v1574, %v1574
        %v2651 = vpack.i.b16 %v1575, %v1575
        %v2652 = vpack.i.b16 %v1576, %v1576
        %v2653 = vpack.i.b16 %v1577, %v1577
        %v2654 = vpack.i.b16 %v1578, %v1578
        %v2655 = vpack.i.b16 %v1579, %v1579
        %v2656 = vpack.i.b16 %v1580, %v1580
        %v2657 = vpack.i.b16 %v1581, %v1581
        %v2658 = vpack.i.b16 %v1582, %v1582
        %v2659 = vpack.i.b16 %v1583, %v1583
        %v2660 = vpack.i.b16 %v1584, %v1584
        %v2661 = vpack.i.b16 %v1585, %v1585
        %v2662 = vpack.i.b16 %v1586, %v1586
        %v2663 = vpack.i.b16 %v1587, %v1587
        %v2664 = vpack.i.b16 %v1588, %v1588
        %v2665 = vpack.i.b16 %v1589, %v1589
        %v2666 = vpack.i.b16 %v1590, %v1590
        %v2667 = vpack.i.b16 %v1591, %v1591
        %v2668 = vpack.i.b16 %v1592, %v1592
        %v2669 = vpack.i.b16 %v1593, %v1593
        %v2670 = vpack.i.b16 %v1594, %v1594
        %v2671 = vlaneseq
        %v2672 = vshrl.u32 %v2671, 7
        %v2673 = vsub.s32 0, %v2672
        %v2674 = vrot.slane %v2639, %v2673
        %v2675 = vlaneseq
        %v2676 = vshrl.u32 %v2675, 7
        %v2677 = vsub.s32 0, %v2676
        %v2678 = vrot.slane %v2640, %v2677
        %v2679 = vlaneseq
        %v2680 = vshrl.u32 %v2679, 7
        %v2681 = vsub.s32 0, %v2680
        %v2682 = vrot.slane %v2641, %v2681
        %v2683 = vlaneseq
        %v2684 = vshrl.u32 %v2683, 7
        %v2685 = vsub.s32 0, %v2684
        %v2686 = vrot.slane %v2642, %v2685
        %v2687 = vlaneseq
        %v2688 = vshrl.u32 %v2687, 7
        %v2689 = vsub.s32 0, %v2688
        %v2690 = vrot.slane %v2643, %v2689
        %v2691 = vlaneseq
        %v2692 = vshrl.u32 %v2691, 7
        %v2693 = vsub.s32 0, %v2692
        %v2694 = vrot.slane %v2644, %v2693
        %v2695 = vlaneseq
        %v2696 = vshrl.u32 %v2695, 7
        %v2697 = vsub.s32 0, %v2696
        %v2698 = vrot.slane %v2645, %v2697
        %v2699 = vlaneseq
        %v2700 = vshrl.u32 %v2699, 7
        %v2701 = vsub.s32 0, %v2700
        %v2702 = vrot.slane %v2646, %v2701
        %v2703 = vlaneseq
        %v2704 = vshrl.u32 %v2703, 7
        %v2705 = vsub.s32 0, %v2704
        %v2706 = vrot.slane %v2647, %v2705
        %v2707 = vlaneseq
        %v2708 = vshrl.u32 %v2707, 7
        %v2709 = vsub.s32 0, %v2708
        %v2710 = vrot.slane %v2648, %v2709
        %v2711 = vlaneseq
        %v2712 = vshrl.u32 %v2711, 7
        %v2713 = vsub.s32 0, %v2712
        %v2714 = vrot.slane %v2649, %v2713
        %v2715 = vlaneseq
        %v2716 = vshrl.u32 %v2715, 7
        %v2717 = vsub.s32 0, %v2716
        %v2718 = vrot.slane %v2650, %v2717
        %v2719 = vlaneseq
        %v2720 = vshrl.u32 %v2719, 7
        %v2721 = vsub.s32 0, %v2720
        %v2722 = vrot.slane %v2651, %v2721
        %v2723 = vlaneseq
        %v2724 = vshrl.u32 %v2723, 7
        %v2725 = vsub.s32 0, %v2724
        %v2726 = vrot.slane %v2652, %v2725
        %v2727 = vlaneseq
        %v2728 = vshrl.u32 %v2727, 7
        %v2729 = vsub.s32 0, %v2728
        %v2730 = vrot.slane %v2653, %v2729
        %v2731 = vlaneseq
        %v2732 = vshrl.u32 %v2731, 7
        %v2733 = vsub.s32 0, %v2732
        %v2734 = vrot.slane %v2654, %v2733
        %v2735 = vlaneseq
        %v2736 = vshrl.u32 %v2735, 7
        %v2737 = vsub.s32 0, %v2736
        %v2738 = vrot.slane %v2655, %v2737
        %v2739 = vlaneseq
        %v2740 = vshrl.u32 %v2739, 7
        %v2741 = vsub.s32 0, %v2740
        %v2742 = vrot.slane %v2656, %v2741
        %v2743 = vlaneseq
        %v2744 = vshrl.u32 %v2743, 7
        %v2745 = vsub.s32 0, %v2744
        %v2746 = vrot.slane %v2657, %v2745
        %v2747 = vlaneseq
        %v2748 = vshrl.u32 %v2747, 7
        %v2749 = vsub.s32 0, %v2748
        %v2750 = vrot.slane %v2658, %v2749
        %v2751 = vlaneseq
        %v2752 = vshrl.u32 %v2751, 7
        %v2753 = vsub.s32 0, %v2752
        %v2754 = vrot.slane %v2659, %v2753
        %v2755 = vlaneseq
        %v2756 = vshrl.u32 %v2755, 7
        %v2757 = vsub.s32 0, %v2756
        %v2758 = vrot.slane %v2660, %v2757
        %v2759 = vlaneseq
        %v2760 = vshrl.u32 %v2759, 7
        %v2761 = vsub.s32 0, %v2760
        %v2762 = vrot.slane %v2661, %v2761
        %v2763 = vlaneseq
        %v2764 = vshrl.u32 %v2763, 7
        %v2765 = vsub.s32 0, %v2764
        %v2766 = vrot.slane %v2662, %v2765
        %v2767 = vlaneseq
        %v2768 = vshrl.u32 %v2767, 7
        %v2769 = vsub.s32 0, %v2768
        %v2770 = vrot.slane %v2663, %v2769
        %v2771 = vlaneseq
        %v2772 = vshrl.u32 %v2771, 7
        %v2773 = vsub.s32 0, %v2772
        %v2774 = vrot.slane %v2664, %v2773
        %v2775 = vlaneseq
        %v2776 = vshrl.u32 %v2775, 7
        %v2777 = vsub.s32 0, %v2776
        %v2778 = vrot.slane %v2665, %v2777
        %v2779 = vlaneseq
        %v2780 = vshrl.u32 %v2779, 7
        %v2781 = vsub.s32 0, %v2780
        %v2782 = vrot.slane %v2666, %v2781
        %v2783 = vlaneseq
        %v2784 = vshrl.u32 %v2783, 7
        %v2785 = vsub.s32 0, %v2784
        %v2786 = vrot.slane %v2667, %v2785
        %v2787 = vlaneseq
        %v2788 = vshrl.u32 %v2787, 7
        %v2789 = vsub.s32 0, %v2788
        %v2790 = vrot.slane %v2668, %v2789
        %v2791 = vlaneseq
        %v2792 = vshrl.u32 %v2791, 7
        %v2793 = vsub.s32 0, %v2792
        %v2794 = vrot.slane %v2669, %v2793
        %v2795 = vlaneseq
        %v2796 = vshrl.u32 %v2795, 7
        %v2797 = vsub.s32 0, %v2796
        %v2798 = vrot.slane %v2670, %v2797
        %v2799 = vpack.i.b16 %v1695, %v1695
        %v2800 = vpack.i.b16 %v1696, %v1696
        %v2801 = vpack.i.b16 %v1697, %v1697
        %v2802 = vpack.i.b16 %v1698, %v1698
        %v2803 = vpack.i.b16 %v1699, %v1699
        %v2804 = vpack.i.b16 %v1700, %v1700
        %v2805 = vpack.i.b16 %v1701, %v1701
        %v2806 = vpack.i.b16 %v1702, %v1702
        %v2807 = vpack.i.b16 %v1703, %v1703
        %v2808 = vpack.i.b16 %v1704, %v1704
        %v2809 = vpack.i.b16 %v1705, %v1705
        %v2810 = vpack.i.b16 %v1706, %v1706
        %v2811 = vpack.i.b16 %v1707, %v1707
        %v2812 = vpack.i.b16 %v1708, %v1708
        %v2813 = vpack.i.b16 %v1709, %v1709
        %v2814 = vpack.i.b16 %v1710, %v1710
        %v2815 = vpack.i.b16 %v1711, %v1711
        %v2816 = vpack.i.b16 %v1712, %v1712
        %v2817 = vpack.i.b16 %v1713, %v1713
        %v2818 = vpack.i.b16 %v1714, %v1714
        %v2819 = vpack.i.b16 %v1715, %v1715
        %v2820 = vpack.i.b16 %v1716, %v1716
        %v2821 = vpack.i.b16 %v1717, %v1717
        %v2822 = vpack.i.b16 %v1718, %v1718
        %v2823 = vpack.i.b16 %v1719, %v1719
        %v2824 = vpack.i.b16 %v1720, %v1720
        %v2825 = vpack.i.b16 %v1721, %v1721
        %v2826 = vpack.i.b16 %v1722, %v1722
        %v2827 = vpack.i.b16 %v1723, %v1723
        %v2828 = vpack.i.b16 %v1724, %v1724
        %v2829 = vpack.i.b16 %v1725, %v1725
        %v2830 = vpack.i.b16 %v1726, %v1726
        %v2831 = vlaneseq
        %v2832 = vshrl.u32 %v2831, 7
        %v2833 = vsub.s32 0, %v2832
        %v2834 = vrot.slane %v2799, %v2833
        %v2835 = vlaneseq
        %v2836 = vshrl.u32 %v2835, 7
        %v2837 = vsub.s32 0, %v2836
        %v2838 = vrot.slane %v2800, %v2837
        %v2839 = vlaneseq
        %v2840 = vshrl.u32 %v2839, 7
        %v2841 = vsub.s32 0, %v2840
        %v2842 = vrot.slane %v2801, %v2841
        %v2843 = vlaneseq
        %v2844 = vshrl.u32 %v2843, 7
        %v2845 = vsub.s32 0, %v2844
        %v2846 = vrot.slane %v2802, %v2845
        %v2847 = vlaneseq
        %v2848 = vshrl.u32 %v2847, 7
        %v2849 = vsub.s32 0, %v2848
        %v2850 = vrot.slane %v2803, %v2849
        %v2851 = vlaneseq
        %v2852 = vshrl.u32 %v2851, 7
        %v2853 = vsub.s32 0, %v2852
        %v2854 = vrot.slane %v2804, %v2853
        %v2855 = vlaneseq
        %v2856 = vshrl.u32 %v2855, 7
        %v2857 = vsub.s32 0, %v2856
        %v2858 = vrot.slane %v2805, %v2857
        %v2859 = vlaneseq
        %v2860 = vshrl.u32 %v2859, 7
        %v2861 = vsub.s32 0, %v2860
        %v2862 = vrot.slane %v2806, %v2861
        %v2863 = vlaneseq
        %v2864 = vshrl.u32 %v2863, 7
        %v2865 = vsub.s32 0, %v2864
        %v2866 = vrot.slane %v2807, %v2865
        %v2867 = vlaneseq
        %v2868 = vshrl.u32 %v2867, 7
        %v2869 = vsub.s32 0, %v2868
        %v2870 = vrot.slane %v2808, %v2869
        %v2871 = vlaneseq
        %v2872 = vshrl.u32 %v2871, 7
        %v2873 = vsub.s32 0, %v2872
        %v2874 = vrot.slane %v2809, %v2873
        %v2875 = vlaneseq
        %v2876 = vshrl.u32 %v2875, 7
        %v2877 = vsub.s32 0, %v2876
        %v2878 = vrot.slane %v2810, %v2877
        %v2879 = vlaneseq
        %v2880 = vshrl.u32 %v2879, 7
        %v2881 = vsub.s32 0, %v2880
        %v2882 = vrot.slane %v2811, %v2881
        %v2883 = vlaneseq
        %v2884 = vshrl.u32 %v2883, 7
        %v2885 = vsub.s32 0, %v2884
        %v2886 = vrot.slane %v2812, %v2885
        %v2887 = vlaneseq
        %v2888 = vshrl.u32 %v2887, 7
        %v2889 = vsub.s32 0, %v2888
        %v2890 = vrot.slane %v2813, %v2889
        %v2891 = vlaneseq
        %v2892 = vshrl.u32 %v2891, 7
        %v2893 = vsub.s32 0, %v2892
        %v2894 = vrot.slane %v2814, %v2893
        %v2895 = vlaneseq
        %v2896 = vshrl.u32 %v2895, 7
        %v2897 = vsub.s32 0, %v2896
        %v2898 = vrot.slane %v2815, %v2897
        %v2899 = vlaneseq
        %v2900 = vshrl.u32 %v2899, 7
        %v2901 = vsub.s32 0, %v2900
        %v2902 = vrot.slane %v2816, %v2901
        %v2903 = vlaneseq
        %v2904 = vshrl.u32 %v2903, 7
        %v2905 = vsub.s32 0, %v2904
        %v2906 = vrot.slane %v2817, %v2905
        %v2907 = vlaneseq
        %v2908 = vshrl.u32 %v2907, 7
        %v2909 = vsub.s32 0, %v2908
        %v2910 = vrot.slane %v2818, %v2909
        %v2911 = vlaneseq
        %v2912 = vshrl.u32 %v2911, 7
        %v2913 = vsub.s32 0, %v2912
        %v2914 = vrot.slane %v2819, %v2913
        %v2915 = vlaneseq
        %v2916 = vshrl.u32 %v2915, 7
        %v2917 = vsub.s32 0, %v2916
        %v2918 = vrot.slane %v2820, %v2917
        %v2919 = vlaneseq
        %v2920 = vshrl.u32 %v2919, 7
        %v2921 = vsub.s32 0, %v2920
        %v2922 = vrot.slane %v2821, %v2921
        %v2923 = vlaneseq
        %v2924 = vshrl.u32 %v2923, 7
        %v2925 = vsub.s32 0, %v2924
        %v2926 = vrot.slane %v2822, %v2925
        %v2927 = vlaneseq
        %v2928 = vshrl.u32 %v2927, 7
        %v2929 = vsub.s32 0, %v2928
        %v2930 = vrot.slane %v2823, %v2929
        %v2931 = vlaneseq
        %v2932 = vshrl.u32 %v2931, 7
        %v2933 = vsub.s32 0, %v2932
        %v2934 = vrot.slane %v2824, %v2933
        %v2935 = vlaneseq
        %v2936 = vshrl.u32 %v2935, 7
        %v2937 = vsub.s32 0, %v2936
        %v2938 = vrot.slane %v2825, %v2937
        %v2939 = vlaneseq
        %v2940 = vshrl.u32 %v2939, 7
        %v2941 = vsub.s32 0, %v2940
        %v2942 = vrot.slane %v2826, %v2941
        %v2943 = vlaneseq
        %v2944 = vshrl.u32 %v2943, 7
        %v2945 = vsub.s32 0, %v2944
        %v2946 = vrot.slane %v2827, %v2945
        %v2947 = vlaneseq
        %v2948 = vshrl.u32 %v2947, 7
        %v2949 = vsub.s32 0, %v2948
        %v2950 = vrot.slane %v2828, %v2949
        %v2951 = vlaneseq
        %v2952 = vshrl.u32 %v2951, 7
        %v2953 = vsub.s32 0, %v2952
        %v2954 = vrot.slane %v2829, %v2953
        %v2955 = vlaneseq
        %v2956 = vshrl.u32 %v2955, 7
        %v2957 = vsub.s32 0, %v2956
        %v2958 = vrot.slane %v2830, %v2957
        %v2991 = vpack.i.b16 %v1827, %v1827
        %v2992 = vpack.i.b16 %v1828, %v1828
        %v2993 = vpack.i.b16 %v1829, %v1829
        %v2994 = vpack.i.b16 %v1830, %v1830
        %v2995 = vpack.i.b16 %v1831, %v1831
        %v2996 = vpack.i.b16 %v1832, %v1832
        %v2997 = vpack.i.b16 %v1833, %v1833
        %v2998 = vpack.i.b16 %v1834, %v1834
        %v2999 = vpack.i.b16 %v1835, %v1835
        %v3000 = vpack.i.b16 %v1836, %v1836
        %v3001 = vpack.i.b16 %v1837, %v1837
        %v3002 = vpack.i.b16 %v1838, %v1838
        %v3003 = vpack.i.b16 %v1839, %v1839
        %v3004 = vpack.i.b16 %v1840, %v1840
        %v3005 = vpack.i.b16 %v1841, %v1841
        %v3006 = vpack.i.b16 %v1842, %v1842
        %v3007 = vpack.i.b16 %v1843, %v1843
        %v3008 = vpack.i.b16 %v1844, %v1844
        %v3009 = vpack.i.b16 %v1845, %v1845
        %v3010 = vpack.i.b16 %v1846, %v1846
        %v3011 = vpack.i.b16 %v1847, %v1847
        %v3012 = vpack.i.b16 %v1848, %v1848
        %v3013 = vpack.i.b16 %v1849, %v1849
        %v3014 = vpack.i.b16 %v1850, %v1850
        %v3015 = vpack.i.b16 %v1851, %v1851
        %v3016 = vpack.i.b16 %v1852, %v1852
        %v3017 = vpack.i.b16 %v1853, %v1853
        %v3018 = vpack.i.b16 %v1854, %v1854
        %v3019 = vpack.i.b16 %v1855, %v1855
        %v3020 = vpack.i.b16 %v1856, %v1856
        %v3021 = vpack.i.b16 %v1857, %v1857
        %v3022 = vpack.i.b16 %v1858, %v1858
        %v3023 = vlaneseq
        %v3024 = vshrl.u32 %v3023, 7
        %v3025 = vsub.s32 0, %v3024
        %v3026 = vrot.slane %v2991, %v3025
        %v3027 = vlaneseq
        %v3028 = vshrl.u32 %v3027, 7
        %v3029 = vsub.s32 0, %v3028
        %v3030 = vrot.slane %v2992, %v3029
        %v3031 = vlaneseq
        %v3032 = vshrl.u32 %v3031, 7
        %v3033 = vsub.s32 0, %v3032
        %v3034 = vrot.slane %v2993, %v3033
        %v3035 = vlaneseq
        %v3036 = vshrl.u32 %v3035, 7
        %v3037 = vsub.s32 0, %v3036
        %v3038 = vrot.slane %v2994, %v3037
        %v3039 = vlaneseq
        %v3040 = vshrl.u32 %v3039, 7
        %v3041 = vsub.s32 0, %v3040
        %v3042 = vrot.slane %v2995, %v3041
        %v3043 = vlaneseq
        %v3044 = vshrl.u32 %v3043, 7
        %v3045 = vsub.s32 0, %v3044
        %v3046 = vrot.slane %v2996, %v3045
        %v3047 = vlaneseq
        %v3048 = vshrl.u32 %v3047, 7
        %v3049 = vsub.s32 0, %v3048
        %v3050 = vrot.slane %v2997, %v3049
        %v3051 = vlaneseq
        %v3052 = vshrl.u32 %v3051, 7
        %v3053 = vsub.s32 0, %v3052
        %v3054 = vrot.slane %v2998, %v3053
        %v3055 = vlaneseq
        %v3056 = vshrl.u32 %v3055, 7
        %v3057 = vsub.s32 0, %v3056
        %v3058 = vrot.slane %v2999, %v3057
        %v3059 = vlaneseq
        %v3060 = vshrl.u32 %v3059, 7
        %v3061 = vsub.s32 0, %v3060
        %v3062 = vrot.slane %v3000, %v3061
        %v3063 = vlaneseq
        %v3064 = vshrl.u32 %v3063, 7
        %v3065 = vsub.s32 0, %v3064
        %v3066 = vrot.slane %v3001, %v3065
        %v3067 = vlaneseq
        %v3068 = vshrl.u32 %v3067, 7
        %v3069 = vsub.s32 0, %v3068
        %v3070 = vrot.slane %v3002, %v3069
        %v3071 = vlaneseq
        %v3072 = vshrl.u32 %v3071, 7
        %v3073 = vsub.s32 0, %v3072
        %v3074 = vrot.slane %v3003, %v3073
        %v3075 = vlaneseq
        %v3076 = vshrl.u32 %v3075, 7
        %v3077 = vsub.s32 0, %v3076
        %v3078 = vrot.slane %v3004, %v3077
        %v3079 = vlaneseq
        %v3080 = vshrl.u32 %v3079, 7
        %v3081 = vsub.s32 0, %v3080
        %v3082 = vrot.slane %v3005, %v3081
        %v3083 = vlaneseq
        %v3084 = vshrl.u32 %v3083, 7
        %v3085 = vsub.s32 0, %v3084
        %v3086 = vrot.slane %v3006, %v3085
        %v3087 = vlaneseq
        %v3088 = vshrl.u32 %v3087, 7
        %v3089 = vsub.s32 0, %v3088
        %v3090 = vrot.slane %v3007, %v3089
        %v3091 = vlaneseq
        %v3092 = vshrl.u32 %v3091, 7
        %v3093 = vsub.s32 0, %v3092
        %v3094 = vrot.slane %v3008, %v3093
        %v3095 = vlaneseq
        %v3096 = vshrl.u32 %v3095, 7
        %v3097 = vsub.s32 0, %v3096
        %v3098 = vrot.slane %v3009, %v3097
        %v3099 = vlaneseq
        %v3100 = vshrl.u32 %v3099, 7
        %v3101 = vsub.s32 0, %v3100
        %v3102 = vrot.slane %v3010, %v3101
        %v3103 = vlaneseq
        %v3104 = vshrl.u32 %v3103, 7
        %v3105 = vsub.s32 0, %v3104
        %v3106 = vrot.slane %v3011, %v3105
        %v3107 = vlaneseq
        %v3108 = vshrl.u32 %v3107, 7
        %v3109 = vsub.s32 0, %v3108
        %v3110 = vrot.slane %v3012, %v3109
        %v3111 = vlaneseq
        %v3112 = vshrl.u32 %v3111, 7
        %v3113 = vsub.s32 0, %v3112
        %v3114 = vrot.slane %v3013, %v3113
        %v3115 = vlaneseq
        %v3116 = vshrl.u32 %v3115, 7
        %v3117 = vsub.s32 0, %v3116
        %v3118 = vrot.slane %v3014, %v3117
        %v3119 = vlaneseq
        %v3120 = vshrl.u32 %v3119, 7
        %v3121 = vsub.s32 0, %v3120
        %v3122 = vrot.slane %v3015, %v3121
        %v3123 = vlaneseq
        %v3124 = vshrl.u32 %v3123, 7
        %v3125 = vsub.s32 0, %v3124
        %v3126 = vrot.slane %v3016, %v3125
        %v3127 = vlaneseq
        %v3128 = vshrl.u32 %v3127, 7
        %v3129 = vsub.s32 0, %v3128
        %v3130 = vrot.slane %v3017, %v3129
        %v3131 = vlaneseq
        %v3132 = vshrl.u32 %v3131, 7
        %v3133 = vsub.s32 0, %v3132
        %v3134 = vrot.slane %v3018, %v3133
        %v3135 = vlaneseq
        %v3136 = vshrl.u32 %v3135, 7
        %v3137 = vsub.s32 0, %v3136
        %v3138 = vrot.slane %v3019, %v3137
        %v3139 = vlaneseq
        %v3140 = vshrl.u32 %v3139, 7
        %v3141 = vsub.s32 0, %v3140
        %v3142 = vrot.slane %v3020, %v3141
        %v3143 = vlaneseq
        %v3144 = vshrl.u32 %v3143, 7
        %v3145 = vsub.s32 0, %v3144
        %v3146 = vrot.slane %v3021, %v3145
        %v3147 = vlaneseq
        %v3148 = vshrl.u32 %v3147, 7
        %v3149 = vsub.s32 0, %v3148
        %v3150 = vrot.slane %v3022, %v3149
        %v3151 = vpack.i.b16 %v1959, %v1959
        %v3152 = vpack.i.b16 %v1960, %v1960
        %v3153 = vpack.i.b16 %v1961, %v1961
        %v3154 = vpack.i.b16 %v1962, %v1962
        %v3155 = vpack.i.b16 %v1963, %v1963
        %v3156 = vpack.i.b16 %v1964, %v1964
        %v3157 = vpack.i.b16 %v1965, %v1965
        %v3158 = vpack.i.b16 %v1966, %v1966
        %v3159 = vpack.i.b16 %v1967, %v1967
        %v3160 = vpack.i.b16 %v1968, %v1968
        %v3161 = vpack.i.b16 %v1969, %v1969
        %v3162 = vpack.i.b16 %v1970, %v1970
        %v3163 = vpack.i.b16 %v1971, %v1971
        %v3164 = vpack.i.b16 %v1972, %v1972
        %v3165 = vpack.i.b16 %v1973, %v1973
        %v3166 = vpack.i.b16 %v1974, %v1974
        %v3167 = vpack.i.b16 %v1975, %v1975
        %v3168 = vpack.i.b16 %v1976, %v1976
        %v3169 = vpack.i.b16 %v1977, %v1977
        %v3170 = vpack.i.b16 %v1978, %v1978
        %v3171 = vpack.i.b16 %v1979, %v1979
        %v3172 = vpack.i.b16 %v1980, %v1980
        %v3173 = vpack.i.b16 %v1981, %v1981
        %v3174 = vpack.i.b16 %v1982, %v1982
        %v3175 = vpack.i.b16 %v1983, %v1983
        %v3176 = vpack.i.b16 %v1984, %v1984
        %v3177 = vpack.i.b16 %v1985, %v1985
        %v3178 = vpack.i.b16 %v1986, %v1986
        %v3179 = vpack.i.b16 %v1987, %v1987
        %v3180 = vpack.i.b16 %v1988, %v1988
        %v3181 = vpack.i.b16 %v1989, %v1989
        %v3182 = vpack.i.b16 %v1990, %v1990
        %v3183 = vlaneseq
        %v3184 = vshrl.u32 %v3183, 7
        %v3185 = vsub.s32 0, %v3184
        %v3186 = vrot.slane %v3151, %v3185
        %v3187 = vlaneseq
        %v3188 = vshrl.u32 %v3187, 7
        %v3189 = vsub.s32 0, %v3188
        %v3190 = vrot.slane %v3152, %v3189
        %v3191 = vlaneseq
        %v3192 = vshrl.u32 %v3191, 7
        %v3193 = vsub.s32 0, %v3192
        %v3194 = vrot.slane %v3153, %v3193
        %v3195 = vlaneseq
        %v3196 = vshrl.u32 %v3195, 7
        %v3197 = vsub.s32 0, %v3196
        %v3198 = vrot.slane %v3154, %v3197
        %v3199 = vlaneseq
        %v3200 = vshrl.u32 %v3199, 7
        %v3201 = vsub.s32 0, %v3200
        %v3202 = vrot.slane %v3155, %v3201
        %v3203 = vlaneseq
        %v3204 = vshrl.u32 %v3203, 7
        %v3205 = vsub.s32 0, %v3204
        %v3206 = vrot.slane %v3156, %v3205
        %v3207 = vlaneseq
        %v3208 = vshrl.u32 %v3207, 7
        %v3209 = vsub.s32 0, %v3208
        %v3210 = vrot.slane %v3157, %v3209
        %v3211 = vlaneseq
        %v3212 = vshrl.u32 %v3211, 7
        %v3213 = vsub.s32 0, %v3212
        %v3214 = vrot.slane %v3158, %v3213
        %v3215 = vlaneseq
        %v3216 = vshrl.u32 %v3215, 7
        %v3217 = vsub.s32 0, %v3216
        %v3218 = vrot.slane %v3159, %v3217
        %v3219 = vlaneseq
        %v3220 = vshrl.u32 %v3219, 7
        %v3221 = vsub.s32 0, %v3220
        %v3222 = vrot.slane %v3160, %v3221
        %v3223 = vlaneseq
        %v3224 = vshrl.u32 %v3223, 7
        %v3225 = vsub.s32 0, %v3224
        %v3226 = vrot.slane %v3161, %v3225
        %v3227 = vlaneseq
        %v3228 = vshrl.u32 %v3227, 7
        %v3229 = vsub.s32 0, %v3228
        %v3230 = vrot.slane %v3162, %v3229
        %v3231 = vlaneseq
        %v3232 = vshrl.u32 %v3231, 7
        %v3233 = vsub.s32 0, %v3232
        %v3234 = vrot.slane %v3163, %v3233
        %v3235 = vlaneseq
        %v3236 = vshrl.u32 %v3235, 7
        %v3237 = vsub.s32 0, %v3236
        %v3238 = vrot.slane %v3164, %v3237
        %v3239 = vlaneseq
        %v3240 = vshrl.u32 %v3239, 7
        %v3241 = vsub.s32 0, %v3240
        %v3242 = vrot.slane %v3165, %v3241
        %v3243 = vlaneseq
        %v3244 = vshrl.u32 %v3243, 7
        %v3245 = vsub.s32 0, %v3244
        %v3246 = vrot.slane %v3166, %v3245
        %v3247 = vlaneseq
        %v3248 = vshrl.u32 %v3247, 7
        %v3249 = vsub.s32 0, %v3248
        %v3250 = vrot.slane %v3167, %v3249
        %v3251 = vlaneseq
        %v3252 = vshrl.u32 %v3251, 7
        %v3253 = vsub.s32 0, %v3252
        %v3254 = vrot.slane %v3168, %v3253
        %v3255 = vlaneseq
        %v3256 = vshrl.u32 %v3255, 7
        %v3257 = vsub.s32 0, %v3256
        %v3258 = vrot.slane %v3169, %v3257
        %v3259 = vlaneseq
        %v3260 = vshrl.u32 %v3259, 7
        %v3261 = vsub.s32 0, %v3260
        %v3262 = vrot.slane %v3170, %v3261
        %v3263 = vlaneseq
        %v3264 = vshrl.u32 %v3263, 7
        %v3265 = vsub.s32 0, %v3264
        %v3266 = vrot.slane %v3171, %v3265
        %v3267 = vlaneseq
        %v3268 = vshrl.u32 %v3267, 7
        %v3269 = vsub.s32 0, %v3268
        %v3270 = vrot.slane %v3172, %v3269
        %v3271 = vlaneseq
        %v3272 = vshrl.u32 %v3271, 7
        %v3273 = vsub.s32 0, %v3272
        %v3274 = vrot.slane %v3173, %v3273
        %v3275 = vlaneseq
        %v3276 = vshrl.u32 %v3275, 7
        %v3277 = vsub.s32 0, %v3276
        %v3278 = vrot.slane %v3174, %v3277
        %v3279 = vlaneseq
        %v3280 = vshrl.u32 %v3279, 7
        %v3281 = vsub.s32 0, %v3280
        %v3282 = vrot.slane %v3175, %v3281
        %v3283 = vlaneseq
        %v3284 = vshrl.u32 %v3283, 7
        %v3285 = vsub.s32 0, %v3284
        %v3286 = vrot.slane %v3176, %v3285
        %v3287 = vlaneseq
        %v3288 = vshrl.u32 %v3287, 7
        %v3289 = vsub.s32 0, %v3288
        %v3290 = vrot.slane %v3177, %v3289
        %v3291 = vlaneseq
        %v3292 = vshrl.u32 %v3291, 7
        %v3293 = vsub.s32 0, %v3292
        %v3294 = vrot.slane %v3178, %v3293
        %v3295 = vlaneseq
        %v3296 = vshrl.u32 %v3295, 7
        %v3297 = vsub.s32 0, %v3296
        %v3298 = vrot.slane %v3179, %v3297
        %v3299 = vlaneseq
        %v3300 = vshrl.u32 %v3299, 7
        %v3301 = vsub.s32 0, %v3300
        %v3302 = vrot.slane %v3180, %v3301
        %v3303 = vlaneseq
        %v3304 = vshrl.u32 %v3303, 7
        %v3305 = vsub.s32 0, %v3304
        %v3306 = vrot.slane %v3181, %v3305
        %v3307 = vlaneseq
        %v3308 = vshrl.u32 %v3307, 7
        %v3309 = vsub.s32 0, %v3308
        %v3310 = vrot.slane %v3182, %v3309
        %v3343 = vpack.i.b16 %v2091, %v2091
        %v3344 = vpack.i.b16 %v2092, %v2092
        %v3345 = vpack.i.b16 %v2093, %v2093
        %v3346 = vpack.i.b16 %v2094, %v2094
        %v3347 = vpack.i.b16 %v2095, %v2095
        %v3348 = vpack.i.b16 %v2096, %v2096
        %v3349 = vpack.i.b16 %v2097, %v2097
        %v3350 = vpack.i.b16 %v2098, %v2098
        %v3351 = vpack.i.b16 %v2099, %v2099
        %v3352 = vpack.i.b16 %v2100, %v2100
        %v3353 = vpack.i.b16 %v2101, %v2101
        %v3354 = vpack.i.b16 %v2102, %v2102
        %v3355 = vpack.i.b16 %v2103, %v2103
        %v3356 = vpack.i.b16 %v2104, %v2104
        %v3357 = vpack.i.b16 %v2105, %v2105
        %v3358 = vpack.i.b16 %v2106, %v2106
        %v3359 = vpack.i.b16 %v2107, %v2107
        %v3360 = vpack.i.b16 %v2108, %v2108
        %v3361 = vpack.i.b16 %v2109, %v2109
        %v3362 = vpack.i.b16 %v2110, %v2110
        %v3363 = vpack.i.b16 %v2111, %v2111
        %v3364 = vpack.i.b16 %v2112, %v2112
        %v3365 = vpack.i.b16 %v2113, %v2113
        %v3366 = vpack.i.b16 %v2114, %v2114
        %v3367 = vpack.i.b16 %v2115, %v2115
        %v3368 = vpack.i.b16 %v2116, %v2116
        %v3369 = vpack.i.b16 %v2117, %v2117
        %v3370 = vpack.i.b16 %v2118, %v2118
        %v3371 = vpack.i.b16 %v2119, %v2119
        %v3372 = vpack.i.b16 %v2120, %v2120
        %v3373 = vpack.i.b16 %v2121, %v2121
        %v3374 = vpack.i.b16 %v2122, %v2122
        %v3375 = vlaneseq
        %v3376 = vshrl.u32 %v3375, 7
        %v3377 = vsub.s32 0, %v3376
        %v3378 = vrot.slane %v3343, %v3377
        %v3379 = vlaneseq
        %v3380 = vshrl.u32 %v3379, 7
        %v3381 = vsub.s32 0, %v3380
        %v3382 = vrot.slane %v3344, %v3381
        %v3383 = vlaneseq
        %v3384 = vshrl.u32 %v3383, 7
        %v3385 = vsub.s32 0, %v3384
        %v3386 = vrot.slane %v3345, %v3385
        %v3387 = vlaneseq
        %v3388 = vshrl.u32 %v3387, 7
        %v3389 = vsub.s32 0, %v3388
        %v3390 = vrot.slane %v3346, %v3389
        %v3391 = vlaneseq
        %v3392 = vshrl.u32 %v3391, 7
        %v3393 = vsub.s32 0, %v3392
        %v3394 = vrot.slane %v3347, %v3393
        %v3395 = vlaneseq
        %v3396 = vshrl.u32 %v3395, 7
        %v3397 = vsub.s32 0, %v3396
        %v3398 = vrot.slane %v3348, %v3397
        %v3399 = vlaneseq
        %v3400 = vshrl.u32 %v3399, 7
        %v3401 = vsub.s32 0, %v3400
        %v3402 = vrot.slane %v3349, %v3401
        %v3403 = vlaneseq
        %v3404 = vshrl.u32 %v3403, 7
        %v3405 = vsub.s32 0, %v3404
        %v3406 = vrot.slane %v3350, %v3405
        %v3407 = vlaneseq
        %v3408 = vshrl.u32 %v3407, 7
        %v3409 = vsub.s32 0, %v3408
        %v3410 = vrot.slane %v3351, %v3409
        %v3411 = vlaneseq
        %v3412 = vshrl.u32 %v3411, 7
        %v3413 = vsub.s32 0, %v3412
        %v3414 = vrot.slane %v3352, %v3413
        %v3415 = vlaneseq
        %v3416 = vshrl.u32 %v3415, 7
        %v3417 = vsub.s32 0, %v3416
        %v3418 = vrot.slane %v3353, %v3417
        %v3419 = vlaneseq
        %v3420 = vshrl.u32 %v3419, 7
        %v3421 = vsub.s32 0, %v3420
        %v3422 = vrot.slane %v3354, %v3421
        %v3423 = vlaneseq
        %v3424 = vshrl.u32 %v3423, 7
        %v3425 = vsub.s32 0, %v3424
        %v3426 = vrot.slane %v3355, %v3425
        %v3427 = vlaneseq
        %v3428 = vshrl.u32 %v3427, 7
        %v3429 = vsub.s32 0, %v3428
        %v3430 = vrot.slane %v3356, %v3429
        %v3431 = vlaneseq
        %v3432 = vshrl.u32 %v3431, 7
        %v3433 = vsub.s32 0, %v3432
        %v3434 = vrot.slane %v3357, %v3433
        %v3435 = vlaneseq
        %v3436 = vshrl.u32 %v3435, 7
        %v3437 = vsub.s32 0, %v3436
        %v3438 = vrot.slane %v3358, %v3437
        %v3439 = vlaneseq
        %v3440 = vshrl.u32 %v3439, 7
        %v3441 = vsub.s32 0, %v3440
        %v3442 = vrot.slane %v3359, %v3441
        %v3443 = vlaneseq
        %v3444 = vshrl.u32 %v3443, 7
        %v3445 = vsub.s32 0, %v3444
        %v3446 = vrot.slane %v3360, %v3445
        %v3447 = vlaneseq
        %v3448 = vshrl.u32 %v3447, 7
        %v3449 = vsub.s32 0, %v3448
        %v3450 = vrot.slane %v3361, %v3449
        %v3451 = vlaneseq
        %v3452 = vshrl.u32 %v3451, 7
        %v3453 = vsub.s32 0, %v3452
        %v3454 = vrot.slane %v3362, %v3453
        %v3455 = vlaneseq
        %v3456 = vshrl.u32 %v3455, 7
        %v3457 = vsub.s32 0, %v3456
        %v3458 = vrot.slane %v3363, %v3457
        %v3459 = vlaneseq
        %v3460 = vshrl.u32 %v3459, 7
        %v3461 = vsub.s32 0, %v3460
        %v3462 = vrot.slane %v3364, %v3461
        %v3463 = vlaneseq
        %v3464 = vshrl.u32 %v3463, 7
        %v3465 = vsub.s32 0, %v3464
        %v3466 = vrot.slane %v3365, %v3465
        %v3467 = vlaneseq
        %v3468 = vshrl.u32 %v3467, 7
        %v3469 = vsub.s32 0, %v3468
        %v3470 = vrot.slane %v3366, %v3469
        %v3471 = vlaneseq
        %v3472 = vshrl.u32 %v3471, 7
        %v3473 = vsub.s32 0, %v3472
        %v3474 = vrot.slane %v3367, %v3473
        %v3475 = vlaneseq
        %v3476 = vshrl.u32 %v3475, 7
        %v3477 = vsub.s32 0, %v3476
        %v3478 = vrot.slane %v3368, %v3477
        %v3479 = vlaneseq
        %v3480 = vshrl.u32 %v3479, 7
        %v3481 = vsub.s32 0, %v3480
        %v3482 = vrot.slane %v3369, %v3481
        %v3483 = vlaneseq
        %v3484 = vshrl.u32 %v3483, 7
        %v3485 = vsub.s32 0, %v3484
        %v3486 = vrot.slane %v3370, %v3485
        %v3487 = vlaneseq
        %v3488 = vshrl.u32 %v3487, 7
        %v3489 = vsub.s32 0, %v3488
        %v3490 = vrot.slane %v3371, %v3489
        %v3491 = vlaneseq
        %v3492 = vshrl.u32 %v3491, 7
        %v3493 = vsub.s32 0, %v3492
        %v3494 = vrot.slane %v3372, %v3493
        %v3495 = vlaneseq
        %v3496 = vshrl.u32 %v3495, 7
        %v3497 = vsub.s32 0, %v3496
        %v3498 = vrot.slane %v3373, %v3497
        %v3499 = vlaneseq
        %v3500 = vshrl.u32 %v3499, 7
        %v3501 = vsub.s32 0, %v3500
        %v3502 = vrot.slane %v3374, %v3501
        %v3503 = vpack.i.b16 %v2223, %v2223
        %v3504 = vpack.i.b16 %v2224, %v2224
        %v3505 = vpack.i.b16 %v2225, %v2225
        %v3506 = vpack.i.b16 %v2226, %v2226
        %v3507 = vpack.i.b16 %v2227, %v2227
        %v3508 = vpack.i.b16 %v2228, %v2228
        %v3509 = vpack.i.b16 %v2229, %v2229
        %v3510 = vpack.i.b16 %v2230, %v2230
        %v3511 = vpack.i.b16 %v2231, %v2231
        %v3512 = vpack.i.b16 %v2232, %v2232
        %v3513 = vpack.i.b16 %v2233, %v2233
        %v3514 = vpack.i.b16 %v2234, %v2234
        %v3515 = vpack.i.b16 %v2235, %v2235
        %v3516 = vpack.i.b16 %v2236, %v2236
        %v3517 = vpack.i.b16 %v2237, %v2237
        %v3518 = vpack.i.b16 %v2238, %v2238
        %v3519 = vpack.i.b16 %v2239, %v2239
        %v3520 = vpack.i.b16 %v2240, %v2240
        %v3521 = vpack.i.b16 %v2241, %v2241
        %v3522 = vpack.i.b16 %v2242, %v2242
        %v3523 = vpack.i.b16 %v2243, %v2243
        %v3524 = vpack.i.b16 %v2244, %v2244
        %v3525 = vpack.i.b16 %v2245, %v2245
        %v3526 = vpack.i.b16 %v2246, %v2246
        %v3527 = vpack.i.b16 %v2247, %v2247
        %v3528 = vpack.i.b16 %v2248, %v2248
        %v3529 = vpack.i.b16 %v2249, %v2249
        %v3530 = vpack.i.b16 %v2250, %v2250
        %v3531 = vpack.i.b16 %v2251, %v2251
        %v3532 = vpack.i.b16 %v2252, %v2252
        %v3533 = vpack.i.b16 %v2253, %v2253
        %v3534 = vpack.i.b16 %v2254, %v2254
        %v3535 = vlaneseq
        %v3536 = vshrl.u32 %v3535, 7
        %v3537 = vsub.s32 0, %v3536
        %v3538 = vrot.slane %v3503, %v3537
        %v3539 = vlaneseq
        %v3540 = vshrl.u32 %v3539, 7
        %v3541 = vsub.s32 0, %v3540
        %v3542 = vrot.slane %v3504, %v3541
        %v3543 = vlaneseq
        %v3544 = vshrl.u32 %v3543, 7
        %v3545 = vsub.s32 0, %v3544
        %v3546 = vrot.slane %v3505, %v3545
        %v3547 = vlaneseq
        %v3548 = vshrl.u32 %v3547, 7
        %v3549 = vsub.s32 0, %v3548
        %v3550 = vrot.slane %v3506, %v3549
        %v3551 = vlaneseq
        %v3552 = vshrl.u32 %v3551, 7
        %v3553 = vsub.s32 0, %v3552
        %v3554 = vrot.slane %v3507, %v3553
        %v3555 = vlaneseq
        %v3556 = vshrl.u32 %v3555, 7
        %v3557 = vsub.s32 0, %v3556
        %v3558 = vrot.slane %v3508, %v3557
        %v3559 = vlaneseq
        %v3560 = vshrl.u32 %v3559, 7
        %v3561 = vsub.s32 0, %v3560
        %v3562 = vrot.slane %v3509, %v3561
        %v3563 = vlaneseq
        %v3564 = vshrl.u32 %v3563, 7
        %v3565 = vsub.s32 0, %v3564
        %v3566 = vrot.slane %v3510, %v3565
        %v3567 = vlaneseq
        %v3568 = vshrl.u32 %v3567, 7
        %v3569 = vsub.s32 0, %v3568
        %v3570 = vrot.slane %v3511, %v3569
        %v3571 = vlaneseq
        %v3572 = vshrl.u32 %v3571, 7
        %v3573 = vsub.s32 0, %v3572
        %v3574 = vrot.slane %v3512, %v3573
        %v3575 = vlaneseq
        %v3576 = vshrl.u32 %v3575, 7
        %v3577 = vsub.s32 0, %v3576
        %v3578 = vrot.slane %v3513, %v3577
        %v3579 = vlaneseq
        %v3580 = vshrl.u32 %v3579, 7
        %v3581 = vsub.s32 0, %v3580
        %v3582 = vrot.slane %v3514, %v3581
        %v3583 = vlaneseq
        %v3584 = vshrl.u32 %v3583, 7
        %v3585 = vsub.s32 0, %v3584
        %v3586 = vrot.slane %v3515, %v3585
        %v3587 = vlaneseq
        %v3588 = vshrl.u32 %v3587, 7
        %v3589 = vsub.s32 0, %v3588
        %v3590 = vrot.slane %v3516, %v3589
        %v3591 = vlaneseq
        %v3592 = vshrl.u32 %v3591, 7
        %v3593 = vsub.s32 0, %v3592
        %v3594 = vrot.slane %v3517, %v3593
        %v3595 = vlaneseq
        %v3596 = vshrl.u32 %v3595, 7
        %v3597 = vsub.s32 0, %v3596
        %v3598 = vrot.slane %v3518, %v3597
        %v3599 = vlaneseq
        %v3600 = vshrl.u32 %v3599, 7
        %v3601 = vsub.s32 0, %v3600
        %v3602 = vrot.slane %v3519, %v3601
        %v3603 = vlaneseq
        %v3604 = vshrl.u32 %v3603, 7
        %v3605 = vsub.s32 0, %v3604
        %v3606 = vrot.slane %v3520, %v3605
        %v3607 = vlaneseq
        %v3608 = vshrl.u32 %v3607, 7
        %v3609 = vsub.s32 0, %v3608
        %v3610 = vrot.slane %v3521, %v3609
        %v3611 = vlaneseq
        %v3612 = vshrl.u32 %v3611, 7
        %v3613 = vsub.s32 0, %v3612
        %v3614 = vrot.slane %v3522, %v3613
        %v3615 = vlaneseq
        %v3616 = vshrl.u32 %v3615, 7
        %v3617 = vsub.s32 0, %v3616
        %v3618 = vrot.slane %v3523, %v3617
        %v3619 = vlaneseq
        %v3620 = vshrl.u32 %v3619, 7
        %v3621 = vsub.s32 0, %v3620
        %v3622 = vrot.slane %v3524, %v3621
        %v3623 = vlaneseq
        %v3624 = vshrl.u32 %v3623, 7
        %v3625 = vsub.s32 0, %v3624
        %v3626 = vrot.slane %v3525, %v3625
        %v3627 = vlaneseq
        %v3628 = vshrl.u32 %v3627, 7
        %v3629 = vsub.s32 0, %v3628
        %v3630 = vrot.slane %v3526, %v3629
        %v3631 = vlaneseq
        %v3632 = vshrl.u32 %v3631, 7
        %v3633 = vsub.s32 0, %v3632
        %v3634 = vrot.slane %v3527, %v3633
        %v3635 = vlaneseq
        %v3636 = vshrl.u32 %v3635, 7
        %v3637 = vsub.s32 0, %v3636
        %v3638 = vrot.slane %v3528, %v3637
        %v3639 = vlaneseq
        %v3640 = vshrl.u32 %v3639, 7
        %v3641 = vsub.s32 0, %v3640
        %v3642 = vrot.slane %v3529, %v3641
        %v3643 = vlaneseq
        %v3644 = vshrl.u32 %v3643, 7
        %v3645 = vsub.s32 0, %v3644
        %v3646 = vrot.slane %v3530, %v3645
        %v3647 = vlaneseq
        %v3648 = vshrl.u32 %v3647, 7
        %v3649 = vsub.s32 0, %v3648
        %v3650 = vrot.slane %v3531, %v3649
        %v3651 = vlaneseq
        %v3652 = vshrl.u32 %v3651, 7
        %v3653 = vsub.s32 0, %v3652
        %v3654 = vrot.slane %v3532, %v3653
        %v3655 = vlaneseq
        %v3656 = vshrl.u32 %v3655, 7
        %v3657 = vsub.s32 0, %v3656
        %v3658 = vrot.slane %v3533, %v3657
        %v3659 = vlaneseq
        %v3660 = vshrl.u32 %v3659, 7
        %v3661 = vsub.s32 0, %v3660
        %v3662 = vrot.slane %v3534, %v3661
        %vm3695 = vcmask 1040384
        %vm3696 = vsmask.f32 256
        %vm3697 = vmand %vm3695, %vm3696
        %v3698 = vsel %vm3697, %v2290, %v2482
        %v3699 = vsel %vm3697, %v2294, %v2486
        %v3700 = vsel %vm3697, %v2298, %v2490
        %v3701 = vsel %vm3697, %v2302, %v2494
        %v3702 = vsel %vm3697, %v2306, %v2498
        %v3703 = vsel %vm3697, %v2310, %v2502
        %v3704 = vsel %vm3697, %v2314, %v2506
        %v3705 = vsel %vm3697, %v2318, %v2510
        %v3706 = vsel %vm3697, %v2322, %v2514
        %v3707 = vsel %vm3697, %v2326, %v2518
        %v3708 = vsel %vm3697, %v2330, %v2522
        %v3709 = vsel %vm3697, %v2334, %v2526
        %v3710 = vsel %vm3697, %v2338, %v2530
        %v3711 = vsel %vm3697, %v2342, %v2534
        %v3712 = vsel %vm3697, %v2346, %v2538
        %v3713 = vsel %vm3697, %v2350, %v2542
        %v3714 = vsel %vm3697, %v2354, %v2546
        %v3715 = vsel %vm3697, %v2358, %v2550
        %v3716 = vsel %vm3697, %v2362, %v2554
        %v3717 = vsel %vm3697, %v2366, %v2558
        %v3718 = vsel %vm3697, %v2370, %v2562
        %v3719 = vsel %vm3697, %v2374, %v2566
        %v3720 = vsel %vm3697, %v2378, %v2570
        %v3721 = vsel %vm3697, %v2382, %v2574
        %v3722 = vsel %vm3697, %v2386, %v2578
        %v3723 = vsel %vm3697, %v2390, %v2582
        %v3724 = vsel %vm3697, %v2394, %v2586
        %v3725 = vsel %vm3697, %v2398, %v2590
        %v3726 = vsel %vm3697, %v2402, %v2594
        %v3727 = vsel %vm3697, %v2406, %v2598
        %v3728 = vsel %vm3697, %v2410, %v2602
        %v3729 = vsel %vm3697, %v2414, %v2606
        %vm3730 = vcmask 1040384
        %v3733 = vsel %vm3730, %v3698, %v2674
        %v3737 = vsel %vm3730, %v3699, %v2678
        %v3741 = vsel %vm3730, %v3700, %v2682
        %v3745 = vsel %vm3730, %v3701, %v2686
        %v3749 = vsel %vm3730, %v3702, %v2690
        %v3753 = vsel %vm3730, %v3703, %v2694
        %v3757 = vsel %vm3730, %v3704, %v2698
        %v3761 = vsel %vm3730, %v3705, %v2702
        %v3765 = vsel %vm3730, %v3706, %v2706
        %v3769 = vsel %vm3730, %v3707, %v2710
        %v3773 = vsel %vm3730, %v3708, %v2714
        %v3777 = vsel %vm3730, %v3709, %v2718
        %v3781 = vsel %vm3730, %v3710, %v2722
        %v3785 = vsel %vm3730, %v3711, %v2726
        %v3789 = vsel %vm3730, %v3712, %v2730
        %v3793 = vsel %vm3730, %v3713, %v2734
        %v3797 = vsel %vm3730, %v3714, %v2738
        %v3801 = vsel %vm3730, %v3715, %v2742
        %v3805 = vsel %vm3730, %v3716, %v2746
        %v3809 = vsel %vm3730, %v3717, %v2750
        %v3813 = vsel %vm3730, %v3718, %v2754
        %v3817 = vsel %vm3730, %v3719, %v2758
        %v3821 = vsel %vm3730, %v3720, %v2762
        %v3825 = vsel %vm3730, %v3721, %v2766
        %v3829 = vsel %vm3730, %v3722, %v2770
        %v3833 = vsel %vm3730, %v3723, %v2774
        %v3837 = vsel %vm3730, %v3724, %v2778
        %v3841 = vsel %vm3730, %v3725, %v2782
        %v3845 = vsel %vm3730, %v3726, %v2786
        %v3849 = vsel %vm3730, %v3727, %v2790
        %v3853 = vsel %vm3730, %v3728, %v2794
        %v3857 = vsel %vm3730, %v3729, %v2798
        %vm3859 = vcmask 1041408
        %vm3860 = vsmask.f32 1280
        %vm3861 = vmand %vm3859, %vm3860
        %v3862 = vsel %vm3861, %v3733, %v2834
        %v3863 = vsel %vm3861, %v3737, %v2838
        %v3864 = vsel %vm3861, %v3741, %v2842
        %v3865 = vsel %vm3861, %v3745, %v2846
        %v3866 = vsel %vm3861, %v3749, %v2850
        %v3867 = vsel %vm3861, %v3753, %v2854
        %v3868 = vsel %vm3861, %v3757, %v2858
        %v3869 = vsel %vm3861, %v3761, %v2862
        %v3870 = vsel %vm3861, %v3765, %v2866
        %v3871 = vsel %vm3861, %v3769, %v2870
        %v3872 = vsel %vm3861, %v3773, %v2874
        %v3873 = vsel %vm3861, %v3777, %v2878
        %v3874 = vsel %vm3861, %v3781, %v2882
        %v3875 = vsel %vm3861, %v3785, %v2886
        %v3876 = vsel %vm3861, %v3789, %v2890
        %v3877 = vsel %vm3861, %v3793, %v2894
        %v3878 = vsel %vm3861, %v3797, %v2898
        %v3879 = vsel %vm3861, %v3801, %v2902
        %v3880 = vsel %vm3861, %v3805, %v2906
        %v3881 = vsel %vm3861, %v3809, %v2910
        %v3882 = vsel %vm3861, %v3813, %v2914
        %v3883 = vsel %vm3861, %v3817, %v2918
        %v3884 = vsel %vm3861, %v3821, %v2922
        %v3885 = vsel %vm3861, %v3825, %v2926
        %v3886 = vsel %vm3861, %v3829, %v2930
        %v3887 = vsel %vm3861, %v3833, %v2934
        %v3888 = vsel %vm3861, %v3837, %v2938
        %v3889 = vsel %vm3861, %v3841, %v2942
        %v3890 = vsel %vm3861, %v3845, %v2946
        %v3891 = vsel %vm3861, %v3849, %v2950
        %v3892 = vsel %vm3861, %v3853, %v2954
        %v3893 = vsel %vm3861, %v3857, %v2958
        %vm3894 = vcmask 1041408
        %v3897 = vsel %vm3894, %v3862, %v3026
        %v3901 = vsel %vm3894, %v3863, %v3030
        %v3905 = vsel %vm3894, %v3864, %v3034
        %v3909 = vsel %vm3894, %v3865, %v3038
        %v3913 = vsel %vm3894, %v3866, %v3042
        %v3917 = vsel %vm3894, %v3867, %v3046
        %v3921 = vsel %vm3894, %v3868, %v3050
        %v3925 = vsel %vm3894, %v3869, %v3054
        %v3929 = vsel %vm3894, %v3870, %v3058
        %v3933 = vsel %vm3894, %v3871, %v3062
        %v3937 = vsel %vm3894, %v3872, %v3066
        %v3941 = vsel %vm3894, %v3873, %v3070
        %v3945 = vsel %vm3894, %v3874, %v3074
        %v3949 = vsel %vm3894, %v3875, %v3078
        %v3953 = vsel %vm3894, %v3876, %v3082
        %v3957 = vsel %vm3894, %v3877, %v3086
        %v3961 = vsel %vm3894, %v3878, %v3090
        %v3965 = vsel %vm3894, %v3879, %v3094
        %v3969 = vsel %vm3894, %v3880, %v3098
        %v3973 = vsel %vm3894, %v3881, %v3102
        %v3977 = vsel %vm3894, %v3882, %v3106
        %v3981 = vsel %vm3894, %v3883, %v3110
        %v3985 = vsel %vm3894, %v3884, %v3114
        %v3989 = vsel %vm3894, %v3885, %v3118
        %v3993 = vsel %vm3894, %v3886, %v3122
        %v3997 = vsel %vm3894, %v3887, %v3126
        %v4001 = vsel %vm3894, %v3888, %v3130
        %v4005 = vsel %vm3894, %v3889, %v3134
        %v4009 = vsel %vm3894, %v3890, %v3138
        %v4013 = vsel %vm3894, %v3891, %v3142
        %v4017 = vsel %vm3894, %v3892, %v3146
        %v4021 = vsel %vm3894, %v3893, %v3150
        %vm4023 = vcmask 1042432
        %vm4024 = vsmask.f32 2304
        %vm4025 = vmand %vm4023, %vm4024
        %v4026 = vsel %vm4025, %v3897, %v3186
        %v4027 = vsel %vm4025, %v3901, %v3190
        %v4028 = vsel %vm4025, %v3905, %v3194
        %v4029 = vsel %vm4025, %v3909, %v3198
        %v4030 = vsel %vm4025, %v3913, %v3202
        %v4031 = vsel %vm4025, %v3917, %v3206
        %v4032 = vsel %vm4025, %v3921, %v3210
        %v4033 = vsel %vm4025, %v3925, %v3214
        %v4034 = vsel %vm4025, %v3929, %v3218
        %v4035 = vsel %vm4025, %v3933, %v3222
        %v4036 = vsel %vm4025, %v3937, %v3226
        %v4037 = vsel %vm4025, %v3941, %v3230
        %v4038 = vsel %vm4025, %v3945, %v3234
        %v4039 = vsel %vm4025, %v3949, %v3238
        %v4040 = vsel %vm4025, %v3953, %v3242
        %v4041 = vsel %vm4025, %v3957, %v3246
        %v4042 = vsel %vm4025, %v3961, %v3250
        %v4043 = vsel %vm4025, %v3965, %v3254
        %v4044 = vsel %vm4025, %v3969, %v3258
        %v4045 = vsel %vm4025, %v3973, %v3262
        %v4046 = vsel %vm4025, %v3977, %v3266
        %v4047 = vsel %vm4025, %v3981, %v3270
        %v4048 = vsel %vm4025, %v3985, %v3274
        %v4049 = vsel %vm4025, %v3989, %v3278
        %v4050 = vsel %vm4025, %v3993, %v3282
        %v4051 = vsel %vm4025, %v3997, %v3286
        %v4052 = vsel %vm4025, %v4001, %v3290
        %v4053 = vsel %vm4025, %v4005, %v3294
        %v4054 = vsel %vm4025, %v4009, %v3298
        %v4055 = vsel %vm4025, %v4013, %v3302
        %v4056 = vsel %vm4025, %v4017, %v3306
        %v4057 = vsel %vm4025, %v4021, %v3310
        %vm4058 = vcmask 1042432
        %v4061 = vsel %vm4058, %v4026, %v3378
        %v4065 = vsel %vm4058, %v4027, %v3382
        %v4069 = vsel %vm4058, %v4028, %v3386
        %v4073 = vsel %vm4058, %v4029, %v3390
        %v4077 = vsel %vm4058, %v4030, %v3394
        %v4081 = vsel %vm4058, %v4031, %v3398
        %v4085 = vsel %vm4058, %v4032, %v3402
        %v4089 = vsel %vm4058, %v4033, %v3406
        %v4093 = vsel %vm4058, %v4034, %v3410
        %v4097 = vsel %vm4058, %v4035, %v3414
        %v4101 = vsel %vm4058, %v4036, %v3418
        %v4105 = vsel %vm4058, %v4037, %v3422
        %v4109 = vsel %vm4058, %v4038, %v3426
        %v4113 = vsel %vm4058, %v4039, %v3430
        %v4117 = vsel %vm4058, %v4040, %v3434
        %v4121 = vsel %vm4058, %v4041, %v3438
        %v4125 = vsel %vm4058, %v4042, %v3442
        %v4129 = vsel %vm4058, %v4043, %v3446
        %v4133 = vsel %vm4058, %v4044, %v3450
        %v4137 = vsel %vm4058, %v4045, %v3454
        %v4141 = vsel %vm4058, %v4046, %v3458
        %v4145 = vsel %vm4058, %v4047, %v3462
        %v4149 = vsel %vm4058, %v4048, %v3466
        %v4153 = vsel %vm4058, %v4049, %v3470
        %v4157 = vsel %vm4058, %v4050, %v3474
        %v4161 = vsel %vm4058, %v4051, %v3478
        %v4165 = vsel %vm4058, %v4052, %v3482
        %v4169 = vsel %vm4058, %v4053, %v3486
        %v4173 = vsel %vm4058, %v4054, %v3490
        %v4177 = vsel %vm4058, %v4055, %v3494
        %v4181 = vsel %vm4058, %v4056, %v3498
        %v4185 = vsel %vm4058, %v4057, %v3502
        %vm4187 = vcmask 1043456
        %vm4188 = vsmask.f32 3328
        %vm4189 = vmand %vm4187, %vm4188
        %v4190 = vsel %vm4189, %v4061, %v3538
        %v4191 = vsel %vm4189, %v4065, %v3542
        %v4192 = vsel %vm4189, %v4069, %v3546
        %v4193 = vsel %vm4189, %v4073, %v3550
        %v4194 = vsel %vm4189, %v4077, %v3554
        %v4195 = vsel %vm4189, %v4081, %v3558
        %v4196 = vsel %vm4189, %v4085, %v3562
        %v4197 = vsel %vm4189, %v4089, %v3566
        %v4198 = vsel %vm4189, %v4093, %v3570
        %v4199 = vsel %vm4189, %v4097, %v3574
        %v4200 = vsel %vm4189, %v4101, %v3578
        %v4201 = vsel %vm4189, %v4105, %v3582
        %v4202 = vsel %vm4189, %v4109, %v3586
        %v4203 = vsel %vm4189, %v4113, %v3590
        %v4204 = vsel %vm4189, %v4117, %v3594
        %v4205 = vsel %vm4189, %v4121, %v3598
        %v4206 = vsel %vm4189, %v4125, %v3602
        %v4207 = vsel %vm4189, %v4129, %v3606
        %v4208 = vsel %vm4189, %v4133, %v3610
        %v4209 = vsel %vm4189, %v4137, %v3614
        %v4210 = vsel %vm4189, %v4141, %v3618
        %v4211 = vsel %vm4189, %v4145, %v3622
        %v4212 = vsel %vm4189, %v4149, %v3626
        %v4213 = vsel %vm4189, %v4153, %v3630
        %v4214 = vsel %vm4189, %v4157, %v3634
        %v4215 = vsel %vm4189, %v4161, %v3638
        %v4216 = vsel %vm4189, %v4165, %v3642
        %v4217 = vsel %vm4189, %v4169, %v3646
        %v4218 = vsel %vm4189, %v4173, %v3650
        %v4219 = vsel %vm4189, %v4177, %v3654
        %v4220 = vsel %vm4189, %v4181, %v3658
        %v4221 = vsel %vm4189, %v4185, %v3662
        %vm4222 = vcmask 60416
        %4223 = vst.msk [vmem:[%s402] sm:$0xf] %vm4222, %v4190
        %4224 = vst.msk [vmem:[%s402 + $0x4] sm:$0xf] %vm4222, %v4191
        %4225 = vst.msk [vmem:[%s402 + $0x8] sm:$0xf] %vm4222, %v4192
        %4226 = vst.msk [vmem:[%s402 + $0xc] sm:$0xf] %vm4222, %v4193
        %4227 = vst.msk [vmem:[%s402 + $0x10] sm:$0xf] %vm4222, %v4194
        %4228 = vst.msk [vmem:[%s402 + $0x14] sm:$0xf] %vm4222, %v4195
        %4229 = vst.msk [vmem:[%s402 + $0x18] sm:$0xf] %vm4222, %v4196
        %4230 = vst.msk [vmem:[%s402 + $0x1c] sm:$0xf] %vm4222, %v4197
        %4231 = vst.msk [vmem:[%s402 + $0x20] sm:$0xf] %vm4222, %v4198
        %4232 = vst.msk [vmem:[%s402 + $0x24] sm:$0xf] %vm4222, %v4199
        %4233 = vst.msk [vmem:[%s402 + $0x28] sm:$0xf] %vm4222, %v4200
        %4234 = vst.msk [vmem:[%s402 + $0x2c] sm:$0xf] %vm4222, %v4201
        %4235 = vst.msk [vmem:[%s402 + $0x30] sm:$0xf] %vm4222, %v4202
        %4236 = vst.msk [vmem:[%s402 + $0x34] sm:$0xf] %vm4222, %v4203
        %4237 = vst.msk [vmem:[%s402 + $0x38] sm:$0xf] %vm4222, %v4204
        %4238 = vst.msk [vmem:[%s402 + $0x3c] sm:$0xf] %vm4222, %v4205
        %4239 = vst.msk [vmem:[%s402 + $0x40] sm:$0xf] %vm4222, %v4206
        %4240 = vst.msk [vmem:[%s402 + $0x44] sm:$0xf] %vm4222, %v4207
        %4241 = vst.msk [vmem:[%s402 + $0x48] sm:$0xf] %vm4222, %v4208
        %4242 = vst.msk [vmem:[%s402 + $0x4c] sm:$0xf] %vm4222, %v4209
        %4243 = vst.msk [vmem:[%s402 + $0x50] sm:$0xf] %vm4222, %v4210
        %4244 = vst.msk [vmem:[%s402 + $0x54] sm:$0xf] %vm4222, %v4211
        %4245 = vst.msk [vmem:[%s402 + $0x58] sm:$0xf] %vm4222, %v4212
        %4246 = vst.msk [vmem:[%s402 + $0x5c] sm:$0xf] %vm4222, %v4213
        %4247 = vst.msk [vmem:[%s402 + $0x60] sm:$0xf] %vm4222, %v4214
        %4248 = vst.msk [vmem:[%s402 + $0x64] sm:$0xf] %vm4222, %v4215
        %4249 = vst.msk [vmem:[%s402 + $0x68] sm:$0xf] %vm4222, %v4216
        %4250 = vst.msk [vmem:[%s402 + $0x6c] sm:$0xf] %vm4222, %v4217
        %4251 = vst.msk [vmem:[%s402 + $0x70] sm:$0xf] %vm4222, %v4218
        %4252 = vst.msk [vmem:[%s402 + $0x74] sm:$0xf] %vm4222, %v4219
        %4253 = vst.msk [vmem:[%s402 + $0x78] sm:$0xf] %vm4222, %v4220
        %4254 = vst.msk [vmem:[%s402 + $0x7c] sm:$0xf] %vm4222, %v4221
        %v4257 = vcombine.high %v932, %v932
        %v4259 = vunpack.c.l.s4 1966171168
        %v4260 = vunpack.c.0.s8 %v4259
        %v4261 = vlaneseq
        %v4262 = vshrl.u32 %v4261, 7
        %v4263 = vsub.s32 %v4260, %v4262
        %v4264 = vrot.slane %v932, %v4263
        %v4266 = vunpack.c.l.s4 1966171168
        %v4267 = vunpack.c.0.s8 %v4266
        %v4268 = vlaneseq
        %v4269 = vshrl.u32 %v4268, 7
        %v4270 = vsub.s32 %v4267, %v4269
        %v4271 = vrot.slane %v4257, %v4270
        %v4272 = vcombine.high %v4264, %v4264
        %v4273 = vcombine.high %v4271, %v4271
        %v4275 = vunpack.c.l.s4 1966171168
        %v4276 = vunpack.c.0.s8 %v4275
        %v4277 = vlaneseq
        %v4278 = vshrl.u32 %v4277, 7
        %v4279 = vsub.s32 %v4276, %v4278
        %v4280 = vrot.slane %v4264, %v4279
        %v4282 = vunpack.c.l.s4 1966171168
        %v4283 = vunpack.c.0.s8 %v4282
        %v4284 = vlaneseq
        %v4285 = vshrl.u32 %v4284, 7
        %v4286 = vsub.s32 %v4283, %v4285
        %v4287 = vrot.slane %v4271, %v4286
        %v4289 = vunpack.c.l.s4 1966171168
        %v4290 = vunpack.c.0.s8 %v4289
        %v4291 = vlaneseq
        %v4292 = vshrl.u32 %v4291, 7
        %v4293 = vsub.s32 %v4290, %v4292
        %v4294 = vrot.slane %v4272, %v4293
        %v4296 = vunpack.c.l.s4 1966171168
        %v4297 = vunpack.c.0.s8 %v4296
        %v4298 = vlaneseq
        %v4299 = vshrl.u32 %v4298, 7
        %v4300 = vsub.s32 %v4297, %v4299
        %v4301 = vrot.slane %v4273, %v4300
        %v4302 = vcombine.high %v4280, %v4280
        %v4303 = vcombine.high %v4287, %v4287
        %v4304 = vcombine.high %v4294, %v4294
        %v4305 = vcombine.high %v4301, %v4301
        %v4306 = vcombine.high %v933, %v933
        %v4308 = vunpack.c.l.s4 1966171168
        %v4309 = vunpack.c.0.s8 %v4308
        %v4310 = vlaneseq
        %v4311 = vshrl.u32 %v4310, 7
        %v4312 = vsub.s32 %v4309, %v4311
        %v4313 = vrot.slane %v933, %v4312
        %v4315 = vunpack.c.l.s4 1966171168
        %v4316 = vunpack.c.0.s8 %v4315
        %v4317 = vlaneseq
        %v4318 = vshrl.u32 %v4317, 7
        %v4319 = vsub.s32 %v4316, %v4318
        %v4320 = vrot.slane %v4306, %v4319
        %v4321 = vcombine.high %v4313, %v4313
        %v4322 = vcombine.high %v4320, %v4320
        %v4324 = vunpack.c.l.s4 1966171168
        %v4325 = vunpack.c.0.s8 %v4324
        %v4326 = vlaneseq
        %v4327 = vshrl.u32 %v4326, 7
        %v4328 = vsub.s32 %v4325, %v4327
        %v4329 = vrot.slane %v4313, %v4328
        %v4331 = vunpack.c.l.s4 1966171168
        %v4332 = vunpack.c.0.s8 %v4331
        %v4333 = vlaneseq
        %v4334 = vshrl.u32 %v4333, 7
        %v4335 = vsub.s32 %v4332, %v4334
        %v4336 = vrot.slane %v4320, %v4335
        %v4338 = vunpack.c.l.s4 1966171168
        %v4339 = vunpack.c.0.s8 %v4338
        %v4340 = vlaneseq
        %v4341 = vshrl.u32 %v4340, 7
        %v4342 = vsub.s32 %v4339, %v4341
        %v4343 = vrot.slane %v4321, %v4342
        %v4345 = vunpack.c.l.s4 1966171168
        %v4346 = vunpack.c.0.s8 %v4345
        %v4347 = vlaneseq
        %v4348 = vshrl.u32 %v4347, 7
        %v4349 = vsub.s32 %v4346, %v4348
        %v4350 = vrot.slane %v4322, %v4349
        %v4351 = vcombine.high %v4329, %v4329
        %v4352 = vcombine.high %v4336, %v4336
        %v4353 = vcombine.high %v4343, %v4343
        %v4354 = vcombine.high %v4350, %v4350
        %v4355 = vunpack.i.l.s16 %v4280
        %v4356 = vunpack.i.h.s16 %v4280
        %v4357 = vunpack.i.l.s16 %v4294
        %v4358 = vunpack.i.h.s16 %v4294
        %v4359 = vunpack.i.l.s16 %v4302
        %v4360 = vunpack.i.h.s16 %v4302
        %v4361 = vunpack.i.l.s16 %v4304
        %v4362 = vunpack.i.h.s16 %v4304
        %v4363 = vunpack.i.l.s16 %v4287
        %v4364 = vunpack.i.h.s16 %v4287
        %v4365 = vunpack.i.l.s16 %v4301
        %v4366 = vunpack.i.h.s16 %v4301
        %v4367 = vunpack.i.l.s16 %v4303
        %v4368 = vunpack.i.h.s16 %v4303
        %v4369 = vunpack.i.l.s16 %v4305
        %v4370 = vunpack.i.h.s16 %v4305
        %v4371 = vunpack.i.l.s16 %v4329
        %v4372 = vunpack.i.h.s16 %v4329
        %v4373 = vunpack.i.l.s16 %v4343
        %v4374 = vunpack.i.h.s16 %v4343
        %v4375 = vunpack.i.l.s16 %v4351
        %v4376 = vunpack.i.h.s16 %v4351
        %v4377 = vunpack.i.l.s16 %v4353
        %v4378 = vunpack.i.h.s16 %v4353
        %v4379 = vunpack.i.l.s16 %v4336
        %v4380 = vunpack.i.h.s16 %v4336
        %v4381 = vunpack.i.l.s16 %v4350
        %v4382 = vunpack.i.h.s16 %v4350
        %v4383 = vunpack.i.l.s16 %v4352
        %v4384 = vunpack.i.h.s16 %v4352
        %v4385 = vunpack.i.l.s16 %v4354
        %v4386 = vunpack.i.h.s16 %v4354
        %v4389 = vcombine.high %v969, %v969
        %v4391 = vunpack.c.l.s4 1966171168
        %v4392 = vunpack.c.0.s8 %v4391
        %v4393 = vlaneseq
        %v4394 = vshrl.u32 %v4393, 7
        %v4395 = vsub.s32 %v4392, %v4394
        %v4396 = vrot.slane %v969, %v4395
        %v4398 = vunpack.c.l.s4 1966171168
        %v4399 = vunpack.c.0.s8 %v4398
        %v4400 = vlaneseq
        %v4401 = vshrl.u32 %v4400, 7
        %v4402 = vsub.s32 %v4399, %v4401
        %v4403 = vrot.slane %v4389, %v4402
        %v4404 = vcombine.high %v4396, %v4396
        %v4405 = vcombine.high %v4403, %v4403
        %v4407 = vunpack.c.l.s4 1966171168
        %v4408 = vunpack.c.0.s8 %v4407
        %v4409 = vlaneseq
        %v4410 = vshrl.u32 %v4409, 7
        %v4411 = vsub.s32 %v4408, %v4410
        %v4412 = vrot.slane %v4396, %v4411
        %v4414 = vunpack.c.l.s4 1966171168
        %v4415 = vunpack.c.0.s8 %v4414
        %v4416 = vlaneseq
        %v4417 = vshrl.u32 %v4416, 7
        %v4418 = vsub.s32 %v4415, %v4417
        %v4419 = vrot.slane %v4403, %v4418
        %v4421 = vunpack.c.l.s4 1966171168
        %v4422 = vunpack.c.0.s8 %v4421
        %v4423 = vlaneseq
        %v4424 = vshrl.u32 %v4423, 7
        %v4425 = vsub.s32 %v4422, %v4424
        %v4426 = vrot.slane %v4404, %v4425
        %v4428 = vunpack.c.l.s4 1966171168
        %v4429 = vunpack.c.0.s8 %v4428
        %v4430 = vlaneseq
        %v4431 = vshrl.u32 %v4430, 7
        %v4432 = vsub.s32 %v4429, %v4431
        %v4433 = vrot.slane %v4405, %v4432
        %v4434 = vcombine.high %v4412, %v4412
        %v4435 = vcombine.high %v4419, %v4419
        %v4436 = vcombine.high %v4426, %v4426
        %v4437 = vcombine.high %v4433, %v4433
        %v4438 = vcombine.high %v970, %v970
        %v4440 = vunpack.c.l.s4 1966171168
        %v4441 = vunpack.c.0.s8 %v4440
        %v4442 = vlaneseq
        %v4443 = vshrl.u32 %v4442, 7
        %v4444 = vsub.s32 %v4441, %v4443
        %v4445 = vrot.slane %v970, %v4444
        %v4447 = vunpack.c.l.s4 1966171168
        %v4448 = vunpack.c.0.s8 %v4447
        %v4449 = vlaneseq
        %v4450 = vshrl.u32 %v4449, 7
        %v4451 = vsub.s32 %v4448, %v4450
        %v4452 = vrot.slane %v4438, %v4451
        %v4453 = vcombine.high %v4445, %v4445
        %v4454 = vcombine.high %v4452, %v4452
        %v4456 = vunpack.c.l.s4 1966171168
        %v4457 = vunpack.c.0.s8 %v4456
        %v4458 = vlaneseq
        %v4459 = vshrl.u32 %v4458, 7
        %v4460 = vsub.s32 %v4457, %v4459
        %v4461 = vrot.slane %v4445, %v4460
        %v4463 = vunpack.c.l.s4 1966171168
        %v4464 = vunpack.c.0.s8 %v4463
        %v4465 = vlaneseq
        %v4466 = vshrl.u32 %v4465, 7
        %v4467 = vsub.s32 %v4464, %v4466
        %v4468 = vrot.slane %v4452, %v4467
        %v4470 = vunpack.c.l.s4 1966171168
        %v4471 = vunpack.c.0.s8 %v4470
        %v4472 = vlaneseq
        %v4473 = vshrl.u32 %v4472, 7
        %v4474 = vsub.s32 %v4471, %v4473
        %v4475 = vrot.slane %v4453, %v4474
        %v4477 = vunpack.c.l.s4 1966171168
        %v4478 = vunpack.c.0.s8 %v4477
        %v4479 = vlaneseq
        %v4480 = vshrl.u32 %v4479, 7
        %v4481 = vsub.s32 %v4478, %v4480
        %v4482 = vrot.slane %v4454, %v4481
        %v4483 = vcombine.high %v4461, %v4461
        %v4484 = vcombine.high %v4468, %v4468
        %v4485 = vcombine.high %v4475, %v4475
        %v4486 = vcombine.high %v4482, %v4482
        %v4487 = vunpack.i.l.s16 %v4412
        %v4488 = vunpack.i.h.s16 %v4412
        %v4489 = vunpack.i.l.s16 %v4426
        %v4490 = vunpack.i.h.s16 %v4426
        %v4491 = vunpack.i.l.s16 %v4434
        %v4492 = vunpack.i.h.s16 %v4434
        %v4493 = vunpack.i.l.s16 %v4436
        %v4494 = vunpack.i.h.s16 %v4436
        %v4495 = vunpack.i.l.s16 %v4419
        %v4496 = vunpack.i.h.s16 %v4419
        %v4497 = vunpack.i.l.s16 %v4433
        %v4498 = vunpack.i.h.s16 %v4433
        %v4499 = vunpack.i.l.s16 %v4435
        %v4500 = vunpack.i.h.s16 %v4435
        %v4501 = vunpack.i.l.s16 %v4437
        %v4502 = vunpack.i.h.s16 %v4437
        %v4503 = vunpack.i.l.s16 %v4461
        %v4504 = vunpack.i.h.s16 %v4461
        %v4505 = vunpack.i.l.s16 %v4475
        %v4506 = vunpack.i.h.s16 %v4475
        %v4507 = vunpack.i.l.s16 %v4483
        %v4508 = vunpack.i.h.s16 %v4483
        %v4509 = vunpack.i.l.s16 %v4485
        %v4510 = vunpack.i.h.s16 %v4485
        %v4511 = vunpack.i.l.s16 %v4468
        %v4512 = vunpack.i.h.s16 %v4468
        %v4513 = vunpack.i.l.s16 %v4482
        %v4514 = vunpack.i.h.s16 %v4482
        %v4515 = vunpack.i.l.s16 %v4484
        %v4516 = vunpack.i.h.s16 %v4484
        %v4517 = vunpack.i.l.s16 %v4486
        %v4518 = vunpack.i.h.s16 %v4486
        %v4521 = vcombine.high %v1006, %v1006
        %v4523 = vunpack.c.l.s4 1966171168
        %v4524 = vunpack.c.0.s8 %v4523
        %v4525 = vlaneseq
        %v4526 = vshrl.u32 %v4525, 7
        %v4527 = vsub.s32 %v4524, %v4526
        %v4528 = vrot.slane %v1006, %v4527
        %v4530 = vunpack.c.l.s4 1966171168
        %v4531 = vunpack.c.0.s8 %v4530
        %v4532 = vlaneseq
        %v4533 = vshrl.u32 %v4532, 7
        %v4534 = vsub.s32 %v4531, %v4533
        %v4535 = vrot.slane %v4521, %v4534
        %v4536 = vcombine.high %v4528, %v4528
        %v4537 = vcombine.high %v4535, %v4535
        %v4539 = vunpack.c.l.s4 1966171168
        %v4540 = vunpack.c.0.s8 %v4539
        %v4541 = vlaneseq
        %v4542 = vshrl.u32 %v4541, 7
        %v4543 = vsub.s32 %v4540, %v4542
        %v4544 = vrot.slane %v4528, %v4543
        %v4546 = vunpack.c.l.s4 1966171168
        %v4547 = vunpack.c.0.s8 %v4546
        %v4548 = vlaneseq
        %v4549 = vshrl.u32 %v4548, 7
        %v4550 = vsub.s32 %v4547, %v4549
        %v4551 = vrot.slane %v4535, %v4550
        %v4553 = vunpack.c.l.s4 1966171168
        %v4554 = vunpack.c.0.s8 %v4553
        %v4555 = vlaneseq
        %v4556 = vshrl.u32 %v4555, 7
        %v4557 = vsub.s32 %v4554, %v4556
        %v4558 = vrot.slane %v4536, %v4557
        %v4560 = vunpack.c.l.s4 1966171168
        %v4561 = vunpack.c.0.s8 %v4560
        %v4562 = vlaneseq
        %v4563 = vshrl.u32 %v4562, 7
        %v4564 = vsub.s32 %v4561, %v4563
        %v4565 = vrot.slane %v4537, %v4564
        %v4566 = vcombine.high %v4544, %v4544
        %v4567 = vcombine.high %v4551, %v4551
        %v4568 = vcombine.high %v4558, %v4558
        %v4569 = vcombine.high %v4565, %v4565
        %v4570 = vcombine.high %v1007, %v1007
        %v4572 = vunpack.c.l.s4 1966171168
        %v4573 = vunpack.c.0.s8 %v4572
        %v4574 = vlaneseq
        %v4575 = vshrl.u32 %v4574, 7
        %v4576 = vsub.s32 %v4573, %v4575
        %v4577 = vrot.slane %v1007, %v4576
        %v4579 = vunpack.c.l.s4 1966171168
        %v4580 = vunpack.c.0.s8 %v4579
        %v4581 = vlaneseq
        %v4582 = vshrl.u32 %v4581, 7
        %v4583 = vsub.s32 %v4580, %v4582
        %v4584 = vrot.slane %v4570, %v4583
        %v4585 = vcombine.high %v4577, %v4577
        %v4586 = vcombine.high %v4584, %v4584
        %v4588 = vunpack.c.l.s4 1966171168
        %v4589 = vunpack.c.0.s8 %v4588
        %v4590 = vlaneseq
        %v4591 = vshrl.u32 %v4590, 7
        %v4592 = vsub.s32 %v4589, %v4591
        %v4593 = vrot.slane %v4577, %v4592
        %v4595 = vunpack.c.l.s4 1966171168
        %v4596 = vunpack.c.0.s8 %v4595
        %v4597 = vlaneseq
        %v4598 = vshrl.u32 %v4597, 7
        %v4599 = vsub.s32 %v4596, %v4598
        %v4600 = vrot.slane %v4584, %v4599
        %v4602 = vunpack.c.l.s4 1966171168
        %v4603 = vunpack.c.0.s8 %v4602
        %v4604 = vlaneseq
        %v4605 = vshrl.u32 %v4604, 7
        %v4606 = vsub.s32 %v4603, %v4605
        %v4607 = vrot.slane %v4585, %v4606
        %v4609 = vunpack.c.l.s4 1966171168
        %v4610 = vunpack.c.0.s8 %v4609
        %v4611 = vlaneseq
        %v4612 = vshrl.u32 %v4611, 7
        %v4613 = vsub.s32 %v4610, %v4612
        %v4614 = vrot.slane %v4586, %v4613
        %v4615 = vcombine.high %v4593, %v4593
        %v4616 = vcombine.high %v4600, %v4600
        %v4617 = vcombine.high %v4607, %v4607
        %v4618 = vcombine.high %v4614, %v4614
        %v4619 = vunpack.i.l.s16 %v4544
        %v4620 = vunpack.i.h.s16 %v4544
        %v4621 = vunpack.i.l.s16 %v4558
        %v4622 = vunpack.i.h.s16 %v4558
        %v4623 = vunpack.i.l.s16 %v4566
        %v4624 = vunpack.i.h.s16 %v4566
        %v4625 = vunpack.i.l.s16 %v4568
        %v4626 = vunpack.i.h.s16 %v4568
        %v4627 = vunpack.i.l.s16 %v4551
        %v4628 = vunpack.i.h.s16 %v4551
        %v4629 = vunpack.i.l.s16 %v4565
        %v4630 = vunpack.i.h.s16 %v4565
        %v4631 = vunpack.i.l.s16 %v4567
        %v4632 = vunpack.i.h.s16 %v4567
        %v4633 = vunpack.i.l.s16 %v4569
        %v4634 = vunpack.i.h.s16 %v4569
        %v4635 = vunpack.i.l.s16 %v4593
        %v4636 = vunpack.i.h.s16 %v4593
        %v4637 = vunpack.i.l.s16 %v4607
        %v4638 = vunpack.i.h.s16 %v4607
        %v4639 = vunpack.i.l.s16 %v4615
        %v4640 = vunpack.i.h.s16 %v4615
        %v4641 = vunpack.i.l.s16 %v4617
        %v4642 = vunpack.i.h.s16 %v4617
        %v4643 = vunpack.i.l.s16 %v4600
        %v4644 = vunpack.i.h.s16 %v4600
        %v4645 = vunpack.i.l.s16 %v4614
        %v4646 = vunpack.i.h.s16 %v4614
        %v4647 = vunpack.i.l.s16 %v4616
        %v4648 = vunpack.i.h.s16 %v4616
        %v4649 = vunpack.i.l.s16 %v4618
        %v4650 = vunpack.i.h.s16 %v4618
        %v4653 = vcombine.high %v1043, %v1043
        %v4655 = vunpack.c.l.s4 1966171168
        %v4656 = vunpack.c.0.s8 %v4655
        %v4657 = vlaneseq
        %v4658 = vshrl.u32 %v4657, 7
        %v4659 = vsub.s32 %v4656, %v4658
        %v4660 = vrot.slane %v1043, %v4659
        %v4662 = vunpack.c.l.s4 1966171168
        %v4663 = vunpack.c.0.s8 %v4662
        %v4664 = vlaneseq
        %v4665 = vshrl.u32 %v4664, 7
        %v4666 = vsub.s32 %v4663, %v4665
        %v4667 = vrot.slane %v4653, %v4666
        %v4668 = vcombine.high %v4660, %v4660
        %v4669 = vcombine.high %v4667, %v4667
        %v4671 = vunpack.c.l.s4 1966171168
        %v4672 = vunpack.c.0.s8 %v4671
        %v4673 = vlaneseq
        %v4674 = vshrl.u32 %v4673, 7
        %v4675 = vsub.s32 %v4672, %v4674
        %v4676 = vrot.slane %v4660, %v4675
        %v4678 = vunpack.c.l.s4 1966171168
        %v4679 = vunpack.c.0.s8 %v4678
        %v4680 = vlaneseq
        %v4681 = vshrl.u32 %v4680, 7
        %v4682 = vsub.s32 %v4679, %v4681
        %v4683 = vrot.slane %v4667, %v4682
        %v4685 = vunpack.c.l.s4 1966171168
        %v4686 = vunpack.c.0.s8 %v4685
        %v4687 = vlaneseq
        %v4688 = vshrl.u32 %v4687, 7
        %v4689 = vsub.s32 %v4686, %v4688
        %v4690 = vrot.slane %v4668, %v4689
        %v4692 = vunpack.c.l.s4 1966171168
        %v4693 = vunpack.c.0.s8 %v4692
        %v4694 = vlaneseq
        %v4695 = vshrl.u32 %v4694, 7
        %v4696 = vsub.s32 %v4693, %v4695
        %v4697 = vrot.slane %v4669, %v4696
        %v4698 = vcombine.high %v4676, %v4676
        %v4699 = vcombine.high %v4683, %v4683
        %v4700 = vcombine.high %v4690, %v4690
        %v4701 = vcombine.high %v4697, %v4697
        %v4702 = vcombine.high %v1044, %v1044
        %v4704 = vunpack.c.l.s4 1966171168
        %v4705 = vunpack.c.0.s8 %v4704
        %v4706 = vlaneseq
        %v4707 = vshrl.u32 %v4706, 7
        %v4708 = vsub.s32 %v4705, %v4707
        %v4709 = vrot.slane %v1044, %v4708
        %v4711 = vunpack.c.l.s4 1966171168
        %v4712 = vunpack.c.0.s8 %v4711
        %v4713 = vlaneseq
        %v4714 = vshrl.u32 %v4713, 7
        %v4715 = vsub.s32 %v4712, %v4714
        %v4716 = vrot.slane %v4702, %v4715
        %v4717 = vcombine.high %v4709, %v4709
        %v4718 = vcombine.high %v4716, %v4716
        %v4720 = vunpack.c.l.s4 1966171168
        %v4721 = vunpack.c.0.s8 %v4720
        %v4722 = vlaneseq
        %v4723 = vshrl.u32 %v4722, 7
        %v4724 = vsub.s32 %v4721, %v4723
        %v4725 = vrot.slane %v4709, %v4724
        %v4727 = vunpack.c.l.s4 1966171168
        %v4728 = vunpack.c.0.s8 %v4727
        %v4729 = vlaneseq
        %v4730 = vshrl.u32 %v4729, 7
        %v4731 = vsub.s32 %v4728, %v4730
        %v4732 = vrot.slane %v4716, %v4731
        %v4734 = vunpack.c.l.s4 1966171168
        %v4735 = vunpack.c.0.s8 %v4734
        %v4736 = vlaneseq
        %v4737 = vshrl.u32 %v4736, 7
        %v4738 = vsub.s32 %v4735, %v4737
        %v4739 = vrot.slane %v4717, %v4738
        %v4741 = vunpack.c.l.s4 1966171168
        %v4742 = vunpack.c.0.s8 %v4741
        %v4743 = vlaneseq
        %v4744 = vshrl.u32 %v4743, 7
        %v4745 = vsub.s32 %v4742, %v4744
        %v4746 = vrot.slane %v4718, %v4745
        %v4747 = vcombine.high %v4725, %v4725
        %v4748 = vcombine.high %v4732, %v4732
        %v4749 = vcombine.high %v4739, %v4739
        %v4750 = vcombine.high %v4746, %v4746
        %v4751 = vunpack.i.l.s16 %v4676
        %v4752 = vunpack.i.h.s16 %v4676
        %v4753 = vunpack.i.l.s16 %v4690
        %v4754 = vunpack.i.h.s16 %v4690
        %v4755 = vunpack.i.l.s16 %v4698
        %v4756 = vunpack.i.h.s16 %v4698
        %v4757 = vunpack.i.l.s16 %v4700
        %v4758 = vunpack.i.h.s16 %v4700
        %v4759 = vunpack.i.l.s16 %v4683
        %v4760 = vunpack.i.h.s16 %v4683
        %v4761 = vunpack.i.l.s16 %v4697
        %v4762 = vunpack.i.h.s16 %v4697
        %v4763 = vunpack.i.l.s16 %v4699
        %v4764 = vunpack.i.h.s16 %v4699
        %v4765 = vunpack.i.l.s16 %v4701
        %v4766 = vunpack.i.h.s16 %v4701
        %v4767 = vunpack.i.l.s16 %v4725
        %v4768 = vunpack.i.h.s16 %v4725
        %v4769 = vunpack.i.l.s16 %v4739
        %v4770 = vunpack.i.h.s16 %v4739
        %v4771 = vunpack.i.l.s16 %v4747
        %v4772 = vunpack.i.h.s16 %v4747
        %v4773 = vunpack.i.l.s16 %v4749
        %v4774 = vunpack.i.h.s16 %v4749
        %v4775 = vunpack.i.l.s16 %v4732
        %v4776 = vunpack.i.h.s16 %v4732
        %v4777 = vunpack.i.l.s16 %v4746
        %v4778 = vunpack.i.h.s16 %v4746
        %v4779 = vunpack.i.l.s16 %v4748
        %v4780 = vunpack.i.h.s16 %v4748
        %v4781 = vunpack.i.l.s16 %v4750
        %v4782 = vunpack.i.h.s16 %v4750
        %v4785 = vcombine.high %v1080, %v1080
        %v4787 = vunpack.c.l.s4 1966171168
        %v4788 = vunpack.c.0.s8 %v4787
        %v4789 = vlaneseq
        %v4790 = vshrl.u32 %v4789, 7
        %v4791 = vsub.s32 %v4788, %v4790
        %v4792 = vrot.slane %v1080, %v4791
        %v4794 = vunpack.c.l.s4 1966171168
        %v4795 = vunpack.c.0.s8 %v4794
        %v4796 = vlaneseq
        %v4797 = vshrl.u32 %v4796, 7
        %v4798 = vsub.s32 %v4795, %v4797
        %v4799 = vrot.slane %v4785, %v4798
        %v4800 = vcombine.high %v4792, %v4792
        %v4801 = vcombine.high %v4799, %v4799
        %v4803 = vunpack.c.l.s4 1966171168
        %v4804 = vunpack.c.0.s8 %v4803
        %v4805 = vlaneseq
        %v4806 = vshrl.u32 %v4805, 7
        %v4807 = vsub.s32 %v4804, %v4806
        %v4808 = vrot.slane %v4792, %v4807
        %v4810 = vunpack.c.l.s4 1966171168
        %v4811 = vunpack.c.0.s8 %v4810
        %v4812 = vlaneseq
        %v4813 = vshrl.u32 %v4812, 7
        %v4814 = vsub.s32 %v4811, %v4813
        %v4815 = vrot.slane %v4799, %v4814
        %v4817 = vunpack.c.l.s4 1966171168
        %v4818 = vunpack.c.0.s8 %v4817
        %v4819 = vlaneseq
        %v4820 = vshrl.u32 %v4819, 7
        %v4821 = vsub.s32 %v4818, %v4820
        %v4822 = vrot.slane %v4800, %v4821
        %v4824 = vunpack.c.l.s4 1966171168
        %v4825 = vunpack.c.0.s8 %v4824
        %v4826 = vlaneseq
        %v4827 = vshrl.u32 %v4826, 7
        %v4828 = vsub.s32 %v4825, %v4827
        %v4829 = vrot.slane %v4801, %v4828
        %v4830 = vcombine.high %v4808, %v4808
        %v4831 = vcombine.high %v4815, %v4815
        %v4832 = vcombine.high %v4822, %v4822
        %v4833 = vcombine.high %v4829, %v4829
        %v4834 = vcombine.high %v1081, %v1081
        %v4836 = vunpack.c.l.s4 1966171168
        %v4837 = vunpack.c.0.s8 %v4836
        %v4838 = vlaneseq
        %v4839 = vshrl.u32 %v4838, 7
        %v4840 = vsub.s32 %v4837, %v4839
        %v4841 = vrot.slane %v1081, %v4840
        %v4843 = vunpack.c.l.s4 1966171168
        %v4844 = vunpack.c.0.s8 %v4843
        %v4845 = vlaneseq
        %v4846 = vshrl.u32 %v4845, 7
        %v4847 = vsub.s32 %v4844, %v4846
        %v4848 = vrot.slane %v4834, %v4847
        %v4849 = vcombine.high %v4841, %v4841
        %v4850 = vcombine.high %v4848, %v4848
        %v4852 = vunpack.c.l.s4 1966171168
        %v4853 = vunpack.c.0.s8 %v4852
        %v4854 = vlaneseq
        %v4855 = vshrl.u32 %v4854, 7
        %v4856 = vsub.s32 %v4853, %v4855
        %v4857 = vrot.slane %v4841, %v4856
        %v4859 = vunpack.c.l.s4 1966171168
        %v4860 = vunpack.c.0.s8 %v4859
        %v4861 = vlaneseq
        %v4862 = vshrl.u32 %v4861, 7
        %v4863 = vsub.s32 %v4860, %v4862
        %v4864 = vrot.slane %v4848, %v4863
        %v4866 = vunpack.c.l.s4 1966171168
        %v4867 = vunpack.c.0.s8 %v4866
        %v4868 = vlaneseq
        %v4869 = vshrl.u32 %v4868, 7
        %v4870 = vsub.s32 %v4867, %v4869
        %v4871 = vrot.slane %v4849, %v4870
        %v4873 = vunpack.c.l.s4 1966171168
        %v4874 = vunpack.c.0.s8 %v4873
        %v4875 = vlaneseq
        %v4876 = vshrl.u32 %v4875, 7
        %v4877 = vsub.s32 %v4874, %v4876
        %v4878 = vrot.slane %v4850, %v4877
        %v4879 = vcombine.high %v4857, %v4857
        %v4880 = vcombine.high %v4864, %v4864
        %v4881 = vcombine.high %v4871, %v4871
        %v4882 = vcombine.high %v4878, %v4878
        %v4883 = vunpack.i.l.s16 %v4808
        %v4884 = vunpack.i.h.s16 %v4808
        %v4885 = vunpack.i.l.s16 %v4822
        %v4886 = vunpack.i.h.s16 %v4822
        %v4887 = vunpack.i.l.s16 %v4830
        %v4888 = vunpack.i.h.s16 %v4830
        %v4889 = vunpack.i.l.s16 %v4832
        %v4890 = vunpack.i.h.s16 %v4832
        %v4891 = vunpack.i.l.s16 %v4815
        %v4892 = vunpack.i.h.s16 %v4815
        %v4893 = vunpack.i.l.s16 %v4829
        %v4894 = vunpack.i.h.s16 %v4829
        %v4895 = vunpack.i.l.s16 %v4831
        %v4896 = vunpack.i.h.s16 %v4831
        %v4897 = vunpack.i.l.s16 %v4833
        %v4898 = vunpack.i.h.s16 %v4833
        %v4899 = vunpack.i.l.s16 %v4857
        %v4900 = vunpack.i.h.s16 %v4857
        %v4901 = vunpack.i.l.s16 %v4871
        %v4902 = vunpack.i.h.s16 %v4871
        %v4903 = vunpack.i.l.s16 %v4879
        %v4904 = vunpack.i.h.s16 %v4879
        %v4905 = vunpack.i.l.s16 %v4881
        %v4906 = vunpack.i.h.s16 %v4881
        %v4907 = vunpack.i.l.s16 %v4864
        %v4908 = vunpack.i.h.s16 %v4864
        %v4909 = vunpack.i.l.s16 %v4878
        %v4910 = vunpack.i.h.s16 %v4878
        %v4911 = vunpack.i.l.s16 %v4880
        %v4912 = vunpack.i.h.s16 %v4880
        %v4913 = vunpack.i.l.s16 %v4882
        %v4914 = vunpack.i.h.s16 %v4882
        %v4917 = vcombine.high %v1117, %v1117
        %v4919 = vunpack.c.l.s4 1966171168
        %v4920 = vunpack.c.0.s8 %v4919
        %v4921 = vlaneseq
        %v4922 = vshrl.u32 %v4921, 7
        %v4923 = vsub.s32 %v4920, %v4922
        %v4924 = vrot.slane %v1117, %v4923
        %v4926 = vunpack.c.l.s4 1966171168
        %v4927 = vunpack.c.0.s8 %v4926
        %v4928 = vlaneseq
        %v4929 = vshrl.u32 %v4928, 7
        %v4930 = vsub.s32 %v4927, %v4929
        %v4931 = vrot.slane %v4917, %v4930
        %v4932 = vcombine.high %v4924, %v4924
        %v4933 = vcombine.high %v4931, %v4931
        %v4935 = vunpack.c.l.s4 1966171168
        %v4936 = vunpack.c.0.s8 %v4935
        %v4937 = vlaneseq
        %v4938 = vshrl.u32 %v4937, 7
        %v4939 = vsub.s32 %v4936, %v4938
        %v4940 = vrot.slane %v4924, %v4939
        %v4942 = vunpack.c.l.s4 1966171168
        %v4943 = vunpack.c.0.s8 %v4942
        %v4944 = vlaneseq
        %v4945 = vshrl.u32 %v4944, 7
        %v4946 = vsub.s32 %v4943, %v4945
        %v4947 = vrot.slane %v4931, %v4946
        %v4949 = vunpack.c.l.s4 1966171168
        %v4950 = vunpack.c.0.s8 %v4949
        %v4951 = vlaneseq
        %v4952 = vshrl.u32 %v4951, 7
        %v4953 = vsub.s32 %v4950, %v4952
        %v4954 = vrot.slane %v4932, %v4953
        %v4956 = vunpack.c.l.s4 1966171168
        %v4957 = vunpack.c.0.s8 %v4956
        %v4958 = vlaneseq
        %v4959 = vshrl.u32 %v4958, 7
        %v4960 = vsub.s32 %v4957, %v4959
        %v4961 = vrot.slane %v4933, %v4960
        %v4962 = vcombine.high %v4940, %v4940
        %v4963 = vcombine.high %v4947, %v4947
        %v4964 = vcombine.high %v4954, %v4954
        %v4965 = vcombine.high %v4961, %v4961
        %v4966 = vcombine.high %v1118, %v1118
        %v4968 = vunpack.c.l.s4 1966171168
        %v4969 = vunpack.c.0.s8 %v4968
        %v4970 = vlaneseq
        %v4971 = vshrl.u32 %v4970, 7
        %v4972 = vsub.s32 %v4969, %v4971
        %v4973 = vrot.slane %v1118, %v4972
        %v4975 = vunpack.c.l.s4 1966171168
        %v4976 = vunpack.c.0.s8 %v4975
        %v4977 = vlaneseq
        %v4978 = vshrl.u32 %v4977, 7
        %v4979 = vsub.s32 %v4976, %v4978
        %v4980 = vrot.slane %v4966, %v4979
        %v4981 = vcombine.high %v4973, %v4973
        %v4982 = vcombine.high %v4980, %v4980
        %v4984 = vunpack.c.l.s4 1966171168
        %v4985 = vunpack.c.0.s8 %v4984
        %v4986 = vlaneseq
        %v4987 = vshrl.u32 %v4986, 7
        %v4988 = vsub.s32 %v4985, %v4987
        %v4989 = vrot.slane %v4973, %v4988
        %v4991 = vunpack.c.l.s4 1966171168
        %v4992 = vunpack.c.0.s8 %v4991
        %v4993 = vlaneseq
        %v4994 = vshrl.u32 %v4993, 7
        %v4995 = vsub.s32 %v4992, %v4994
        %v4996 = vrot.slane %v4980, %v4995
        %v4998 = vunpack.c.l.s4 1966171168
        %v4999 = vunpack.c.0.s8 %v4998
        %v5000 = vlaneseq
        %v5001 = vshrl.u32 %v5000, 7
        %v5002 = vsub.s32 %v4999, %v5001
        %v5003 = vrot.slane %v4981, %v5002
        %v5005 = vunpack.c.l.s4 1966171168
        %v5006 = vunpack.c.0.s8 %v5005
        %v5007 = vlaneseq
        %v5008 = vshrl.u32 %v5007, 7
        %v5009 = vsub.s32 %v5006, %v5008
        %v5010 = vrot.slane %v4982, %v5009
        %v5011 = vcombine.high %v4989, %v4989
        %v5012 = vcombine.high %v4996, %v4996
        %v5013 = vcombine.high %v5003, %v5003
        %v5014 = vcombine.high %v5010, %v5010
        %v5015 = vunpack.i.l.s16 %v4940
        %v5016 = vunpack.i.h.s16 %v4940
        %v5017 = vunpack.i.l.s16 %v4954
        %v5018 = vunpack.i.h.s16 %v4954
        %v5019 = vunpack.i.l.s16 %v4962
        %v5020 = vunpack.i.h.s16 %v4962
        %v5021 = vunpack.i.l.s16 %v4964
        %v5022 = vunpack.i.h.s16 %v4964
        %v5023 = vunpack.i.l.s16 %v4947
        %v5024 = vunpack.i.h.s16 %v4947
        %v5025 = vunpack.i.l.s16 %v4961
        %v5026 = vunpack.i.h.s16 %v4961
        %v5027 = vunpack.i.l.s16 %v4963
        %v5028 = vunpack.i.h.s16 %v4963
        %v5029 = vunpack.i.l.s16 %v4965
        %v5030 = vunpack.i.h.s16 %v4965
        %v5031 = vunpack.i.l.s16 %v4989
        %v5032 = vunpack.i.h.s16 %v4989
        %v5033 = vunpack.i.l.s16 %v5003
        %v5034 = vunpack.i.h.s16 %v5003
        %v5035 = vunpack.i.l.s16 %v5011
        %v5036 = vunpack.i.h.s16 %v5011
        %v5037 = vunpack.i.l.s16 %v5013
        %v5038 = vunpack.i.h.s16 %v5013
        %v5039 = vunpack.i.l.s16 %v4996
        %v5040 = vunpack.i.h.s16 %v4996
        %v5041 = vunpack.i.l.s16 %v5010
        %v5042 = vunpack.i.h.s16 %v5010
        %v5043 = vunpack.i.l.s16 %v5012
        %v5044 = vunpack.i.h.s16 %v5012
        %v5045 = vunpack.i.l.s16 %v5014
        %v5046 = vunpack.i.h.s16 %v5014
        %v5049 = vcombine.high %v1154, %v1154
        %v5051 = vunpack.c.l.s4 1966171168
        %v5052 = vunpack.c.0.s8 %v5051
        %v5053 = vlaneseq
        %v5054 = vshrl.u32 %v5053, 7
        %v5055 = vsub.s32 %v5052, %v5054
        %v5056 = vrot.slane %v1154, %v5055
        %v5058 = vunpack.c.l.s4 1966171168
        %v5059 = vunpack.c.0.s8 %v5058
        %v5060 = vlaneseq
        %v5061 = vshrl.u32 %v5060, 7
        %v5062 = vsub.s32 %v5059, %v5061
        %v5063 = vrot.slane %v5049, %v5062
        %v5064 = vcombine.high %v5056, %v5056
        %v5065 = vcombine.high %v5063, %v5063
        %v5067 = vunpack.c.l.s4 1966171168
        %v5068 = vunpack.c.0.s8 %v5067
        %v5069 = vlaneseq
        %v5070 = vshrl.u32 %v5069, 7
        %v5071 = vsub.s32 %v5068, %v5070
        %v5072 = vrot.slane %v5056, %v5071
        %v5074 = vunpack.c.l.s4 1966171168
        %v5075 = vunpack.c.0.s8 %v5074
        %v5076 = vlaneseq
        %v5077 = vshrl.u32 %v5076, 7
        %v5078 = vsub.s32 %v5075, %v5077
        %v5079 = vrot.slane %v5063, %v5078
        %v5081 = vunpack.c.l.s4 1966171168
        %v5082 = vunpack.c.0.s8 %v5081
        %v5083 = vlaneseq
        %v5084 = vshrl.u32 %v5083, 7
        %v5085 = vsub.s32 %v5082, %v5084
        %v5086 = vrot.slane %v5064, %v5085
        %v5088 = vunpack.c.l.s4 1966171168
        %v5089 = vunpack.c.0.s8 %v5088
        %v5090 = vlaneseq
        %v5091 = vshrl.u32 %v5090, 7
        %v5092 = vsub.s32 %v5089, %v5091
        %v5093 = vrot.slane %v5065, %v5092
        %v5094 = vcombine.high %v5072, %v5072
        %v5095 = vcombine.high %v5079, %v5079
        %v5096 = vcombine.high %v5086, %v5086
        %v5097 = vcombine.high %v5093, %v5093
        %v5098 = vcombine.high %v1155, %v1155
        %v5100 = vunpack.c.l.s4 1966171168
        %v5101 = vunpack.c.0.s8 %v5100
        %v5102 = vlaneseq
        %v5103 = vshrl.u32 %v5102, 7
        %v5104 = vsub.s32 %v5101, %v5103
        %v5105 = vrot.slane %v1155, %v5104
        %v5107 = vunpack.c.l.s4 1966171168
        %v5108 = vunpack.c.0.s8 %v5107
        %v5109 = vlaneseq
        %v5110 = vshrl.u32 %v5109, 7
        %v5111 = vsub.s32 %v5108, %v5110
        %v5112 = vrot.slane %v5098, %v5111
        %v5113 = vcombine.high %v5105, %v5105
        %v5114 = vcombine.high %v5112, %v5112
        %v5116 = vunpack.c.l.s4 1966171168
        %v5117 = vunpack.c.0.s8 %v5116
        %v5118 = vlaneseq
        %v5119 = vshrl.u32 %v5118, 7
        %v5120 = vsub.s32 %v5117, %v5119
        %v5121 = vrot.slane %v5105, %v5120
        %v5123 = vunpack.c.l.s4 1966171168
        %v5124 = vunpack.c.0.s8 %v5123
        %v5125 = vlaneseq
        %v5126 = vshrl.u32 %v5125, 7
        %v5127 = vsub.s32 %v5124, %v5126
        %v5128 = vrot.slane %v5112, %v5127
        %v5130 = vunpack.c.l.s4 1966171168
        %v5131 = vunpack.c.0.s8 %v5130
        %v5132 = vlaneseq
        %v5133 = vshrl.u32 %v5132, 7
        %v5134 = vsub.s32 %v5131, %v5133
        %v5135 = vrot.slane %v5113, %v5134
        %v5137 = vunpack.c.l.s4 1966171168
        %v5138 = vunpack.c.0.s8 %v5137
        %v5139 = vlaneseq
        %v5140 = vshrl.u32 %v5139, 7
        %v5141 = vsub.s32 %v5138, %v5140
        %v5142 = vrot.slane %v5114, %v5141
        %v5143 = vcombine.high %v5121, %v5121
        %v5144 = vcombine.high %v5128, %v5128
        %v5145 = vcombine.high %v5135, %v5135
        %v5146 = vcombine.high %v5142, %v5142
        %v5147 = vunpack.i.l.s16 %v5072
        %v5148 = vunpack.i.h.s16 %v5072
        %v5149 = vunpack.i.l.s16 %v5086
        %v5150 = vunpack.i.h.s16 %v5086
        %v5151 = vunpack.i.l.s16 %v5094
        %v5152 = vunpack.i.h.s16 %v5094
        %v5153 = vunpack.i.l.s16 %v5096
        %v5154 = vunpack.i.h.s16 %v5096
        %v5155 = vunpack.i.l.s16 %v5079
        %v5156 = vunpack.i.h.s16 %v5079
        %v5157 = vunpack.i.l.s16 %v5093
        %v5158 = vunpack.i.h.s16 %v5093
        %v5159 = vunpack.i.l.s16 %v5095
        %v5160 = vunpack.i.h.s16 %v5095
        %v5161 = vunpack.i.l.s16 %v5097
        %v5162 = vunpack.i.h.s16 %v5097
        %v5163 = vunpack.i.l.s16 %v5121
        %v5164 = vunpack.i.h.s16 %v5121
        %v5165 = vunpack.i.l.s16 %v5135
        %v5166 = vunpack.i.h.s16 %v5135
        %v5167 = vunpack.i.l.s16 %v5143
        %v5168 = vunpack.i.h.s16 %v5143
        %v5169 = vunpack.i.l.s16 %v5145
        %v5170 = vunpack.i.h.s16 %v5145
        %v5171 = vunpack.i.l.s16 %v5128
        %v5172 = vunpack.i.h.s16 %v5128
        %v5173 = vunpack.i.l.s16 %v5142
        %v5174 = vunpack.i.h.s16 %v5142
        %v5175 = vunpack.i.l.s16 %v5144
        %v5176 = vunpack.i.h.s16 %v5144
        %v5177 = vunpack.i.l.s16 %v5146
        %v5178 = vunpack.i.h.s16 %v5146
        %v5181 = vcombine.high %v1191, %v1191
        %v5183 = vunpack.c.l.s4 1966171168
        %v5184 = vunpack.c.0.s8 %v5183
        %v5185 = vlaneseq
        %v5186 = vshrl.u32 %v5185, 7
        %v5187 = vsub.s32 %v5184, %v5186
        %v5188 = vrot.slane %v1191, %v5187
        %v5190 = vunpack.c.l.s4 1966171168
        %v5191 = vunpack.c.0.s8 %v5190
        %v5192 = vlaneseq
        %v5193 = vshrl.u32 %v5192, 7
        %v5194 = vsub.s32 %v5191, %v5193
        %v5195 = vrot.slane %v5181, %v5194
        %v5196 = vcombine.high %v5188, %v5188
        %v5197 = vcombine.high %v5195, %v5195
        %v5199 = vunpack.c.l.s4 1966171168
        %v5200 = vunpack.c.0.s8 %v5199
        %v5201 = vlaneseq
        %v5202 = vshrl.u32 %v5201, 7
        %v5203 = vsub.s32 %v5200, %v5202
        %v5204 = vrot.slane %v5188, %v5203
        %v5206 = vunpack.c.l.s4 1966171168
        %v5207 = vunpack.c.0.s8 %v5206
        %v5208 = vlaneseq
        %v5209 = vshrl.u32 %v5208, 7
        %v5210 = vsub.s32 %v5207, %v5209
        %v5211 = vrot.slane %v5195, %v5210
        %v5213 = vunpack.c.l.s4 1966171168
        %v5214 = vunpack.c.0.s8 %v5213
        %v5215 = vlaneseq
        %v5216 = vshrl.u32 %v5215, 7
        %v5217 = vsub.s32 %v5214, %v5216
        %v5218 = vrot.slane %v5196, %v5217
        %v5220 = vunpack.c.l.s4 1966171168
        %v5221 = vunpack.c.0.s8 %v5220
        %v5222 = vlaneseq
        %v5223 = vshrl.u32 %v5222, 7
        %v5224 = vsub.s32 %v5221, %v5223
        %v5225 = vrot.slane %v5197, %v5224
        %v5226 = vcombine.high %v5204, %v5204
        %v5227 = vcombine.high %v5211, %v5211
        %v5228 = vcombine.high %v5218, %v5218
        %v5229 = vcombine.high %v5225, %v5225
        %v5230 = vcombine.high %v1192, %v1192
        %v5232 = vunpack.c.l.s4 1966171168
        %v5233 = vunpack.c.0.s8 %v5232
        %v5234 = vlaneseq
        %v5235 = vshrl.u32 %v5234, 7
        %v5236 = vsub.s32 %v5233, %v5235
        %v5237 = vrot.slane %v1192, %v5236
        %v5239 = vunpack.c.l.s4 1966171168
        %v5240 = vunpack.c.0.s8 %v5239
        %v5241 = vlaneseq
        %v5242 = vshrl.u32 %v5241, 7
        %v5243 = vsub.s32 %v5240, %v5242
        %v5244 = vrot.slane %v5230, %v5243
        %v5245 = vcombine.high %v5237, %v5237
        %v5246 = vcombine.high %v5244, %v5244
        %v5248 = vunpack.c.l.s4 1966171168
        %v5249 = vunpack.c.0.s8 %v5248
        %v5250 = vlaneseq
        %v5251 = vshrl.u32 %v5250, 7
        %v5252 = vsub.s32 %v5249, %v5251
        %v5253 = vrot.slane %v5237, %v5252
        %v5255 = vunpack.c.l.s4 1966171168
        %v5256 = vunpack.c.0.s8 %v5255
        %v5257 = vlaneseq
        %v5258 = vshrl.u32 %v5257, 7
        %v5259 = vsub.s32 %v5256, %v5258
        %v5260 = vrot.slane %v5244, %v5259
        %v5262 = vunpack.c.l.s4 1966171168
        %v5263 = vunpack.c.0.s8 %v5262
        %v5264 = vlaneseq
        %v5265 = vshrl.u32 %v5264, 7
        %v5266 = vsub.s32 %v5263, %v5265
        %v5267 = vrot.slane %v5245, %v5266
        %v5269 = vunpack.c.l.s4 1966171168
        %v5270 = vunpack.c.0.s8 %v5269
        %v5271 = vlaneseq
        %v5272 = vshrl.u32 %v5271, 7
        %v5273 = vsub.s32 %v5270, %v5272
        %v5274 = vrot.slane %v5246, %v5273
        %v5275 = vcombine.high %v5253, %v5253
        %v5276 = vcombine.high %v5260, %v5260
        %v5277 = vcombine.high %v5267, %v5267
        %v5278 = vcombine.high %v5274, %v5274
        %v5279 = vunpack.i.l.s16 %v5204
        %v5280 = vunpack.i.h.s16 %v5204
        %v5281 = vunpack.i.l.s16 %v5218
        %v5282 = vunpack.i.h.s16 %v5218
        %v5283 = vunpack.i.l.s16 %v5226
        %v5284 = vunpack.i.h.s16 %v5226
        %v5285 = vunpack.i.l.s16 %v5228
        %v5286 = vunpack.i.h.s16 %v5228
        %v5287 = vunpack.i.l.s16 %v5211
        %v5288 = vunpack.i.h.s16 %v5211
        %v5289 = vunpack.i.l.s16 %v5225
        %v5290 = vunpack.i.h.s16 %v5225
        %v5291 = vunpack.i.l.s16 %v5227
        %v5292 = vunpack.i.h.s16 %v5227
        %v5293 = vunpack.i.l.s16 %v5229
        %v5294 = vunpack.i.h.s16 %v5229
        %v5295 = vunpack.i.l.s16 %v5253
        %v5296 = vunpack.i.h.s16 %v5253
        %v5297 = vunpack.i.l.s16 %v5267
        %v5298 = vunpack.i.h.s16 %v5267
        %v5299 = vunpack.i.l.s16 %v5275
        %v5300 = vunpack.i.h.s16 %v5275
        %v5301 = vunpack.i.l.s16 %v5277
        %v5302 = vunpack.i.h.s16 %v5277
        %v5303 = vunpack.i.l.s16 %v5260
        %v5304 = vunpack.i.h.s16 %v5260
        %v5305 = vunpack.i.l.s16 %v5274
        %v5306 = vunpack.i.h.s16 %v5274
        %v5307 = vunpack.i.l.s16 %v5276
        %v5308 = vunpack.i.h.s16 %v5276
        %v5309 = vunpack.i.l.s16 %v5278
        %v5310 = vunpack.i.h.s16 %v5278
        %v5311 = vpack.i.b16 %v4355, %v4355
        %v5312 = vpack.i.b16 %v4356, %v4356
        %v5313 = vpack.i.b16 %v4357, %v4357
        %v5314 = vpack.i.b16 %v4358, %v4358
        %v5315 = vpack.i.b16 %v4359, %v4359
        %v5316 = vpack.i.b16 %v4360, %v4360
        %v5317 = vpack.i.b16 %v4361, %v4361
        %v5318 = vpack.i.b16 %v4362, %v4362
        %v5319 = vpack.i.b16 %v4363, %v4363
        %v5320 = vpack.i.b16 %v4364, %v4364
        %v5321 = vpack.i.b16 %v4365, %v4365
        %v5322 = vpack.i.b16 %v4366, %v4366
        %v5323 = vpack.i.b16 %v4367, %v4367
        %v5324 = vpack.i.b16 %v4368, %v4368
        %v5325 = vpack.i.b16 %v4369, %v4369
        %v5326 = vpack.i.b16 %v4370, %v4370
        %v5327 = vpack.i.b16 %v4371, %v4371
        %v5328 = vpack.i.b16 %v4372, %v4372
        %v5329 = vpack.i.b16 %v4373, %v4373
        %v5330 = vpack.i.b16 %v4374, %v4374
        %v5331 = vpack.i.b16 %v4375, %v4375
        %v5332 = vpack.i.b16 %v4376, %v4376
        %v5333 = vpack.i.b16 %v4377, %v4377
        %v5334 = vpack.i.b16 %v4378, %v4378
        %v5335 = vpack.i.b16 %v4379, %v4379
        %v5336 = vpack.i.b16 %v4380, %v4380
        %v5337 = vpack.i.b16 %v4381, %v4381
        %v5338 = vpack.i.b16 %v4382, %v4382
        %v5339 = vpack.i.b16 %v4383, %v4383
        %v5340 = vpack.i.b16 %v4384, %v4384
        %v5341 = vpack.i.b16 %v4385, %v4385
        %v5342 = vpack.i.b16 %v4386, %v4386
        %v5343 = vlaneseq
        %v5344 = vshrl.u32 %v5343, 7
        %v5345 = vsub.s32 0, %v5344
        %v5346 = vrot.slane %v5311, %v5345
        %v5347 = vlaneseq
        %v5348 = vshrl.u32 %v5347, 7
        %v5349 = vsub.s32 0, %v5348
        %v5350 = vrot.slane %v5312, %v5349
        %v5351 = vlaneseq
        %v5352 = vshrl.u32 %v5351, 7
        %v5353 = vsub.s32 0, %v5352
        %v5354 = vrot.slane %v5313, %v5353
        %v5355 = vlaneseq
        %v5356 = vshrl.u32 %v5355, 7
        %v5357 = vsub.s32 0, %v5356
        %v5358 = vrot.slane %v5314, %v5357
        %v5359 = vlaneseq
        %v5360 = vshrl.u32 %v5359, 7
        %v5361 = vsub.s32 0, %v5360
        %v5362 = vrot.slane %v5315, %v5361
        %v5363 = vlaneseq
        %v5364 = vshrl.u32 %v5363, 7
        %v5365 = vsub.s32 0, %v5364
        %v5366 = vrot.slane %v5316, %v5365
        %v5367 = vlaneseq
        %v5368 = vshrl.u32 %v5367, 7
        %v5369 = vsub.s32 0, %v5368
        %v5370 = vrot.slane %v5317, %v5369
        %v5371 = vlaneseq
        %v5372 = vshrl.u32 %v5371, 7
        %v5373 = vsub.s32 0, %v5372
        %v5374 = vrot.slane %v5318, %v5373
        %v5375 = vlaneseq
        %v5376 = vshrl.u32 %v5375, 7
        %v5377 = vsub.s32 0, %v5376
        %v5378 = vrot.slane %v5319, %v5377
        %v5379 = vlaneseq
        %v5380 = vshrl.u32 %v5379, 7
        %v5381 = vsub.s32 0, %v5380
        %v5382 = vrot.slane %v5320, %v5381
        %v5383 = vlaneseq
        %v5384 = vshrl.u32 %v5383, 7
        %v5385 = vsub.s32 0, %v5384
        %v5386 = vrot.slane %v5321, %v5385
        %v5387 = vlaneseq
        %v5388 = vshrl.u32 %v5387, 7
        %v5389 = vsub.s32 0, %v5388
        %v5390 = vrot.slane %v5322, %v5389
        %v5391 = vlaneseq
        %v5392 = vshrl.u32 %v5391, 7
        %v5393 = vsub.s32 0, %v5392
        %v5394 = vrot.slane %v5323, %v5393
        %v5395 = vlaneseq
        %v5396 = vshrl.u32 %v5395, 7
        %v5397 = vsub.s32 0, %v5396
        %v5398 = vrot.slane %v5324, %v5397
        %v5399 = vlaneseq
        %v5400 = vshrl.u32 %v5399, 7
        %v5401 = vsub.s32 0, %v5400
        %v5402 = vrot.slane %v5325, %v5401
        %v5403 = vlaneseq
        %v5404 = vshrl.u32 %v5403, 7
        %v5405 = vsub.s32 0, %v5404
        %v5406 = vrot.slane %v5326, %v5405
        %v5407 = vlaneseq
        %v5408 = vshrl.u32 %v5407, 7
        %v5409 = vsub.s32 0, %v5408
        %v5410 = vrot.slane %v5327, %v5409
        %v5411 = vlaneseq
        %v5412 = vshrl.u32 %v5411, 7
        %v5413 = vsub.s32 0, %v5412
        %v5414 = vrot.slane %v5328, %v5413
        %v5415 = vlaneseq
        %v5416 = vshrl.u32 %v5415, 7
        %v5417 = vsub.s32 0, %v5416
        %v5418 = vrot.slane %v5329, %v5417
        %v5419 = vlaneseq
        %v5420 = vshrl.u32 %v5419, 7
        %v5421 = vsub.s32 0, %v5420
        %v5422 = vrot.slane %v5330, %v5421
        %v5423 = vlaneseq
        %v5424 = vshrl.u32 %v5423, 7
        %v5425 = vsub.s32 0, %v5424
        %v5426 = vrot.slane %v5331, %v5425
        %v5427 = vlaneseq
        %v5428 = vshrl.u32 %v5427, 7
        %v5429 = vsub.s32 0, %v5428
        %v5430 = vrot.slane %v5332, %v5429
        %v5431 = vlaneseq
        %v5432 = vshrl.u32 %v5431, 7
        %v5433 = vsub.s32 0, %v5432
        %v5434 = vrot.slane %v5333, %v5433
        %v5435 = vlaneseq
        %v5436 = vshrl.u32 %v5435, 7
        %v5437 = vsub.s32 0, %v5436
        %v5438 = vrot.slane %v5334, %v5437
        %v5439 = vlaneseq
        %v5440 = vshrl.u32 %v5439, 7
        %v5441 = vsub.s32 0, %v5440
        %v5442 = vrot.slane %v5335, %v5441
        %v5443 = vlaneseq
        %v5444 = vshrl.u32 %v5443, 7
        %v5445 = vsub.s32 0, %v5444
        %v5446 = vrot.slane %v5336, %v5445
        %v5447 = vlaneseq
        %v5448 = vshrl.u32 %v5447, 7
        %v5449 = vsub.s32 0, %v5448
        %v5450 = vrot.slane %v5337, %v5449
        %v5451 = vlaneseq
        %v5452 = vshrl.u32 %v5451, 7
        %v5453 = vsub.s32 0, %v5452
        %v5454 = vrot.slane %v5338, %v5453
        %v5455 = vlaneseq
        %v5456 = vshrl.u32 %v5455, 7
        %v5457 = vsub.s32 0, %v5456
        %v5458 = vrot.slane %v5339, %v5457
        %v5459 = vlaneseq
        %v5460 = vshrl.u32 %v5459, 7
        %v5461 = vsub.s32 0, %v5460
        %v5462 = vrot.slane %v5340, %v5461
        %v5463 = vlaneseq
        %v5464 = vshrl.u32 %v5463, 7
        %v5465 = vsub.s32 0, %v5464
        %v5466 = vrot.slane %v5341, %v5465
        %v5467 = vlaneseq
        %v5468 = vshrl.u32 %v5467, 7
        %v5469 = vsub.s32 0, %v5468
        %v5470 = vrot.slane %v5342, %v5469
        %v5503 = vpack.i.b16 %v4487, %v4487
        %v5504 = vpack.i.b16 %v4488, %v4488
        %v5505 = vpack.i.b16 %v4489, %v4489
        %v5506 = vpack.i.b16 %v4490, %v4490
        %v5507 = vpack.i.b16 %v4491, %v4491
        %v5508 = vpack.i.b16 %v4492, %v4492
        %v5509 = vpack.i.b16 %v4493, %v4493
        %v5510 = vpack.i.b16 %v4494, %v4494
        %v5511 = vpack.i.b16 %v4495, %v4495
        %v5512 = vpack.i.b16 %v4496, %v4496
        %v5513 = vpack.i.b16 %v4497, %v4497
        %v5514 = vpack.i.b16 %v4498, %v4498
        %v5515 = vpack.i.b16 %v4499, %v4499
        %v5516 = vpack.i.b16 %v4500, %v4500
        %v5517 = vpack.i.b16 %v4501, %v4501
        %v5518 = vpack.i.b16 %v4502, %v4502
        %v5519 = vpack.i.b16 %v4503, %v4503
        %v5520 = vpack.i.b16 %v4504, %v4504
        %v5521 = vpack.i.b16 %v4505, %v4505
        %v5522 = vpack.i.b16 %v4506, %v4506
        %v5523 = vpack.i.b16 %v4507, %v4507
        %v5524 = vpack.i.b16 %v4508, %v4508
        %v5525 = vpack.i.b16 %v4509, %v4509
        %v5526 = vpack.i.b16 %v4510, %v4510
        %v5527 = vpack.i.b16 %v4511, %v4511
        %v5528 = vpack.i.b16 %v4512, %v4512
        %v5529 = vpack.i.b16 %v4513, %v4513
        %v5530 = vpack.i.b16 %v4514, %v4514
        %v5531 = vpack.i.b16 %v4515, %v4515
        %v5532 = vpack.i.b16 %v4516, %v4516
        %v5533 = vpack.i.b16 %v4517, %v4517
        %v5534 = vpack.i.b16 %v4518, %v4518
        %v5535 = vlaneseq
        %v5536 = vshrl.u32 %v5535, 7
        %v5537 = vsub.s32 0, %v5536
        %v5538 = vrot.slane %v5503, %v5537
        %v5539 = vlaneseq
        %v5540 = vshrl.u32 %v5539, 7
        %v5541 = vsub.s32 0, %v5540
        %v5542 = vrot.slane %v5504, %v5541
        %v5543 = vlaneseq
        %v5544 = vshrl.u32 %v5543, 7
        %v5545 = vsub.s32 0, %v5544
        %v5546 = vrot.slane %v5505, %v5545
        %v5547 = vlaneseq
        %v5548 = vshrl.u32 %v5547, 7
        %v5549 = vsub.s32 0, %v5548
        %v5550 = vrot.slane %v5506, %v5549
        %v5551 = vlaneseq
        %v5552 = vshrl.u32 %v5551, 7
        %v5553 = vsub.s32 0, %v5552
        %v5554 = vrot.slane %v5507, %v5553
        %v5555 = vlaneseq
        %v5556 = vshrl.u32 %v5555, 7
        %v5557 = vsub.s32 0, %v5556
        %v5558 = vrot.slane %v5508, %v5557
        %v5559 = vlaneseq
        %v5560 = vshrl.u32 %v5559, 7
        %v5561 = vsub.s32 0, %v5560
        %v5562 = vrot.slane %v5509, %v5561
        %v5563 = vlaneseq
        %v5564 = vshrl.u32 %v5563, 7
        %v5565 = vsub.s32 0, %v5564
        %v5566 = vrot.slane %v5510, %v5565
        %v5567 = vlaneseq
        %v5568 = vshrl.u32 %v5567, 7
        %v5569 = vsub.s32 0, %v5568
        %v5570 = vrot.slane %v5511, %v5569
        %v5571 = vlaneseq
        %v5572 = vshrl.u32 %v5571, 7
        %v5573 = vsub.s32 0, %v5572
        %v5574 = vrot.slane %v5512, %v5573
        %v5575 = vlaneseq
        %v5576 = vshrl.u32 %v5575, 7
        %v5577 = vsub.s32 0, %v5576
        %v5578 = vrot.slane %v5513, %v5577
        %v5579 = vlaneseq
        %v5580 = vshrl.u32 %v5579, 7
        %v5581 = vsub.s32 0, %v5580
        %v5582 = vrot.slane %v5514, %v5581
        %v5583 = vlaneseq
        %v5584 = vshrl.u32 %v5583, 7
        %v5585 = vsub.s32 0, %v5584
        %v5586 = vrot.slane %v5515, %v5585
        %v5587 = vlaneseq
        %v5588 = vshrl.u32 %v5587, 7
        %v5589 = vsub.s32 0, %v5588
        %v5590 = vrot.slane %v5516, %v5589
        %v5591 = vlaneseq
        %v5592 = vshrl.u32 %v5591, 7
        %v5593 = vsub.s32 0, %v5592
        %v5594 = vrot.slane %v5517, %v5593
        %v5595 = vlaneseq
        %v5596 = vshrl.u32 %v5595, 7
        %v5597 = vsub.s32 0, %v5596
        %v5598 = vrot.slane %v5518, %v5597
        %v5599 = vlaneseq
        %v5600 = vshrl.u32 %v5599, 7
        %v5601 = vsub.s32 0, %v5600
        %v5602 = vrot.slane %v5519, %v5601
        %v5603 = vlaneseq
        %v5604 = vshrl.u32 %v5603, 7
        %v5605 = vsub.s32 0, %v5604
        %v5606 = vrot.slane %v5520, %v5605
        %v5607 = vlaneseq
        %v5608 = vshrl.u32 %v5607, 7
        %v5609 = vsub.s32 0, %v5608
        %v5610 = vrot.slane %v5521, %v5609
        %v5611 = vlaneseq
        %v5612 = vshrl.u32 %v5611, 7
        %v5613 = vsub.s32 0, %v5612
        %v5614 = vrot.slane %v5522, %v5613
        %v5615 = vlaneseq
        %v5616 = vshrl.u32 %v5615, 7
        %v5617 = vsub.s32 0, %v5616
        %v5618 = vrot.slane %v5523, %v5617
        %v5619 = vlaneseq
        %v5620 = vshrl.u32 %v5619, 7
        %v5621 = vsub.s32 0, %v5620
        %v5622 = vrot.slane %v5524, %v5621
        %v5623 = vlaneseq
        %v5624 = vshrl.u32 %v5623, 7
        %v5625 = vsub.s32 0, %v5624
        %v5626 = vrot.slane %v5525, %v5625
        %v5627 = vlaneseq
        %v5628 = vshrl.u32 %v5627, 7
        %v5629 = vsub.s32 0, %v5628
        %v5630 = vrot.slane %v5526, %v5629
        %v5631 = vlaneseq
        %v5632 = vshrl.u32 %v5631, 7
        %v5633 = vsub.s32 0, %v5632
        %v5634 = vrot.slane %v5527, %v5633
        %v5635 = vlaneseq
        %v5636 = vshrl.u32 %v5635, 7
        %v5637 = vsub.s32 0, %v5636
        %v5638 = vrot.slane %v5528, %v5637
        %v5639 = vlaneseq
        %v5640 = vshrl.u32 %v5639, 7
        %v5641 = vsub.s32 0, %v5640
        %v5642 = vrot.slane %v5529, %v5641
        %v5643 = vlaneseq
        %v5644 = vshrl.u32 %v5643, 7
        %v5645 = vsub.s32 0, %v5644
        %v5646 = vrot.slane %v5530, %v5645
        %v5647 = vlaneseq
        %v5648 = vshrl.u32 %v5647, 7
        %v5649 = vsub.s32 0, %v5648
        %v5650 = vrot.slane %v5531, %v5649
        %v5651 = vlaneseq
        %v5652 = vshrl.u32 %v5651, 7
        %v5653 = vsub.s32 0, %v5652
        %v5654 = vrot.slane %v5532, %v5653
        %v5655 = vlaneseq
        %v5656 = vshrl.u32 %v5655, 7
        %v5657 = vsub.s32 0, %v5656
        %v5658 = vrot.slane %v5533, %v5657
        %v5659 = vlaneseq
        %v5660 = vshrl.u32 %v5659, 7
        %v5661 = vsub.s32 0, %v5660
        %v5662 = vrot.slane %v5534, %v5661
        %v5695 = vpack.i.b16 %v4619, %v4619
        %v5696 = vpack.i.b16 %v4620, %v4620
        %v5697 = vpack.i.b16 %v4621, %v4621
        %v5698 = vpack.i.b16 %v4622, %v4622
        %v5699 = vpack.i.b16 %v4623, %v4623
        %v5700 = vpack.i.b16 %v4624, %v4624
        %v5701 = vpack.i.b16 %v4625, %v4625
        %v5702 = vpack.i.b16 %v4626, %v4626
        %v5703 = vpack.i.b16 %v4627, %v4627
        %v5704 = vpack.i.b16 %v4628, %v4628
        %v5705 = vpack.i.b16 %v4629, %v4629
        %v5706 = vpack.i.b16 %v4630, %v4630
        %v5707 = vpack.i.b16 %v4631, %v4631
        %v5708 = vpack.i.b16 %v4632, %v4632
        %v5709 = vpack.i.b16 %v4633, %v4633
        %v5710 = vpack.i.b16 %v4634, %v4634
        %v5711 = vpack.i.b16 %v4635, %v4635
        %v5712 = vpack.i.b16 %v4636, %v4636
        %v5713 = vpack.i.b16 %v4637, %v4637
        %v5714 = vpack.i.b16 %v4638, %v4638
        %v5715 = vpack.i.b16 %v4639, %v4639
        %v5716 = vpack.i.b16 %v4640, %v4640
        %v5717 = vpack.i.b16 %v4641, %v4641
        %v5718 = vpack.i.b16 %v4642, %v4642
        %v5719 = vpack.i.b16 %v4643, %v4643
        %v5720 = vpack.i.b16 %v4644, %v4644
        %v5721 = vpack.i.b16 %v4645, %v4645
        %v5722 = vpack.i.b16 %v4646, %v4646
        %v5723 = vpack.i.b16 %v4647, %v4647
        %v5724 = vpack.i.b16 %v4648, %v4648
        %v5725 = vpack.i.b16 %v4649, %v4649
        %v5726 = vpack.i.b16 %v4650, %v4650
        %v5727 = vlaneseq
        %v5728 = vshrl.u32 %v5727, 7
        %v5729 = vsub.s32 0, %v5728
        %v5730 = vrot.slane %v5695, %v5729
        %v5731 = vlaneseq
        %v5732 = vshrl.u32 %v5731, 7
        %v5733 = vsub.s32 0, %v5732
        %v5734 = vrot.slane %v5696, %v5733
        %v5735 = vlaneseq
        %v5736 = vshrl.u32 %v5735, 7
        %v5737 = vsub.s32 0, %v5736
        %v5738 = vrot.slane %v5697, %v5737
        %v5739 = vlaneseq
        %v5740 = vshrl.u32 %v5739, 7
        %v5741 = vsub.s32 0, %v5740
        %v5742 = vrot.slane %v5698, %v5741
        %v5743 = vlaneseq
        %v5744 = vshrl.u32 %v5743, 7
        %v5745 = vsub.s32 0, %v5744
        %v5746 = vrot.slane %v5699, %v5745
        %v5747 = vlaneseq
        %v5748 = vshrl.u32 %v5747, 7
        %v5749 = vsub.s32 0, %v5748
        %v5750 = vrot.slane %v5700, %v5749
        %v5751 = vlaneseq
        %v5752 = vshrl.u32 %v5751, 7
        %v5753 = vsub.s32 0, %v5752
        %v5754 = vrot.slane %v5701, %v5753
        %v5755 = vlaneseq
        %v5756 = vshrl.u32 %v5755, 7
        %v5757 = vsub.s32 0, %v5756
        %v5758 = vrot.slane %v5702, %v5757
        %v5759 = vlaneseq
        %v5760 = vshrl.u32 %v5759, 7
        %v5761 = vsub.s32 0, %v5760
        %v5762 = vrot.slane %v5703, %v5761
        %v5763 = vlaneseq
        %v5764 = vshrl.u32 %v5763, 7
        %v5765 = vsub.s32 0, %v5764
        %v5766 = vrot.slane %v5704, %v5765
        %v5767 = vlaneseq
        %v5768 = vshrl.u32 %v5767, 7
        %v5769 = vsub.s32 0, %v5768
        %v5770 = vrot.slane %v5705, %v5769
        %v5771 = vlaneseq
        %v5772 = vshrl.u32 %v5771, 7
        %v5773 = vsub.s32 0, %v5772
        %v5774 = vrot.slane %v5706, %v5773
        %v5775 = vlaneseq
        %v5776 = vshrl.u32 %v5775, 7
        %v5777 = vsub.s32 0, %v5776
        %v5778 = vrot.slane %v5707, %v5777
        %v5779 = vlaneseq
        %v5780 = vshrl.u32 %v5779, 7
        %v5781 = vsub.s32 0, %v5780
        %v5782 = vrot.slane %v5708, %v5781
        %v5783 = vlaneseq
        %v5784 = vshrl.u32 %v5783, 7
        %v5785 = vsub.s32 0, %v5784
        %v5786 = vrot.slane %v5709, %v5785
        %v5787 = vlaneseq
        %v5788 = vshrl.u32 %v5787, 7
        %v5789 = vsub.s32 0, %v5788
        %v5790 = vrot.slane %v5710, %v5789
        %v5791 = vlaneseq
        %v5792 = vshrl.u32 %v5791, 7
        %v5793 = vsub.s32 0, %v5792
        %v5794 = vrot.slane %v5711, %v5793
        %v5795 = vlaneseq
        %v5796 = vshrl.u32 %v5795, 7
        %v5797 = vsub.s32 0, %v5796
        %v5798 = vrot.slane %v5712, %v5797
        %v5799 = vlaneseq
        %v5800 = vshrl.u32 %v5799, 7
        %v5801 = vsub.s32 0, %v5800
        %v5802 = vrot.slane %v5713, %v5801
        %v5803 = vlaneseq
        %v5804 = vshrl.u32 %v5803, 7
        %v5805 = vsub.s32 0, %v5804
        %v5806 = vrot.slane %v5714, %v5805
        %v5807 = vlaneseq
        %v5808 = vshrl.u32 %v5807, 7
        %v5809 = vsub.s32 0, %v5808
        %v5810 = vrot.slane %v5715, %v5809
        %v5811 = vlaneseq
        %v5812 = vshrl.u32 %v5811, 7
        %v5813 = vsub.s32 0, %v5812
        %v5814 = vrot.slane %v5716, %v5813
        %v5815 = vlaneseq
        %v5816 = vshrl.u32 %v5815, 7
        %v5817 = vsub.s32 0, %v5816
        %v5818 = vrot.slane %v5717, %v5817
        %v5819 = vlaneseq
        %v5820 = vshrl.u32 %v5819, 7
        %v5821 = vsub.s32 0, %v5820
        %v5822 = vrot.slane %v5718, %v5821
        %v5823 = vlaneseq
        %v5824 = vshrl.u32 %v5823, 7
        %v5825 = vsub.s32 0, %v5824
        %v5826 = vrot.slane %v5719, %v5825
        %v5827 = vlaneseq
        %v5828 = vshrl.u32 %v5827, 7
        %v5829 = vsub.s32 0, %v5828
        %v5830 = vrot.slane %v5720, %v5829
        %v5831 = vlaneseq
        %v5832 = vshrl.u32 %v5831, 7
        %v5833 = vsub.s32 0, %v5832
        %v5834 = vrot.slane %v5721, %v5833
        %v5835 = vlaneseq
        %v5836 = vshrl.u32 %v5835, 7
        %v5837 = vsub.s32 0, %v5836
        %v5838 = vrot.slane %v5722, %v5837
        %v5839 = vlaneseq
        %v5840 = vshrl.u32 %v5839, 7
        %v5841 = vsub.s32 0, %v5840
        %v5842 = vrot.slane %v5723, %v5841
        %v5843 = vlaneseq
        %v5844 = vshrl.u32 %v5843, 7
        %v5845 = vsub.s32 0, %v5844
        %v5846 = vrot.slane %v5724, %v5845
        %v5847 = vlaneseq
        %v5848 = vshrl.u32 %v5847, 7
        %v5849 = vsub.s32 0, %v5848
        %v5850 = vrot.slane %v5725, %v5849
        %v5851 = vlaneseq
        %v5852 = vshrl.u32 %v5851, 7
        %v5853 = vsub.s32 0, %v5852
        %v5854 = vrot.slane %v5726, %v5853
        %v5855 = vpack.i.b16 %v4751, %v4751
        %v5856 = vpack.i.b16 %v4752, %v4752
        %v5857 = vpack.i.b16 %v4753, %v4753
        %v5858 = vpack.i.b16 %v4754, %v4754
        %v5859 = vpack.i.b16 %v4755, %v4755
        %v5860 = vpack.i.b16 %v4756, %v4756
        %v5861 = vpack.i.b16 %v4757, %v4757
        %v5862 = vpack.i.b16 %v4758, %v4758
        %v5863 = vpack.i.b16 %v4759, %v4759
        %v5864 = vpack.i.b16 %v4760, %v4760
        %v5865 = vpack.i.b16 %v4761, %v4761
        %v5866 = vpack.i.b16 %v4762, %v4762
        %v5867 = vpack.i.b16 %v4763, %v4763
        %v5868 = vpack.i.b16 %v4764, %v4764
        %v5869 = vpack.i.b16 %v4765, %v4765
        %v5870 = vpack.i.b16 %v4766, %v4766
        %v5871 = vpack.i.b16 %v4767, %v4767
        %v5872 = vpack.i.b16 %v4768, %v4768
        %v5873 = vpack.i.b16 %v4769, %v4769
        %v5874 = vpack.i.b16 %v4770, %v4770
        %v5875 = vpack.i.b16 %v4771, %v4771
        %v5876 = vpack.i.b16 %v4772, %v4772
        %v5877 = vpack.i.b16 %v4773, %v4773
        %v5878 = vpack.i.b16 %v4774, %v4774
        %v5879 = vpack.i.b16 %v4775, %v4775
        %v5880 = vpack.i.b16 %v4776, %v4776
        %v5881 = vpack.i.b16 %v4777, %v4777
        %v5882 = vpack.i.b16 %v4778, %v4778
        %v5883 = vpack.i.b16 %v4779, %v4779
        %v5884 = vpack.i.b16 %v4780, %v4780
        %v5885 = vpack.i.b16 %v4781, %v4781
        %v5886 = vpack.i.b16 %v4782, %v4782
        %v5887 = vlaneseq
        %v5888 = vshrl.u32 %v5887, 7
        %v5889 = vsub.s32 0, %v5888
        %v5890 = vrot.slane %v5855, %v5889
        %v5891 = vlaneseq
        %v5892 = vshrl.u32 %v5891, 7
        %v5893 = vsub.s32 0, %v5892
        %v5894 = vrot.slane %v5856, %v5893
        %v5895 = vlaneseq
        %v5896 = vshrl.u32 %v5895, 7
        %v5897 = vsub.s32 0, %v5896
        %v5898 = vrot.slane %v5857, %v5897
        %v5899 = vlaneseq
        %v5900 = vshrl.u32 %v5899, 7
        %v5901 = vsub.s32 0, %v5900
        %v5902 = vrot.slane %v5858, %v5901
        %v5903 = vlaneseq
        %v5904 = vshrl.u32 %v5903, 7
        %v5905 = vsub.s32 0, %v5904
        %v5906 = vrot.slane %v5859, %v5905
        %v5907 = vlaneseq
        %v5908 = vshrl.u32 %v5907, 7
        %v5909 = vsub.s32 0, %v5908
        %v5910 = vrot.slane %v5860, %v5909
        %v5911 = vlaneseq
        %v5912 = vshrl.u32 %v5911, 7
        %v5913 = vsub.s32 0, %v5912
        %v5914 = vrot.slane %v5861, %v5913
        %v5915 = vlaneseq
        %v5916 = vshrl.u32 %v5915, 7
        %v5917 = vsub.s32 0, %v5916
        %v5918 = vrot.slane %v5862, %v5917
        %v5919 = vlaneseq
        %v5920 = vshrl.u32 %v5919, 7
        %v5921 = vsub.s32 0, %v5920
        %v5922 = vrot.slane %v5863, %v5921
        %v5923 = vlaneseq
        %v5924 = vshrl.u32 %v5923, 7
        %v5925 = vsub.s32 0, %v5924
        %v5926 = vrot.slane %v5864, %v5925
        %v5927 = vlaneseq
        %v5928 = vshrl.u32 %v5927, 7
        %v5929 = vsub.s32 0, %v5928
        %v5930 = vrot.slane %v5865, %v5929
        %v5931 = vlaneseq
        %v5932 = vshrl.u32 %v5931, 7
        %v5933 = vsub.s32 0, %v5932
        %v5934 = vrot.slane %v5866, %v5933
        %v5935 = vlaneseq
        %v5936 = vshrl.u32 %v5935, 7
        %v5937 = vsub.s32 0, %v5936
        %v5938 = vrot.slane %v5867, %v5937
        %v5939 = vlaneseq
        %v5940 = vshrl.u32 %v5939, 7
        %v5941 = vsub.s32 0, %v5940
        %v5942 = vrot.slane %v5868, %v5941
        %v5943 = vlaneseq
        %v5944 = vshrl.u32 %v5943, 7
        %v5945 = vsub.s32 0, %v5944
        %v5946 = vrot.slane %v5869, %v5945
        %v5947 = vlaneseq
        %v5948 = vshrl.u32 %v5947, 7
        %v5949 = vsub.s32 0, %v5948
        %v5950 = vrot.slane %v5870, %v5949
        %v5951 = vlaneseq
        %v5952 = vshrl.u32 %v5951, 7
        %v5953 = vsub.s32 0, %v5952
        %v5954 = vrot.slane %v5871, %v5953
        %v5955 = vlaneseq
        %v5956 = vshrl.u32 %v5955, 7
        %v5957 = vsub.s32 0, %v5956
        %v5958 = vrot.slane %v5872, %v5957
        %v5959 = vlaneseq
        %v5960 = vshrl.u32 %v5959, 7
        %v5961 = vsub.s32 0, %v5960
        %v5962 = vrot.slane %v5873, %v5961
        %v5963 = vlaneseq
        %v5964 = vshrl.u32 %v5963, 7
        %v5965 = vsub.s32 0, %v5964
        %v5966 = vrot.slane %v5874, %v5965
        %v5967 = vlaneseq
        %v5968 = vshrl.u32 %v5967, 7
        %v5969 = vsub.s32 0, %v5968
        %v5970 = vrot.slane %v5875, %v5969
        %v5971 = vlaneseq
        %v5972 = vshrl.u32 %v5971, 7
        %v5973 = vsub.s32 0, %v5972
        %v5974 = vrot.slane %v5876, %v5973
        %v5975 = vlaneseq
        %v5976 = vshrl.u32 %v5975, 7
        %v5977 = vsub.s32 0, %v5976
        %v5978 = vrot.slane %v5877, %v5977
        %v5979 = vlaneseq
        %v5980 = vshrl.u32 %v5979, 7
        %v5981 = vsub.s32 0, %v5980
        %v5982 = vrot.slane %v5878, %v5981
        %v5983 = vlaneseq
        %v5984 = vshrl.u32 %v5983, 7
        %v5985 = vsub.s32 0, %v5984
        %v5986 = vrot.slane %v5879, %v5985
        %v5987 = vlaneseq
        %v5988 = vshrl.u32 %v5987, 7
        %v5989 = vsub.s32 0, %v5988
        %v5990 = vrot.slane %v5880, %v5989
        %v5991 = vlaneseq
        %v5992 = vshrl.u32 %v5991, 7
        %v5993 = vsub.s32 0, %v5992
        %v5994 = vrot.slane %v5881, %v5993
        %v5995 = vlaneseq
        %v5996 = vshrl.u32 %v5995, 7
        %v5997 = vsub.s32 0, %v5996
        %v5998 = vrot.slane %v5882, %v5997
        %v5999 = vlaneseq
        %v6000 = vshrl.u32 %v5999, 7
        %v6001 = vsub.s32 0, %v6000
        %v6002 = vrot.slane %v5883, %v6001
        %v6003 = vlaneseq
        %v6004 = vshrl.u32 %v6003, 7
        %v6005 = vsub.s32 0, %v6004
        %v6006 = vrot.slane %v5884, %v6005
        %v6007 = vlaneseq
        %v6008 = vshrl.u32 %v6007, 7
        %v6009 = vsub.s32 0, %v6008
        %v6010 = vrot.slane %v5885, %v6009
        %v6011 = vlaneseq
        %v6012 = vshrl.u32 %v6011, 7
        %v6013 = vsub.s32 0, %v6012
        %v6014 = vrot.slane %v5886, %v6013
        %v6047 = vpack.i.b16 %v4883, %v4883
        %v6048 = vpack.i.b16 %v4884, %v4884
        %v6049 = vpack.i.b16 %v4885, %v4885
        %v6050 = vpack.i.b16 %v4886, %v4886
        %v6051 = vpack.i.b16 %v4887, %v4887
        %v6052 = vpack.i.b16 %v4888, %v4888
        %v6053 = vpack.i.b16 %v4889, %v4889
        %v6054 = vpack.i.b16 %v4890, %v4890
        %v6055 = vpack.i.b16 %v4891, %v4891
        %v6056 = vpack.i.b16 %v4892, %v4892
        %v6057 = vpack.i.b16 %v4893, %v4893
        %v6058 = vpack.i.b16 %v4894, %v4894
        %v6059 = vpack.i.b16 %v4895, %v4895
        %v6060 = vpack.i.b16 %v4896, %v4896
        %v6061 = vpack.i.b16 %v4897, %v4897
        %v6062 = vpack.i.b16 %v4898, %v4898
        %v6063 = vpack.i.b16 %v4899, %v4899
        %v6064 = vpack.i.b16 %v4900, %v4900
        %v6065 = vpack.i.b16 %v4901, %v4901
        %v6066 = vpack.i.b16 %v4902, %v4902
        %v6067 = vpack.i.b16 %v4903, %v4903
        %v6068 = vpack.i.b16 %v4904, %v4904
        %v6069 = vpack.i.b16 %v4905, %v4905
        %v6070 = vpack.i.b16 %v4906, %v4906
        %v6071 = vpack.i.b16 %v4907, %v4907
        %v6072 = vpack.i.b16 %v4908, %v4908
        %v6073 = vpack.i.b16 %v4909, %v4909
        %v6074 = vpack.i.b16 %v4910, %v4910
        %v6075 = vpack.i.b16 %v4911, %v4911
        %v6076 = vpack.i.b16 %v4912, %v4912
        %v6077 = vpack.i.b16 %v4913, %v4913
        %v6078 = vpack.i.b16 %v4914, %v4914
        %v6079 = vlaneseq
        %v6080 = vshrl.u32 %v6079, 7
        %v6081 = vsub.s32 0, %v6080
        %v6082 = vrot.slane %v6047, %v6081
        %v6083 = vlaneseq
        %v6084 = vshrl.u32 %v6083, 7
        %v6085 = vsub.s32 0, %v6084
        %v6086 = vrot.slane %v6048, %v6085
        %v6087 = vlaneseq
        %v6088 = vshrl.u32 %v6087, 7
        %v6089 = vsub.s32 0, %v6088
        %v6090 = vrot.slane %v6049, %v6089
        %v6091 = vlaneseq
        %v6092 = vshrl.u32 %v6091, 7
        %v6093 = vsub.s32 0, %v6092
        %v6094 = vrot.slane %v6050, %v6093
        %v6095 = vlaneseq
        %v6096 = vshrl.u32 %v6095, 7
        %v6097 = vsub.s32 0, %v6096
        %v6098 = vrot.slane %v6051, %v6097
        %v6099 = vlaneseq
        %v6100 = vshrl.u32 %v6099, 7
        %v6101 = vsub.s32 0, %v6100
        %v6102 = vrot.slane %v6052, %v6101
        %v6103 = vlaneseq
        %v6104 = vshrl.u32 %v6103, 7
        %v6105 = vsub.s32 0, %v6104
        %v6106 = vrot.slane %v6053, %v6105
        %v6107 = vlaneseq
        %v6108 = vshrl.u32 %v6107, 7
        %v6109 = vsub.s32 0, %v6108
        %v6110 = vrot.slane %v6054, %v6109
        %v6111 = vlaneseq
        %v6112 = vshrl.u32 %v6111, 7
        %v6113 = vsub.s32 0, %v6112
        %v6114 = vrot.slane %v6055, %v6113
        %v6115 = vlaneseq
        %v6116 = vshrl.u32 %v6115, 7
        %v6117 = vsub.s32 0, %v6116
        %v6118 = vrot.slane %v6056, %v6117
        %v6119 = vlaneseq
        %v6120 = vshrl.u32 %v6119, 7
        %v6121 = vsub.s32 0, %v6120
        %v6122 = vrot.slane %v6057, %v6121
        %v6123 = vlaneseq
        %v6124 = vshrl.u32 %v6123, 7
        %v6125 = vsub.s32 0, %v6124
        %v6126 = vrot.slane %v6058, %v6125
        %v6127 = vlaneseq
        %v6128 = vshrl.u32 %v6127, 7
        %v6129 = vsub.s32 0, %v6128
        %v6130 = vrot.slane %v6059, %v6129
        %v6131 = vlaneseq
        %v6132 = vshrl.u32 %v6131, 7
        %v6133 = vsub.s32 0, %v6132
        %v6134 = vrot.slane %v6060, %v6133
        %v6135 = vlaneseq
        %v6136 = vshrl.u32 %v6135, 7
        %v6137 = vsub.s32 0, %v6136
        %v6138 = vrot.slane %v6061, %v6137
        %v6139 = vlaneseq
        %v6140 = vshrl.u32 %v6139, 7
        %v6141 = vsub.s32 0, %v6140
        %v6142 = vrot.slane %v6062, %v6141
        %v6143 = vlaneseq
        %v6144 = vshrl.u32 %v6143, 7
        %v6145 = vsub.s32 0, %v6144
        %v6146 = vrot.slane %v6063, %v6145
        %v6147 = vlaneseq
        %v6148 = vshrl.u32 %v6147, 7
        %v6149 = vsub.s32 0, %v6148
        %v6150 = vrot.slane %v6064, %v6149
        %v6151 = vlaneseq
        %v6152 = vshrl.u32 %v6151, 7
        %v6153 = vsub.s32 0, %v6152
        %v6154 = vrot.slane %v6065, %v6153
        %v6155 = vlaneseq
        %v6156 = vshrl.u32 %v6155, 7
        %v6157 = vsub.s32 0, %v6156
        %v6158 = vrot.slane %v6066, %v6157
        %v6159 = vlaneseq
        %v6160 = vshrl.u32 %v6159, 7
        %v6161 = vsub.s32 0, %v6160
        %v6162 = vrot.slane %v6067, %v6161
        %v6163 = vlaneseq
        %v6164 = vshrl.u32 %v6163, 7
        %v6165 = vsub.s32 0, %v6164
        %v6166 = vrot.slane %v6068, %v6165
        %v6167 = vlaneseq
        %v6168 = vshrl.u32 %v6167, 7
        %v6169 = vsub.s32 0, %v6168
        %v6170 = vrot.slane %v6069, %v6169
        %v6171 = vlaneseq
        %v6172 = vshrl.u32 %v6171, 7
        %v6173 = vsub.s32 0, %v6172
        %v6174 = vrot.slane %v6070, %v6173
        %v6175 = vlaneseq
        %v6176 = vshrl.u32 %v6175, 7
        %v6177 = vsub.s32 0, %v6176
        %v6178 = vrot.slane %v6071, %v6177
        %v6179 = vlaneseq
        %v6180 = vshrl.u32 %v6179, 7
        %v6181 = vsub.s32 0, %v6180
        %v6182 = vrot.slane %v6072, %v6181
        %v6183 = vlaneseq
        %v6184 = vshrl.u32 %v6183, 7
        %v6185 = vsub.s32 0, %v6184
        %v6186 = vrot.slane %v6073, %v6185
        %v6187 = vlaneseq
        %v6188 = vshrl.u32 %v6187, 7
        %v6189 = vsub.s32 0, %v6188
        %v6190 = vrot.slane %v6074, %v6189
        %v6191 = vlaneseq
        %v6192 = vshrl.u32 %v6191, 7
        %v6193 = vsub.s32 0, %v6192
        %v6194 = vrot.slane %v6075, %v6193
        %v6195 = vlaneseq
        %v6196 = vshrl.u32 %v6195, 7
        %v6197 = vsub.s32 0, %v6196
        %v6198 = vrot.slane %v6076, %v6197
        %v6199 = vlaneseq
        %v6200 = vshrl.u32 %v6199, 7
        %v6201 = vsub.s32 0, %v6200
        %v6202 = vrot.slane %v6077, %v6201
        %v6203 = vlaneseq
        %v6204 = vshrl.u32 %v6203, 7
        %v6205 = vsub.s32 0, %v6204
        %v6206 = vrot.slane %v6078, %v6205
        %v6207 = vpack.i.b16 %v5015, %v5015
        %v6208 = vpack.i.b16 %v5016, %v5016
        %v6209 = vpack.i.b16 %v5017, %v5017
        %v6210 = vpack.i.b16 %v5018, %v5018
        %v6211 = vpack.i.b16 %v5019, %v5019
        %v6212 = vpack.i.b16 %v5020, %v5020
        %v6213 = vpack.i.b16 %v5021, %v5021
        %v6214 = vpack.i.b16 %v5022, %v5022
        %v6215 = vpack.i.b16 %v5023, %v5023
        %v6216 = vpack.i.b16 %v5024, %v5024
        %v6217 = vpack.i.b16 %v5025, %v5025
        %v6218 = vpack.i.b16 %v5026, %v5026
        %v6219 = vpack.i.b16 %v5027, %v5027
        %v6220 = vpack.i.b16 %v5028, %v5028
        %v6221 = vpack.i.b16 %v5029, %v5029
        %v6222 = vpack.i.b16 %v5030, %v5030
        %v6223 = vpack.i.b16 %v5031, %v5031
        %v6224 = vpack.i.b16 %v5032, %v5032
        %v6225 = vpack.i.b16 %v5033, %v5033
        %v6226 = vpack.i.b16 %v5034, %v5034
        %v6227 = vpack.i.b16 %v5035, %v5035
        %v6228 = vpack.i.b16 %v5036, %v5036
        %v6229 = vpack.i.b16 %v5037, %v5037
        %v6230 = vpack.i.b16 %v5038, %v5038
        %v6231 = vpack.i.b16 %v5039, %v5039
        %v6232 = vpack.i.b16 %v5040, %v5040
        %v6233 = vpack.i.b16 %v5041, %v5041
        %v6234 = vpack.i.b16 %v5042, %v5042
        %v6235 = vpack.i.b16 %v5043, %v5043
        %v6236 = vpack.i.b16 %v5044, %v5044
        %v6237 = vpack.i.b16 %v5045, %v5045
        %v6238 = vpack.i.b16 %v5046, %v5046
        %v6239 = vlaneseq
        %v6240 = vshrl.u32 %v6239, 7
        %v6241 = vsub.s32 0, %v6240
        %v6242 = vrot.slane %v6207, %v6241
        %v6243 = vlaneseq
        %v6244 = vshrl.u32 %v6243, 7
        %v6245 = vsub.s32 0, %v6244
        %v6246 = vrot.slane %v6208, %v6245
        %v6247 = vlaneseq
        %v6248 = vshrl.u32 %v6247, 7
        %v6249 = vsub.s32 0, %v6248
        %v6250 = vrot.slane %v6209, %v6249
        %v6251 = vlaneseq
        %v6252 = vshrl.u32 %v6251, 7
        %v6253 = vsub.s32 0, %v6252
        %v6254 = vrot.slane %v6210, %v6253
        %v6255 = vlaneseq
        %v6256 = vshrl.u32 %v6255, 7
        %v6257 = vsub.s32 0, %v6256
        %v6258 = vrot.slane %v6211, %v6257
        %v6259 = vlaneseq
        %v6260 = vshrl.u32 %v6259, 7
        %v6261 = vsub.s32 0, %v6260
        %v6262 = vrot.slane %v6212, %v6261
        %v6263 = vlaneseq
        %v6264 = vshrl.u32 %v6263, 7
        %v6265 = vsub.s32 0, %v6264
        %v6266 = vrot.slane %v6213, %v6265
        %v6267 = vlaneseq
        %v6268 = vshrl.u32 %v6267, 7
        %v6269 = vsub.s32 0, %v6268
        %v6270 = vrot.slane %v6214, %v6269
        %v6271 = vlaneseq
        %v6272 = vshrl.u32 %v6271, 7
        %v6273 = vsub.s32 0, %v6272
        %v6274 = vrot.slane %v6215, %v6273
        %v6275 = vlaneseq
        %v6276 = vshrl.u32 %v6275, 7
        %v6277 = vsub.s32 0, %v6276
        %v6278 = vrot.slane %v6216, %v6277
        %v6279 = vlaneseq
        %v6280 = vshrl.u32 %v6279, 7
        %v6281 = vsub.s32 0, %v6280
        %v6282 = vrot.slane %v6217, %v6281
        %v6283 = vlaneseq
        %v6284 = vshrl.u32 %v6283, 7
        %v6285 = vsub.s32 0, %v6284
        %v6286 = vrot.slane %v6218, %v6285
        %v6287 = vlaneseq
        %v6288 = vshrl.u32 %v6287, 7
        %v6289 = vsub.s32 0, %v6288
        %v6290 = vrot.slane %v6219, %v6289
        %v6291 = vlaneseq
        %v6292 = vshrl.u32 %v6291, 7
        %v6293 = vsub.s32 0, %v6292
        %v6294 = vrot.slane %v6220, %v6293
        %v6295 = vlaneseq
        %v6296 = vshrl.u32 %v6295, 7
        %v6297 = vsub.s32 0, %v6296
        %v6298 = vrot.slane %v6221, %v6297
        %v6299 = vlaneseq
        %v6300 = vshrl.u32 %v6299, 7
        %v6301 = vsub.s32 0, %v6300
        %v6302 = vrot.slane %v6222, %v6301
        %v6303 = vlaneseq
        %v6304 = vshrl.u32 %v6303, 7
        %v6305 = vsub.s32 0, %v6304
        %v6306 = vrot.slane %v6223, %v6305
        %v6307 = vlaneseq
        %v6308 = vshrl.u32 %v6307, 7
        %v6309 = vsub.s32 0, %v6308
        %v6310 = vrot.slane %v6224, %v6309
        %v6311 = vlaneseq
        %v6312 = vshrl.u32 %v6311, 7
        %v6313 = vsub.s32 0, %v6312
        %v6314 = vrot.slane %v6225, %v6313
        %v6315 = vlaneseq
        %v6316 = vshrl.u32 %v6315, 7
        %v6317 = vsub.s32 0, %v6316
        %v6318 = vrot.slane %v6226, %v6317
        %v6319 = vlaneseq
        %v6320 = vshrl.u32 %v6319, 7
        %v6321 = vsub.s32 0, %v6320
        %v6322 = vrot.slane %v6227, %v6321
        %v6323 = vlaneseq
        %v6324 = vshrl.u32 %v6323, 7
        %v6325 = vsub.s32 0, %v6324
        %v6326 = vrot.slane %v6228, %v6325
        %v6327 = vlaneseq
        %v6328 = vshrl.u32 %v6327, 7
        %v6329 = vsub.s32 0, %v6328
        %v6330 = vrot.slane %v6229, %v6329
        %v6331 = vlaneseq
        %v6332 = vshrl.u32 %v6331, 7
        %v6333 = vsub.s32 0, %v6332
        %v6334 = vrot.slane %v6230, %v6333
        %v6335 = vlaneseq
        %v6336 = vshrl.u32 %v6335, 7
        %v6337 = vsub.s32 0, %v6336
        %v6338 = vrot.slane %v6231, %v6337
        %v6339 = vlaneseq
        %v6340 = vshrl.u32 %v6339, 7
        %v6341 = vsub.s32 0, %v6340
        %v6342 = vrot.slane %v6232, %v6341
        %v6343 = vlaneseq
        %v6344 = vshrl.u32 %v6343, 7
        %v6345 = vsub.s32 0, %v6344
        %v6346 = vrot.slane %v6233, %v6345
        %v6347 = vlaneseq
        %v6348 = vshrl.u32 %v6347, 7
        %v6349 = vsub.s32 0, %v6348
        %v6350 = vrot.slane %v6234, %v6349
        %v6351 = vlaneseq
        %v6352 = vshrl.u32 %v6351, 7
        %v6353 = vsub.s32 0, %v6352
        %v6354 = vrot.slane %v6235, %v6353
        %v6355 = vlaneseq
        %v6356 = vshrl.u32 %v6355, 7
        %v6357 = vsub.s32 0, %v6356
        %v6358 = vrot.slane %v6236, %v6357
        %v6359 = vlaneseq
        %v6360 = vshrl.u32 %v6359, 7
        %v6361 = vsub.s32 0, %v6360
        %v6362 = vrot.slane %v6237, %v6361
        %v6363 = vlaneseq
        %v6364 = vshrl.u32 %v6363, 7
        %v6365 = vsub.s32 0, %v6364
        %v6366 = vrot.slane %v6238, %v6365
        %v6399 = vpack.i.b16 %v5147, %v5147
        %v6400 = vpack.i.b16 %v5148, %v5148
        %v6401 = vpack.i.b16 %v5149, %v5149
        %v6402 = vpack.i.b16 %v5150, %v5150
        %v6403 = vpack.i.b16 %v5151, %v5151
        %v6404 = vpack.i.b16 %v5152, %v5152
        %v6405 = vpack.i.b16 %v5153, %v5153
        %v6406 = vpack.i.b16 %v5154, %v5154
        %v6407 = vpack.i.b16 %v5155, %v5155
        %v6408 = vpack.i.b16 %v5156, %v5156
        %v6409 = vpack.i.b16 %v5157, %v5157
        %v6410 = vpack.i.b16 %v5158, %v5158
        %v6411 = vpack.i.b16 %v5159, %v5159
        %v6412 = vpack.i.b16 %v5160, %v5160
        %v6413 = vpack.i.b16 %v5161, %v5161
        %v6414 = vpack.i.b16 %v5162, %v5162
        %v6415 = vpack.i.b16 %v5163, %v5163
        %v6416 = vpack.i.b16 %v5164, %v5164
        %v6417 = vpack.i.b16 %v5165, %v5165
        %v6418 = vpack.i.b16 %v5166, %v5166
        %v6419 = vpack.i.b16 %v5167, %v5167
        %v6420 = vpack.i.b16 %v5168, %v5168
        %v6421 = vpack.i.b16 %v5169, %v5169
        %v6422 = vpack.i.b16 %v5170, %v5170
        %v6423 = vpack.i.b16 %v5171, %v5171
        %v6424 = vpack.i.b16 %v5172, %v5172
        %v6425 = vpack.i.b16 %v5173, %v5173
        %v6426 = vpack.i.b16 %v5174, %v5174
        %v6427 = vpack.i.b16 %v5175, %v5175
        %v6428 = vpack.i.b16 %v5176, %v5176
        %v6429 = vpack.i.b16 %v5177, %v5177
        %v6430 = vpack.i.b16 %v5178, %v5178
        %v6431 = vlaneseq
        %v6432 = vshrl.u32 %v6431, 7
        %v6433 = vsub.s32 0, %v6432
        %v6434 = vrot.slane %v6399, %v6433
        %v6435 = vlaneseq
        %v6436 = vshrl.u32 %v6435, 7
        %v6437 = vsub.s32 0, %v6436
        %v6438 = vrot.slane %v6400, %v6437
        %v6439 = vlaneseq
        %v6440 = vshrl.u32 %v6439, 7
        %v6441 = vsub.s32 0, %v6440
        %v6442 = vrot.slane %v6401, %v6441
        %v6443 = vlaneseq
        %v6444 = vshrl.u32 %v6443, 7
        %v6445 = vsub.s32 0, %v6444
        %v6446 = vrot.slane %v6402, %v6445
        %v6447 = vlaneseq
        %v6448 = vshrl.u32 %v6447, 7
        %v6449 = vsub.s32 0, %v6448
        %v6450 = vrot.slane %v6403, %v6449
        %v6451 = vlaneseq
        %v6452 = vshrl.u32 %v6451, 7
        %v6453 = vsub.s32 0, %v6452
        %v6454 = vrot.slane %v6404, %v6453
        %v6455 = vlaneseq
        %v6456 = vshrl.u32 %v6455, 7
        %v6457 = vsub.s32 0, %v6456
        %v6458 = vrot.slane %v6405, %v6457
        %v6459 = vlaneseq
        %v6460 = vshrl.u32 %v6459, 7
        %v6461 = vsub.s32 0, %v6460
        %v6462 = vrot.slane %v6406, %v6461
        %v6463 = vlaneseq
        %v6464 = vshrl.u32 %v6463, 7
        %v6465 = vsub.s32 0, %v6464
        %v6466 = vrot.slane %v6407, %v6465
        %v6467 = vlaneseq
        %v6468 = vshrl.u32 %v6467, 7
        %v6469 = vsub.s32 0, %v6468
        %v6470 = vrot.slane %v6408, %v6469
        %v6471 = vlaneseq
        %v6472 = vshrl.u32 %v6471, 7
        %v6473 = vsub.s32 0, %v6472
        %v6474 = vrot.slane %v6409, %v6473
        %v6475 = vlaneseq
        %v6476 = vshrl.u32 %v6475, 7
        %v6477 = vsub.s32 0, %v6476
        %v6478 = vrot.slane %v6410, %v6477
        %v6479 = vlaneseq
        %v6480 = vshrl.u32 %v6479, 7
        %v6481 = vsub.s32 0, %v6480
        %v6482 = vrot.slane %v6411, %v6481
        %v6483 = vlaneseq
        %v6484 = vshrl.u32 %v6483, 7
        %v6485 = vsub.s32 0, %v6484
        %v6486 = vrot.slane %v6412, %v6485
        %v6487 = vlaneseq
        %v6488 = vshrl.u32 %v6487, 7
        %v6489 = vsub.s32 0, %v6488
        %v6490 = vrot.slane %v6413, %v6489
        %v6491 = vlaneseq
        %v6492 = vshrl.u32 %v6491, 7
        %v6493 = vsub.s32 0, %v6492
        %v6494 = vrot.slane %v6414, %v6493
        %v6495 = vlaneseq
        %v6496 = vshrl.u32 %v6495, 7
        %v6497 = vsub.s32 0, %v6496
        %v6498 = vrot.slane %v6415, %v6497
        %v6499 = vlaneseq
        %v6500 = vshrl.u32 %v6499, 7
        %v6501 = vsub.s32 0, %v6500
        %v6502 = vrot.slane %v6416, %v6501
        %v6503 = vlaneseq
        %v6504 = vshrl.u32 %v6503, 7
        %v6505 = vsub.s32 0, %v6504
        %v6506 = vrot.slane %v6417, %v6505
        %v6507 = vlaneseq
        %v6508 = vshrl.u32 %v6507, 7
        %v6509 = vsub.s32 0, %v6508
        %v6510 = vrot.slane %v6418, %v6509
        %v6511 = vlaneseq
        %v6512 = vshrl.u32 %v6511, 7
        %v6513 = vsub.s32 0, %v6512
        %v6514 = vrot.slane %v6419, %v6513
        %v6515 = vlaneseq
        %v6516 = vshrl.u32 %v6515, 7
        %v6517 = vsub.s32 0, %v6516
        %v6518 = vrot.slane %v6420, %v6517
        %v6519 = vlaneseq
        %v6520 = vshrl.u32 %v6519, 7
        %v6521 = vsub.s32 0, %v6520
        %v6522 = vrot.slane %v6421, %v6521
        %v6523 = vlaneseq
        %v6524 = vshrl.u32 %v6523, 7
        %v6525 = vsub.s32 0, %v6524
        %v6526 = vrot.slane %v6422, %v6525
        %v6527 = vlaneseq
        %v6528 = vshrl.u32 %v6527, 7
        %v6529 = vsub.s32 0, %v6528
        %v6530 = vrot.slane %v6423, %v6529
        %v6531 = vlaneseq
        %v6532 = vshrl.u32 %v6531, 7
        %v6533 = vsub.s32 0, %v6532
        %v6534 = vrot.slane %v6424, %v6533
        %v6535 = vlaneseq
        %v6536 = vshrl.u32 %v6535, 7
        %v6537 = vsub.s32 0, %v6536
        %v6538 = vrot.slane %v6425, %v6537
        %v6539 = vlaneseq
        %v6540 = vshrl.u32 %v6539, 7
        %v6541 = vsub.s32 0, %v6540
        %v6542 = vrot.slane %v6426, %v6541
        %v6543 = vlaneseq
        %v6544 = vshrl.u32 %v6543, 7
        %v6545 = vsub.s32 0, %v6544
        %v6546 = vrot.slane %v6427, %v6545
        %v6547 = vlaneseq
        %v6548 = vshrl.u32 %v6547, 7
        %v6549 = vsub.s32 0, %v6548
        %v6550 = vrot.slane %v6428, %v6549
        %v6551 = vlaneseq
        %v6552 = vshrl.u32 %v6551, 7
        %v6553 = vsub.s32 0, %v6552
        %v6554 = vrot.slane %v6429, %v6553
        %v6555 = vlaneseq
        %v6556 = vshrl.u32 %v6555, 7
        %v6557 = vsub.s32 0, %v6556
        %v6558 = vrot.slane %v6430, %v6557
        %v6559 = vpack.i.b16 %v5279, %v5279
        %v6560 = vpack.i.b16 %v5280, %v5280
        %v6561 = vpack.i.b16 %v5281, %v5281
        %v6562 = vpack.i.b16 %v5282, %v5282
        %v6563 = vpack.i.b16 %v5283, %v5283
        %v6564 = vpack.i.b16 %v5284, %v5284
        %v6565 = vpack.i.b16 %v5285, %v5285
        %v6566 = vpack.i.b16 %v5286, %v5286
        %v6567 = vpack.i.b16 %v5287, %v5287
        %v6568 = vpack.i.b16 %v5288, %v5288
        %v6569 = vpack.i.b16 %v5289, %v5289
        %v6570 = vpack.i.b16 %v5290, %v5290
        %v6571 = vpack.i.b16 %v5291, %v5291
        %v6572 = vpack.i.b16 %v5292, %v5292
        %v6573 = vpack.i.b16 %v5293, %v5293
        %v6574 = vpack.i.b16 %v5294, %v5294
        %v6575 = vpack.i.b16 %v5295, %v5295
        %v6576 = vpack.i.b16 %v5296, %v5296
        %v6577 = vpack.i.b16 %v5297, %v5297
        %v6578 = vpack.i.b16 %v5298, %v5298
        %v6579 = vpack.i.b16 %v5299, %v5299
        %v6580 = vpack.i.b16 %v5300, %v5300
        %v6581 = vpack.i.b16 %v5301, %v5301
        %v6582 = vpack.i.b16 %v5302, %v5302
        %v6583 = vpack.i.b16 %v5303, %v5303
        %v6584 = vpack.i.b16 %v5304, %v5304
        %v6585 = vpack.i.b16 %v5305, %v5305
        %v6586 = vpack.i.b16 %v5306, %v5306
        %v6587 = vpack.i.b16 %v5307, %v5307
        %v6588 = vpack.i.b16 %v5308, %v5308
        %v6589 = vpack.i.b16 %v5309, %v5309
        %v6590 = vpack.i.b16 %v5310, %v5310
        %v6591 = vlaneseq
        %v6592 = vshrl.u32 %v6591, 7
        %v6593 = vsub.s32 0, %v6592
        %v6594 = vrot.slane %v6559, %v6593
        %v6595 = vlaneseq
        %v6596 = vshrl.u32 %v6595, 7
        %v6597 = vsub.s32 0, %v6596
        %v6598 = vrot.slane %v6560, %v6597
        %v6599 = vlaneseq
        %v6600 = vshrl.u32 %v6599, 7
        %v6601 = vsub.s32 0, %v6600
        %v6602 = vrot.slane %v6561, %v6601
        %v6603 = vlaneseq
        %v6604 = vshrl.u32 %v6603, 7
        %v6605 = vsub.s32 0, %v6604
        %v6606 = vrot.slane %v6562, %v6605
        %v6607 = vlaneseq
        %v6608 = vshrl.u32 %v6607, 7
        %v6609 = vsub.s32 0, %v6608
        %v6610 = vrot.slane %v6563, %v6609
        %v6611 = vlaneseq
        %v6612 = vshrl.u32 %v6611, 7
        %v6613 = vsub.s32 0, %v6612
        %v6614 = vrot.slane %v6564, %v6613
        %v6615 = vlaneseq
        %v6616 = vshrl.u32 %v6615, 7
        %v6617 = vsub.s32 0, %v6616
        %v6618 = vrot.slane %v6565, %v6617
        %v6619 = vlaneseq
        %v6620 = vshrl.u32 %v6619, 7
        %v6621 = vsub.s32 0, %v6620
        %v6622 = vrot.slane %v6566, %v6621
        %v6623 = vlaneseq
        %v6624 = vshrl.u32 %v6623, 7
        %v6625 = vsub.s32 0, %v6624
        %v6626 = vrot.slane %v6567, %v6625
        %v6627 = vlaneseq
        %v6628 = vshrl.u32 %v6627, 7
        %v6629 = vsub.s32 0, %v6628
        %v6630 = vrot.slane %v6568, %v6629
        %v6631 = vlaneseq
        %v6632 = vshrl.u32 %v6631, 7
        %v6633 = vsub.s32 0, %v6632
        %v6634 = vrot.slane %v6569, %v6633
        %v6635 = vlaneseq
        %v6636 = vshrl.u32 %v6635, 7
        %v6637 = vsub.s32 0, %v6636
        %v6638 = vrot.slane %v6570, %v6637
        %v6639 = vlaneseq
        %v6640 = vshrl.u32 %v6639, 7
        %v6641 = vsub.s32 0, %v6640
        %v6642 = vrot.slane %v6571, %v6641
        %v6643 = vlaneseq
        %v6644 = vshrl.u32 %v6643, 7
        %v6645 = vsub.s32 0, %v6644
        %v6646 = vrot.slane %v6572, %v6645
        %v6647 = vlaneseq
        %v6648 = vshrl.u32 %v6647, 7
        %v6649 = vsub.s32 0, %v6648
        %v6650 = vrot.slane %v6573, %v6649
        %v6651 = vlaneseq
        %v6652 = vshrl.u32 %v6651, 7
        %v6653 = vsub.s32 0, %v6652
        %v6654 = vrot.slane %v6574, %v6653
        %v6655 = vlaneseq
        %v6656 = vshrl.u32 %v6655, 7
        %v6657 = vsub.s32 0, %v6656
        %v6658 = vrot.slane %v6575, %v6657
        %v6659 = vlaneseq
        %v6660 = vshrl.u32 %v6659, 7
        %v6661 = vsub.s32 0, %v6660
        %v6662 = vrot.slane %v6576, %v6661
        %v6663 = vlaneseq
        %v6664 = vshrl.u32 %v6663, 7
        %v6665 = vsub.s32 0, %v6664
        %v6666 = vrot.slane %v6577, %v6665
        %v6667 = vlaneseq
        %v6668 = vshrl.u32 %v6667, 7
        %v6669 = vsub.s32 0, %v6668
        %v6670 = vrot.slane %v6578, %v6669
        %v6671 = vlaneseq
        %v6672 = vshrl.u32 %v6671, 7
        %v6673 = vsub.s32 0, %v6672
        %v6674 = vrot.slane %v6579, %v6673
        %v6675 = vlaneseq
        %v6676 = vshrl.u32 %v6675, 7
        %v6677 = vsub.s32 0, %v6676
        %v6678 = vrot.slane %v6580, %v6677
        %v6679 = vlaneseq
        %v6680 = vshrl.u32 %v6679, 7
        %v6681 = vsub.s32 0, %v6680
        %v6682 = vrot.slane %v6581, %v6681
        %v6683 = vlaneseq
        %v6684 = vshrl.u32 %v6683, 7
        %v6685 = vsub.s32 0, %v6684
        %v6686 = vrot.slane %v6582, %v6685
        %v6687 = vlaneseq
        %v6688 = vshrl.u32 %v6687, 7
        %v6689 = vsub.s32 0, %v6688
        %v6690 = vrot.slane %v6583, %v6689
        %v6691 = vlaneseq
        %v6692 = vshrl.u32 %v6691, 7
        %v6693 = vsub.s32 0, %v6692
        %v6694 = vrot.slane %v6584, %v6693
        %v6695 = vlaneseq
        %v6696 = vshrl.u32 %v6695, 7
        %v6697 = vsub.s32 0, %v6696
        %v6698 = vrot.slane %v6585, %v6697
        %v6699 = vlaneseq
        %v6700 = vshrl.u32 %v6699, 7
        %v6701 = vsub.s32 0, %v6700
        %v6702 = vrot.slane %v6586, %v6701
        %v6703 = vlaneseq
        %v6704 = vshrl.u32 %v6703, 7
        %v6705 = vsub.s32 0, %v6704
        %v6706 = vrot.slane %v6587, %v6705
        %v6707 = vlaneseq
        %v6708 = vshrl.u32 %v6707, 7
        %v6709 = vsub.s32 0, %v6708
        %v6710 = vrot.slane %v6588, %v6709
        %v6711 = vlaneseq
        %v6712 = vshrl.u32 %v6711, 7
        %v6713 = vsub.s32 0, %v6712
        %v6714 = vrot.slane %v6589, %v6713
        %v6715 = vlaneseq
        %v6716 = vshrl.u32 %v6715, 7
        %v6717 = vsub.s32 0, %v6716
        %v6718 = vrot.slane %v6590, %v6717
        %v6751 = vsel %vm3697, %v5346, %v5538
        %v6752 = vsel %vm3697, %v5350, %v5542
        %v6753 = vsel %vm3697, %v5354, %v5546
        %v6754 = vsel %vm3697, %v5358, %v5550
        %v6755 = vsel %vm3697, %v5362, %v5554
        %v6756 = vsel %vm3697, %v5366, %v5558
        %v6757 = vsel %vm3697, %v5370, %v5562
        %v6758 = vsel %vm3697, %v5374, %v5566
        %v6759 = vsel %vm3697, %v5378, %v5570
        %v6760 = vsel %vm3697, %v5382, %v5574
        %v6761 = vsel %vm3697, %v5386, %v5578
        %v6762 = vsel %vm3697, %v5390, %v5582
        %v6763 = vsel %vm3697, %v5394, %v5586
        %v6764 = vsel %vm3697, %v5398, %v5590
        %v6765 = vsel %vm3697, %v5402, %v5594
        %v6766 = vsel %vm3697, %v5406, %v5598
        %v6767 = vsel %vm3697, %v5410, %v5602
        %v6768 = vsel %vm3697, %v5414, %v5606
        %v6769 = vsel %vm3697, %v5418, %v5610
        %v6770 = vsel %vm3697, %v5422, %v5614
        %v6771 = vsel %vm3697, %v5426, %v5618
        %v6772 = vsel %vm3697, %v5430, %v5622
        %v6773 = vsel %vm3697, %v5434, %v5626
        %v6774 = vsel %vm3697, %v5438, %v5630
        %v6775 = vsel %vm3697, %v5442, %v5634
        %v6776 = vsel %vm3697, %v5446, %v5638
        %v6777 = vsel %vm3697, %v5450, %v5642
        %v6778 = vsel %vm3697, %v5454, %v5646
        %v6779 = vsel %vm3697, %v5458, %v5650
        %v6780 = vsel %vm3697, %v5462, %v5654
        %v6781 = vsel %vm3697, %v5466, %v5658
        %v6782 = vsel %vm3697, %v5470, %v5662
        %v6785 = vsel %vm3730, %v6751, %v5730
        %v6789 = vsel %vm3730, %v6752, %v5734
        %v6793 = vsel %vm3730, %v6753, %v5738
        %v6797 = vsel %vm3730, %v6754, %v5742
        %v6801 = vsel %vm3730, %v6755, %v5746
        %v6805 = vsel %vm3730, %v6756, %v5750
        %v6809 = vsel %vm3730, %v6757, %v5754
        %v6813 = vsel %vm3730, %v6758, %v5758
        %v6817 = vsel %vm3730, %v6759, %v5762
        %v6821 = vsel %vm3730, %v6760, %v5766
        %v6825 = vsel %vm3730, %v6761, %v5770
        %v6829 = vsel %vm3730, %v6762, %v5774
        %v6833 = vsel %vm3730, %v6763, %v5778
        %v6837 = vsel %vm3730, %v6764, %v5782
        %v6841 = vsel %vm3730, %v6765, %v5786
        %v6845 = vsel %vm3730, %v6766, %v5790
        %v6849 = vsel %vm3730, %v6767, %v5794
        %v6853 = vsel %vm3730, %v6768, %v5798
        %v6857 = vsel %vm3730, %v6769, %v5802
        %v6861 = vsel %vm3730, %v6770, %v5806
        %v6865 = vsel %vm3730, %v6771, %v5810
        %v6869 = vsel %vm3730, %v6772, %v5814
        %v6873 = vsel %vm3730, %v6773, %v5818
        %v6877 = vsel %vm3730, %v6774, %v5822
        %v6881 = vsel %vm3730, %v6775, %v5826
        %v6885 = vsel %vm3730, %v6776, %v5830
        %v6889 = vsel %vm3730, %v6777, %v5834
        %v6893 = vsel %vm3730, %v6778, %v5838
        %v6897 = vsel %vm3730, %v6779, %v5842
        %v6901 = vsel %vm3730, %v6780, %v5846
        %v6905 = vsel %vm3730, %v6781, %v5850
        %v6909 = vsel %vm3730, %v6782, %v5854
        %v6911 = vsel %vm3861, %v6785, %v5890
        %v6912 = vsel %vm3861, %v6789, %v5894
        %v6913 = vsel %vm3861, %v6793, %v5898
        %v6914 = vsel %vm3861, %v6797, %v5902
        %v6915 = vsel %vm3861, %v6801, %v5906
        %v6916 = vsel %vm3861, %v6805, %v5910
        %v6917 = vsel %vm3861, %v6809, %v5914
        %v6918 = vsel %vm3861, %v6813, %v5918
        %v6919 = vsel %vm3861, %v6817, %v5922
        %v6920 = vsel %vm3861, %v6821, %v5926
        %v6921 = vsel %vm3861, %v6825, %v5930
        %v6922 = vsel %vm3861, %v6829, %v5934
        %v6923 = vsel %vm3861, %v6833, %v5938
        %v6924 = vsel %vm3861, %v6837, %v5942
        %v6925 = vsel %vm3861, %v6841, %v5946
        %v6926 = vsel %vm3861, %v6845, %v5950
        %v6927 = vsel %vm3861, %v6849, %v5954
        %v6928 = vsel %vm3861, %v6853, %v5958
        %v6929 = vsel %vm3861, %v6857, %v5962
        %v6930 = vsel %vm3861, %v6861, %v5966
        %v6931 = vsel %vm3861, %v6865, %v5970
        %v6932 = vsel %vm3861, %v6869, %v5974
        %v6933 = vsel %vm3861, %v6873, %v5978
        %v6934 = vsel %vm3861, %v6877, %v5982
        %v6935 = vsel %vm3861, %v6881, %v5986
        %v6936 = vsel %vm3861, %v6885, %v5990
        %v6937 = vsel %vm3861, %v6889, %v5994
        %v6938 = vsel %vm3861, %v6893, %v5998
        %v6939 = vsel %vm3861, %v6897, %v6002
        %v6940 = vsel %vm3861, %v6901, %v6006
        %v6941 = vsel %vm3861, %v6905, %v6010
        %v6942 = vsel %vm3861, %v6909, %v6014
        %v6945 = vsel %vm3894, %v6911, %v6082
        %v6949 = vsel %vm3894, %v6912, %v6086
        %v6953 = vsel %vm3894, %v6913, %v6090
        %v6957 = vsel %vm3894, %v6914, %v6094
        %v6961 = vsel %vm3894, %v6915, %v6098
        %v6965 = vsel %vm3894, %v6916, %v6102
        %v6969 = vsel %vm3894, %v6917, %v6106
        %v6973 = vsel %vm3894, %v6918, %v6110
        %v6977 = vsel %vm3894, %v6919, %v6114
        %v6981 = vsel %vm3894, %v6920, %v6118
        %v6985 = vsel %vm3894, %v6921, %v6122
        %v6989 = vsel %vm3894, %v6922, %v6126
        %v6993 = vsel %vm3894, %v6923, %v6130
        %v6997 = vsel %vm3894, %v6924, %v6134
        %v7001 = vsel %vm3894, %v6925, %v6138
        %v7005 = vsel %vm3894, %v6926, %v6142
        %v7009 = vsel %vm3894, %v6927, %v6146
        %v7013 = vsel %vm3894, %v6928, %v6150
        %v7017 = vsel %vm3894, %v6929, %v6154
        %v7021 = vsel %vm3894, %v6930, %v6158
        %v7025 = vsel %vm3894, %v6931, %v6162
        %v7029 = vsel %vm3894, %v6932, %v6166
        %v7033 = vsel %vm3894, %v6933, %v6170
        %v7037 = vsel %vm3894, %v6934, %v6174
        %v7041 = vsel %vm3894, %v6935, %v6178
        %v7045 = vsel %vm3894, %v6936, %v6182
        %v7049 = vsel %vm3894, %v6937, %v6186
        %v7053 = vsel %vm3894, %v6938, %v6190
        %v7057 = vsel %vm3894, %v6939, %v6194
        %v7061 = vsel %vm3894, %v6940, %v6198
        %v7065 = vsel %vm3894, %v6941, %v6202
        %v7069 = vsel %vm3894, %v6942, %v6206
        %v7071 = vsel %vm4025, %v6945, %v6242
        %v7072 = vsel %vm4025, %v6949, %v6246
        %v7073 = vsel %vm4025, %v6953, %v6250
        %v7074 = vsel %vm4025, %v6957, %v6254
        %v7075 = vsel %vm4025, %v6961, %v6258
        %v7076 = vsel %vm4025, %v6965, %v6262
        %v7077 = vsel %vm4025, %v6969, %v6266
        %v7078 = vsel %vm4025, %v6973, %v6270
        %v7079 = vsel %vm4025, %v6977, %v6274
        %v7080 = vsel %vm4025, %v6981, %v6278
        %v7081 = vsel %vm4025, %v6985, %v6282
        %v7082 = vsel %vm4025, %v6989, %v6286
        %v7083 = vsel %vm4025, %v6993, %v6290
        %v7084 = vsel %vm4025, %v6997, %v6294
        %v7085 = vsel %vm4025, %v7001, %v6298
        %v7086 = vsel %vm4025, %v7005, %v6302
        %v7087 = vsel %vm4025, %v7009, %v6306
        %v7088 = vsel %vm4025, %v7013, %v6310
        %v7089 = vsel %vm4025, %v7017, %v6314
        %v7090 = vsel %vm4025, %v7021, %v6318
        %v7091 = vsel %vm4025, %v7025, %v6322
        %v7092 = vsel %vm4025, %v7029, %v6326
        %v7093 = vsel %vm4025, %v7033, %v6330
        %v7094 = vsel %vm4025, %v7037, %v6334
        %v7095 = vsel %vm4025, %v7041, %v6338
        %v7096 = vsel %vm4025, %v7045, %v6342
        %v7097 = vsel %vm4025, %v7049, %v6346
        %v7098 = vsel %vm4025, %v7053, %v6350
        %v7099 = vsel %vm4025, %v7057, %v6354
        %v7100 = vsel %vm4025, %v7061, %v6358
        %v7101 = vsel %vm4025, %v7065, %v6362
        %v7102 = vsel %vm4025, %v7069, %v6366
        %v7105 = vsel %vm4058, %v7071, %v6434
        %v7109 = vsel %vm4058, %v7072, %v6438
        %v7113 = vsel %vm4058, %v7073, %v6442
        %v7117 = vsel %vm4058, %v7074, %v6446
        %v7121 = vsel %vm4058, %v7075, %v6450
        %v7125 = vsel %vm4058, %v7076, %v6454
        %v7129 = vsel %vm4058, %v7077, %v6458
        %v7133 = vsel %vm4058, %v7078, %v6462
        %v7137 = vsel %vm4058, %v7079, %v6466
        %v7141 = vsel %vm4058, %v7080, %v6470
        %v7145 = vsel %vm4058, %v7081, %v6474
        %v7149 = vsel %vm4058, %v7082, %v6478
        %v7153 = vsel %vm4058, %v7083, %v6482
        %v7157 = vsel %vm4058, %v7084, %v6486
        %v7161 = vsel %vm4058, %v7085, %v6490
        %v7165 = vsel %vm4058, %v7086, %v6494
        %v7169 = vsel %vm4058, %v7087, %v6498
        %v7173 = vsel %vm4058, %v7088, %v6502
        %v7177 = vsel %vm4058, %v7089, %v6506
        %v7181 = vsel %vm4058, %v7090, %v6510
        %v7185 = vsel %vm4058, %v7091, %v6514
        %v7189 = vsel %vm4058, %v7092, %v6518
        %v7193 = vsel %vm4058, %v7093, %v6522
        %v7197 = vsel %vm4058, %v7094, %v6526
        %v7201 = vsel %vm4058, %v7095, %v6530
        %v7205 = vsel %vm4058, %v7096, %v6534
        %v7209 = vsel %vm4058, %v7097, %v6538
        %v7213 = vsel %vm4058, %v7098, %v6542
        %v7217 = vsel %vm4058, %v7099, %v6546
        %v7221 = vsel %vm4058, %v7100, %v6550
        %v7225 = vsel %vm4058, %v7101, %v6554
        %v7229 = vsel %vm4058, %v7102, %v6558
        %v7231 = vsel %vm4189, %v7105, %v6594
        %v7232 = vsel %vm4189, %v7109, %v6598
        %v7233 = vsel %vm4189, %v7113, %v6602
        %v7234 = vsel %vm4189, %v7117, %v6606
        %v7235 = vsel %vm4189, %v7121, %v6610
        %v7236 = vsel %vm4189, %v7125, %v6614
        %v7237 = vsel %vm4189, %v7129, %v6618
        %v7238 = vsel %vm4189, %v7133, %v6622
        %v7239 = vsel %vm4189, %v7137, %v6626
        %v7240 = vsel %vm4189, %v7141, %v6630
        %v7241 = vsel %vm4189, %v7145, %v6634
        %v7242 = vsel %vm4189, %v7149, %v6638
        %v7243 = vsel %vm4189, %v7153, %v6642
        %v7244 = vsel %vm4189, %v7157, %v6646
        %v7245 = vsel %vm4189, %v7161, %v6650
        %v7246 = vsel %vm4189, %v7165, %v6654
        %v7247 = vsel %vm4189, %v7169, %v6658
        %v7248 = vsel %vm4189, %v7173, %v6662
        %v7249 = vsel %vm4189, %v7177, %v6666
        %v7250 = vsel %vm4189, %v7181, %v6670
        %v7251 = vsel %vm4189, %v7185, %v6674
        %v7252 = vsel %vm4189, %v7189, %v6678
        %v7253 = vsel %vm4189, %v7193, %v6682
        %v7254 = vsel %vm4189, %v7197, %v6686
        %v7255 = vsel %vm4189, %v7201, %v6690
        %v7256 = vsel %vm4189, %v7205, %v6694
        %v7257 = vsel %vm4189, %v7209, %v6698
        %v7258 = vsel %vm4189, %v7213, %v6702
        %v7259 = vsel %vm4189, %v7217, %v6706
        %v7260 = vsel %vm4189, %v7221, %v6710
        %v7261 = vsel %vm4189, %v7225, %v6714
        %v7262 = vsel %vm4189, %v7229, %v6718
        %7263 = vst.msk [vmem:[%s410] sm:$0xf] %vm4222, %v7231
        %7264 = vst.msk [vmem:[%s410 + $0x4] sm:$0xf] %vm4222, %v7232
        %7265 = vst.msk [vmem:[%s410 + $0x8] sm:$0xf] %vm4222, %v7233
        %7266 = vst.msk [vmem:[%s410 + $0xc] sm:$0xf] %vm4222, %v7234
        %7267 = vst.msk [vmem:[%s410 + $0x10] sm:$0xf] %vm4222, %v7235
        %7268 = vst.msk [vmem:[%s410 + $0x14] sm:$0xf] %vm4222, %v7236
        %7269 = vst.msk [vmem:[%s410 + $0x18] sm:$0xf] %vm4222, %v7237
        %7270 = vst.msk [vmem:[%s410 + $0x1c] sm:$0xf] %vm4222, %v7238
        %7271 = vst.msk [vmem:[%s410 + $0x20] sm:$0xf] %vm4222, %v7239
        %7272 = vst.msk [vmem:[%s410 + $0x24] sm:$0xf] %vm4222, %v7240
        %7273 = vst.msk [vmem:[%s410 + $0x28] sm:$0xf] %vm4222, %v7241
        %7274 = vst.msk [vmem:[%s410 + $0x2c] sm:$0xf] %vm4222, %v7242
        %7275 = vst.msk [vmem:[%s410 + $0x30] sm:$0xf] %vm4222, %v7243
        %7276 = vst.msk [vmem:[%s410 + $0x34] sm:$0xf] %vm4222, %v7244
        %7277 = vst.msk [vmem:[%s410 + $0x38] sm:$0xf] %vm4222, %v7245
        %7278 = vst.msk [vmem:[%s410 + $0x3c] sm:$0xf] %vm4222, %v7246
        %7279 = vst.msk [vmem:[%s410 + $0x40] sm:$0xf] %vm4222, %v7247
        %7280 = vst.msk [vmem:[%s410 + $0x44] sm:$0xf] %vm4222, %v7248
        %7281 = vst.msk [vmem:[%s410 + $0x48] sm:$0xf] %vm4222, %v7249
        %7282 = vst.msk [vmem:[%s410 + $0x4c] sm:$0xf] %vm4222, %v7250
        %7283 = vst.msk [vmem:[%s410 + $0x50] sm:$0xf] %vm4222, %v7251
        %7284 = vst.msk [vmem:[%s410 + $0x54] sm:$0xf] %vm4222, %v7252
        %7285 = vst.msk [vmem:[%s410 + $0x58] sm:$0xf] %vm4222, %v7253
        %7286 = vst.msk [vmem:[%s410 + $0x5c] sm:$0xf] %vm4222, %v7254
        %7287 = vst.msk [vmem:[%s410 + $0x60] sm:$0xf] %vm4222, %v7255
        %7288 = vst.msk [vmem:[%s410 + $0x64] sm:$0xf] %vm4222, %v7256
        %7289 = vst.msk [vmem:[%s410 + $0x68] sm:$0xf] %vm4222, %v7257
        %7290 = vst.msk [vmem:[%s410 + $0x6c] sm:$0xf] %vm4222, %v7258
        %7291 = vst.msk [vmem:[%s410 + $0x70] sm:$0xf] %vm4222, %v7259
        %7292 = vst.msk [vmem:[%s410 + $0x74] sm:$0xf] %vm4222, %v7260
        %7293 = vst.msk [vmem:[%s410 + $0x78] sm:$0xf] %vm4222, %v7261
        %7294 = vst.msk [vmem:[%s410 + $0x7c] sm:$0xf] %vm4222, %v7262
        %p7295 = scmp.lt.s32.totalorder %s27, 1
        %s7296 = scalar_select %p7295, %s27, 1
        %p7297 = scmp.lt.s32.totalorder %s28, 0
        %s7298 = scalar_select %p7297, %s28, 0
        %s7299 = smul.addr %s7296, 32
        %s7300 = sadd.s32 %s7298, %s7299
        %s7301 = smul.addr %s7300, 4
        %s7302 = scalar_lea.vmem %s6, %s7301
        %p7303 = scmp.lt.s32.totalorder %s27, 1
        %s7304 = scalar_select %p7303, %s27, 1
        %p7305 = scmp.lt.s32.totalorder %s28, 0
        %s7306 = scalar_select %p7305, %s28, 0
        %s7307 = smul.addr %s7304, 32
        %s7308 = sadd.s32 %s7306, %s7307
        %s7309 = smul.addr %s7308, 4
        %s7310 = scalar_lea.vmem %s7, %s7309
        %s7311 = sand.u32 %s241, 1
        %s7312 = scalar_lea.sflag [#allocation3], %s7311
        %s7313 = sand.u32 %s241, 1
        %s7314 = smul.addr %s7313, 32
        %s7315 = scalar_lea.vmem [#allocation2], %s7314
        // Predicated region
        $region45: #{tpu_custom_call.1} parent=43 // pred_check
          %p7316 = pneg %p195
        $region46: #{tpu_custom_call.1} parent=43 // pred_check_branch
          %7318 = sbr.rel (%p7316) target = $region48
        $region47: #{tpu_custom_call.1} parent=43 // pred_region
          _
        $region48: #{tpu_custom_call.1} parent=43 // pred_fallthru
          _
        // Predicated region
        $region49: #{tpu_custom_call.1} parent=43 // pred_check
          %p7319 = pneg %p223
        $region50: #{tpu_custom_call.1} parent=43 // pred_check_branch
          %7321 = sbr.rel (%p7319) target = $region52
        $region51: #{tpu_custom_call.1} parent=43 // pred_region
          _
        $region52: #{tpu_custom_call.1} parent=43 // pred_fallthru
          _
        // Predicated region
        $region53: #{tpu_custom_call.1} parent=43 // pred_check
          %p7322 = pneg %p251
        $region54: #{tpu_custom_call.1} parent=43 // pred_check_branch
          %7324 = sbr.rel (%p7322) target = $region56
        $region55: #{tpu_custom_call.1} parent=43 // pred_region
          %s7325 = smul.u32 8, %s28
          %s7327 = ssub.s32 512, 512
          %7328 = vsyncadd %s7312, %s7327
          %s7329 = smul.addr %s27, 8
          %s7330 = sadd.s32 %s7325, %s7329
          %s7331 = smul.addr %s7330, 64
          %s7332 = scalar_lea.hbm %s8, %s7331
          %s7333 = sshll.u32 %s7315, 4
          %s7334 = int_to_ptr.vmem [resolvable:$true] %s7333
          %7339 = dma.vmem_to_hbm [thread:$0]  %s7334, 512, %s7332, %s7312, 64, 64, 4
        $region56: #{tpu_custom_call.1} parent=43 // pred_fallthru
          _
      $region44: #{tpu_custom_call.1} parent=5 // pred_fallthru
        _
      %p7340 = scmp.le.s32.totalorder 2, %s18
      // Predicated region
      $region57: #{tpu_custom_call.1} parent=5 // pred_check
        %p7341 = pneg %p7340
      $region58: #{tpu_custom_call.1} parent=5 // pred_check_branch
        %7343 = sbr.rel (%p7341) target = $region60
      $region59: #{tpu_custom_call.1} parent=5 // pred_region
        %s7344 = ssub.s32 %s18, 2
        // Predicated region
        $region61: #{tpu_custom_call.1} parent=59 // pred_check
          %p7345 = pneg %p201
        $region62: #{tpu_custom_call.1} parent=59 // pred_check_branch
          %7347 = sbr.rel (%p7345) target = $region64
        $region63: #{tpu_custom_call.1} parent=59 // pred_region
          %p7348 = scmp.lt.s32.totalorder %s29, 1
          %s7349 = scalar_select %p7348, %s29, 1
          %p7350 = scmp.lt.s32.totalorder %s30, 0
          %s7351 = scalar_select %p7350, %s30, 0
          %s7352 = smul.addr %s7349, 32
          %s7353 = sadd.s32 %s7351, %s7352
          %s7354 = smul.addr %s7353, 4
          %s7355 = scalar_lea.vmem %s6, %s7354
        $region64: #{tpu_custom_call.1} parent=59 // pred_fallthru
          _
        // Predicated region
        $region65: #{tpu_custom_call.1} parent=59 // pred_check
          %p7356 = pneg %p229
        $region66: #{tpu_custom_call.1} parent=59 // pred_check_branch
          %7358 = sbr.rel (%p7356) target = $region68
        $region67: #{tpu_custom_call.1} parent=59 // pred_region
          %p7359 = scmp.lt.s32.totalorder %s29, 1
          %s7360 = scalar_select %p7359, %s29, 1
          %p7361 = scmp.lt.s32.totalorder %s30, 0
          %s7362 = scalar_select %p7361, %s30, 0
          %s7363 = smul.addr %s7360, 32
          %s7364 = sadd.s32 %s7362, %s7363
          %s7365 = smul.addr %s7364, 4
          %s7366 = scalar_lea.vmem %s7, %s7365
        $region68: #{tpu_custom_call.1} parent=59 // pred_fallthru
          _
        // Predicated region
        $region69: #{tpu_custom_call.1} parent=59 // pred_check
          %p7367 = pneg %p257
        $region70: #{tpu_custom_call.1} parent=59 // pred_check_branch
          %7369 = sbr.rel (%p7367) target = $region72
        $region71: #{tpu_custom_call.1} parent=59 // pred_region
          %s7370 = sand.u32 %s242, 1
          %s7371 = scalar_lea.sflag [#allocation3], %s7370
          %s7372 = sand.u32 %s242, 1
          %s7373 = smul.addr %s7372, 32
          %s7374 = scalar_lea.vmem [#allocation2], %s7373
          %7375 = dma.done %s7371, 512
        $region72: #{tpu_custom_call.1} parent=59 // pred_fallthru
          _
      $region60: #{tpu_custom_call.1} parent=5 // pred_fallthru
        _
    $region6: #{tpu_custom_call.1} parent=1 // loop_footer
      %s22 = sadd.s32 1, %s18
    $region7: #{tpu_custom_call.1} parent=1 // loop_footer_branch
      %17 = sbr.rel target = $region3
    $region8: #{tpu_custom_call.1} parent=1 // loop_exit
      _
    %7376 = vsyncpa [#allocation3], 1
    %s7377 = scalar_lea.sflag [#allocation3], 1
    %7378 = vsyncpa %s7377, 1

</llo_original>
